<compile_context>
chip_gen: v6e
topology: v6e:2x2x1
jax: 0.10.0
libtpu: 0.0.40
codegen_flags: <defaults>
</compile_context>

<pallas_src>
import functools

import jax
import jax.numpy as jnp
from jax.experimental import pallas as pl
from jax.experimental.pallas import tpu as pltpu


# ----------------------------------------------------------------------------
# Pallas kernel
# ----------------------------------------------------------------------------
def branch_fused_kernel(x_ref, w1_ref, b1_ref, w2_ref, b2_ref, wc_ref, o_ref,
                        *, seq_len):
    """[Conv1d(Cin,C1,3,p=1)+BN+ReLU] -> [Conv1d(C1,C2,3,p=1)+BN+ReLU] -> fused
    collapsed-classifier partial (per-row weighted channel sum).

    x_ref : (M, Cin)     bf16  M = (whole sequences in block) * seq_len, length-major
    w1_ref: (3, Cin, C1) bf16  tap-major conv1 weight, BN scale folded into columns
    b1_ref: (1, C1)      f32   folded BN shift
    w2_ref: (3, C1, C2)  bf16
    b2_ref: (1, C2)      f32
    wc_ref: (M, C2)      f32   collapsed classifier weight, tiled per sequence
    o_ref : (M, 1)       f32   per-row partial logit contribution
    """
    m = x_ref.shape[0]
    pos = jax.lax.broadcasted_iota(jnp.int32, (m, 1), 0) % seq_len
    not_first = pos != 0             # rows whose l-1 neighbour exists in the sequence
    not_last = pos != seq_len - 1    # rows whose l+1 neighbour exists in the sequence

    def conv3(inp, w_ref, b_ref):
        # Per-tap matmuls on the unshifted input; the +/-1 taps are realised by rolling
        # the f32 (unpacked) tap outputs by one row on the XLU and masking sequence
        # boundaries, which also kills the cyclic wrap-around at block edges.
        t_prev = jnp.dot(inp, w_ref[0], preferred_element_type=jnp.float32)
        t_ctr = jnp.dot(inp, w_ref[1], preferred_element_type=jnp.float32)
        t_next = jnp.dot(inp, w_ref[2], preferred_element_type=jnp.float32)
        acc = (t_ctr
               + jnp.where(not_first, pltpu.roll(t_prev, 1, 0), 0.0)
               + jnp.where(not_last, pltpu.roll(t_next, m - 1, 0), 0.0))
        return jnp.maximum(acc + b_ref[...], 0.0)

    h = conv3(x_ref[...], w1_ref, b1_ref)                  # (M, C1) f32
    y = conv3(h.astype(jnp.bfloat16), w2_ref, b2_ref)      # (M, C2) f32  (single cast)

    # fused collapsed classifier: per-row weighted sum over the C2 channels.
    o_ref[...] = jnp.sum(y * wc_ref[...], axis=1, keepdims=True)


# ----------------------------------------------------------------------------
# Wrappers
# ----------------------------------------------------------------------------
def _pick_seq_block(n_seq, seq_len, target_rows=1024):
    """Whole sequences per grid block.  Returns (s_blk, n_pad).

    Either one full-array block (always layout-legal) or an 8-aligned sequence count,
    so the second-to-last block dim of every operand is a multiple of 8.  At realistic
    sizes this produces >= 2 blocks, letting the 'parallel' grid axis use both of
    v7x's TensorCores."""
    if n_seq * seq_len <= target_rows:
        return n_seq, n_seq                    # single block covering everything
    n_pad = -(-n_seq // 8) * 8                 # pad sequence count to a multiple of 8
    cands = [d for d in range(8, n_pad + 1, 8) if n_pad % d == 0]
    fit = [d for d in cands if d * seq_len <= target_rows]
    s_blk = max(fit) if fit else min(cands)
    return s_blk, n_pad


def branch_partial(x_ncl, bp):
    """One Sequential branch fused with its collapsed-classifier segment.

    x_ncl: (N, Cin, L) f32 -> (N,) f32 per-sequence partial logit contribution."""
    n, cin, L = x_ncl.shape
    c1 = bp["w1"].shape[2]
    c2 = bp["w2"].shape[2]

    # length-major rows; bf16 halves the dominant HBM read.
    x_rows = jnp.transpose(x_ncl, (0, 2, 1)).reshape(n * L, cin).astype(jnp.bfloat16)

    s_blk, n_pad = _pick_seq_block(n, L)
    if n_pad != n:
        x_rows = jnp.pad(x_rows, ((0, (n_pad - n) * L), (0, 0)))
    m_blk = s_blk * L
    n_blocks = (n_pad * L) // m_blk

    # classifier weight for one block of whole sequences (identical for every block,
    # constant index map -> DMA'd once).
    wc_blk = jnp.tile(bp["wc"], (s_blk, 1))                        # (m_blk, C2) f32

    out = pl.pallas_call(
        functools.partial(branch_fused_kernel, seq_len=L),
        out_shape=jax.ShapeDtypeStruct((n_pad * L, 1), jnp.float32),
        grid=(n_blocks,),
        in_specs=[
            pl.BlockSpec((m_blk, cin), lambda i: (i, 0)),
            pl.BlockSpec((3, cin, c1), lambda i: (0, 0, 0)),
            pl.BlockSpec((1, c1), lambda i: (0, 0)),
            pl.BlockSpec((3, c1, c2), lambda i: (0, 0, 0)),
            pl.BlockSpec((1, c2), lambda i: (0, 0)),
            pl.BlockSpec((m_blk, c2), lambda i: (0, 0)),
        ],
        out_specs=pl.BlockSpec((m_blk, 1), lambda i: (i, 0)),
        compiler_params=pltpu.CompilerParams(
            dimension_semantics=("parallel",)),
    )(x_rows, bp["w1"], bp["b1"], bp["w2"], bp["b2"], wc_blk)

    # per-sequence reduction of the per-row partials (tiny) + drop padded sequences.
    return out.reshape(n_pad, L).sum(axis=1)[:n]


def cnn_forward(params, article, question, options):
    """article: (B,300,La), question: (B,300,Lq), options: (B,4,300,Lo) -> (B,4)."""
    B = article.shape[0]
    art = branch_partial(article, params["article"])               # (B,)
    qst = branch_partial(question, params["question"])             # (B,)
    opts = options.reshape(B * 4, options.shape[2], options.shape[3])
    opt = branch_partial(opts, params["options"])                  # (B*4,)
    return (art + qst)[:, None] + opt.reshape(B, 4) + params["cls_b"]


# ----------------------------------------------------------------------------
# Deterministic parameter construction (BN folded, classifier collapsed & split)
# ----------------------------------------------------------------------------
def _init_conv_branch(key, cin, c1, c2, eps=1e-5):
    ks = jax.random.split(key, 10)
    # torch Conv1d weights: (Cout, Cin, K); BatchNorm1d eval-mode running stats.
    w1_t = 0.05 * jax.random.normal(ks[0], (c1, cin, 3), jnp.float32)
    b1 = 0.01 * jax.random.normal(ks[1], (c1,), jnp.float32)
    w2_t = 0.05 * jax.random.normal(ks[2], (c2, c1, 3), jnp.float32)
    b2 = 0.01 * jax.random.normal(ks[3], (c2,), jnp.float32)
    g1 = 1.0 + 0.1 * jax.random.normal(ks[4], (c1,), jnp.float32)
    be1 = 0.1 * jax.random.normal(ks[5], (c1,), jnp.float32)
    rm1 = 0.1 * jax.random.normal(ks[6], (c1,), jnp.float32)
    rv1 = 1.0 + 0.1 * jnp.abs(jax.random.normal(ks[7], (c1,), jnp.float32))
    g2 = 1.0 + 0.1 * jax.random.normal(ks[8], (c2,), jnp.float32)
    be2 = 0.1 * jax.random.normal(ks[9], (c2,), jnp.float32)
    rm2 = jnp.zeros((c2,), jnp.float32)
    rv2 = jnp.ones((c2,), jnp.float32)

    s1 = g1 / jnp.sqrt(rv1 + eps)                                  # BN scale (eval)
    s2 = g2 / jnp.sqrt(rv2 + eps)
    w1_kio = jnp.transpose(w1_t, (2, 1, 0)) * s1[None, None, :]    # (K,Cin,C1), scale folded
    w2_kio = jnp.transpose(w2_t, (2, 1, 0)) * s2[None, None, :]    # (K,C1,C2)
    return {
        "w1": w1_kio.astype(jnp.bfloat16),
        "b1": ((b1 - rm1) * s1 + be1).reshape(1, c1),              # folded BN shift, f32
        "w2": w2_kio.astype(jnp.bfloat16),
        "b2": ((b2 - rm2) * s2 + be2).reshape(1, c2),
    }


def _collapse_classifier(key, seg_lens, c2, hidden):
    """Collapse Linear(F,H)->Linear(H,1) (exact: no activation between them) into one
    (F,) weight + scalar bias, split per branch segment, and permute each segment from
    PyTorch's channel-major flatten (c*L+l) to the kernel's length-major (l, c) order."""
    F = c2 * sum(seg_lens)
    k1, k2, k3, k4 = jax.random.split(key, 4)
    w1 = 0.02 * jax.random.normal(k1, (F, hidden), jnp.float32)    # = torch W1^T
    b1 = 0.01 * jax.random.normal(k2, (1, hidden), jnp.float32)
    w2 = 0.02 * jax.random.normal(k3, (hidden, 1), jnp.float32)    # = torch W2^T
    b2 = 0.01 * jax.random.normal(k4, (1, 1), jnp.float32)
    w_eff = (w1 @ w2)[:, 0]                                        # (F,)
    b_eff = (b1 @ w2 + b2).reshape(())                             # scalar

    segs, off = [], 0
    for L in seg_lens:
        segs.append(w_eff[off:off + c2 * L].reshape(c2, L).T)      # (L, C2) length-major
        off += c2 * L
    return segs, b_eff


def init_params(key, la, lq, lo, hidden):
    k_art, k_q, k_opt, k_cls = jax.random.split(key, 4)
    (wc_a, wc_q, wc_o), b_eff = _collapse_classifier(k_cls, (la, lq, lo), 32, hidden)
    p_art = _init_conv_branch(k_art, 300, 64, 32)
    p_art["wc"] = wc_a
    p_q = _init_conv_branch(k_q, 300, 64, 32)
    p_q["wc"] = wc_q
    p_opt = _init_conv_branch(k_opt, 300, 64, 32)
    p_opt["wc"] = wc_o
    return {"article": p_art, "question": p_q, "options": p_opt, "cls_b": b_eff}


# ----------------------------------------------------------------------------
if __name__ == "__main__":
    B, CIN = 2, 300
    L_ART, L_Q, L_OPT = 16, 8, 8
    HIDDEN = 256          # scaled-down stand-in for 5024; F = 32*(La+Lq+Lo)

    key = jax.random.PRNGKey(0)
    k_p, k_a, k_q, k_o = jax.random.split(key, 4)

    params = init_params(k_p, L_ART, L_Q, L_OPT, HIDDEN)
    article = jax.random.normal(k_a, (B, CIN, L_ART), jnp.float32)
    question = jax.random.normal(k_q, (B, CIN, L_Q), jnp.float32)
    options = jax.random.normal(k_o, (B, 4, CIN, L_OPT), jnp.float32)

    fwd = jax.jit(cnn_forward)
    out = jax.block_until_ready(fwd(params, article, question, options))
    assert out.shape == (B, 4) and out.dtype == jnp.float32
    print("KERNEL_OK")
</pallas_src>

<mosaic_0001>
module attributes {stable_mosaic.version = 11 : i64} {
  func.func @branch_fused_kernel(%arg0: i32, %arg1: memref<64x300xbf16, #tpu.memory_space<vmem>>, %arg2: memref<3x300x64xbf16, #tpu.memory_space<vmem>>, %arg3: memref<1x64xf32, #tpu.memory_space<vmem>>, %arg4: memref<3x64x32xbf16, #tpu.memory_space<vmem>>, %arg5: memref<1x32xf32, #tpu.memory_space<vmem>>, %arg6: memref<64x32xf32, #tpu.memory_space<vmem>>, %arg7: memref<64x1xf32, #tpu.memory_space<vmem>>) attributes {dimension_semantics = [#tpu.dimension_semantics<parallel>], iteration_bounds = array<i64: 1>, scalar_prefetch = 0 : i64, scratch_operands = 0 : i64, tpu.core_type = #tpu.core_type<tc>, window_params = [{transform_indices = @transform_0, window_bounds = array<i64: 64, 300>}, {pipeline_mode = #tpu.pipeline_mode<synchronous>, transform_indices = @transform_1, window_bounds = array<i64: 3, 300, 64>}, {pipeline_mode = #tpu.pipeline_mode<synchronous>, transform_indices = @transform_2, window_bounds = array<i64: 1, 64>}, {pipeline_mode = #tpu.pipeline_mode<synchronous>, transform_indices = @transform_3, window_bounds = array<i64: 3, 64, 32>}, {pipeline_mode = #tpu.pipeline_mode<synchronous>, transform_indices = @transform_4, window_bounds = array<i64: 1, 32>}, {pipeline_mode = #tpu.pipeline_mode<synchronous>, transform_indices = @transform_5, window_bounds = array<i64: 64, 32>}, {transform_indices = @transform_6, window_bounds = array<i64: 64, 1>}]} {
    %0 = tpu.iota {dimensions = array<i32: 0>} : vector<64x1xi32>
    %c8_i32 = arith.constant 8 : i32
    %c0_i32 = arith.constant 0 : i32
    %1 = arith.cmpi eq, %c8_i32, %c0_i32 : i32
    %c1_i32 = arith.constant 1 : i32
    %2 = arith.select %1, %c1_i32, %c8_i32 : i32
    %3 = vector.broadcast %2 : i32 to vector<64x1xi32>
    %4 = arith.remsi %0, %3 : vector<64x1xi32>
    %c0_i32_0 = arith.constant 0 : i32
    %5 = vector.broadcast %c0_i32_0 : i32 to vector<64x1xi32>
    %6 = arith.cmpi ne, %4, %5 : vector<64x1xi32>
    %c0_i32_1 = arith.constant 0 : i32
    %7 = vector.broadcast %c0_i32_1 : i32 to vector<64x1xi32>
    %8 = arith.cmpi slt, %4, %7 : vector<64x1xi32>
    %c0_i32_2 = arith.constant 0 : i32
    %9 = arith.cmpi slt, %2, %c0_i32_2 : i32
    %10 = vector.broadcast %9 : i1 to vector<64x1xi1>
    %11 = vector.broadcast %10 : vector<64x1xi1> to vector<64x1xi1>
    %12 = arith.xori %8, %11 : vector<64x1xi1>
    %13 = arith.andi %12, %6 : vector<64x1xi1>
    %14 = vector.broadcast %2 : i32 to vector<64x1xi32>
    %15 = arith.addi %4, %14 : vector<64x1xi32>
    %16 = arith.select %13, %15, %4 : vector<64x1xi1>, vector<64x1xi32>
    %c0_i32_3 = arith.constant 0 : i32
    %17 = vector.broadcast %c0_i32_3 : i32 to vector<64x1xi32>
    %18 = arith.cmpi ne, %16, %17 : vector<64x1xi32>
    %c7_i32 = arith.constant 7 : i32
    %19 = vector.broadcast %c7_i32 : i32 to vector<64x1xi32>
    %20 = arith.cmpi ne, %16, %19 : vector<64x1xi32>
    %c0 = arith.constant 0 : index
    %c0_4 = arith.constant 0 : index
    %21 = vector.load %arg1[%c0, %c0_4] : memref<64x300xbf16, #tpu.memory_space<vmem>>, vector<64x300xbf16>
    %c0_5 = arith.constant 0 : index
    %c0_6 = arith.constant 0 : index
    %c0_7 = arith.constant 0 : index
    %22 = vector.load %arg2[%c0_5, %c0_6, %c0_7] : memref<3x300x64xbf16, #tpu.memory_space<vmem>>, vector<1x300x64xbf16>
    %23 = vector.shape_cast %22 : vector<1x300x64xbf16> to vector<300x64xbf16>
    %cst = arith.constant dense<0.000000e+00> : vector<64x64xf32>
    %24 = tpu.matmul %21, %23, %cst {dimension_numbers = #tpu.dot_dimension_numbers<[1], [0], [0], [1], [0, 0, 1, 1], [], []>} : vector<64x300xbf16>, vector<300x64xbf16>, vector<64x64xf32> -> vector<64x64xf32>
    %c1 = arith.constant 1 : index
    %c0_8 = arith.constant 0 : index
    %c0_9 = arith.constant 0 : index
    %25 = vector.load %arg2[%c1, %c0_8, %c0_9] : memref<3x300x64xbf16, #tpu.memory_space<vmem>>, vector<1x300x64xbf16>
    %26 = vector.shape_cast %25 : vector<1x300x64xbf16> to vector<300x64xbf16>
    %cst_10 = arith.constant dense<0.000000e+00> : vector<64x64xf32>
    %27 = tpu.matmul %21, %26, %cst_10 {dimension_numbers = #tpu.dot_dimension_numbers<[1], [0], [0], [1], [0, 0, 1, 1], [], []>} : vector<64x300xbf16>, vector<300x64xbf16>, vector<64x64xf32> -> vector<64x64xf32>
    %c2 = arith.constant 2 : index
    %c0_11 = arith.constant 0 : index
    %c0_12 = arith.constant 0 : index
    %28 = vector.load %arg2[%c2, %c0_11, %c0_12] : memref<3x300x64xbf16, #tpu.memory_space<vmem>>, vector<1x300x64xbf16>
    %29 = vector.shape_cast %28 : vector<1x300x64xbf16> to vector<300x64xbf16>
    %cst_13 = arith.constant dense<0.000000e+00> : vector<64x64xf32>
    %30 = tpu.matmul %21, %29, %cst_13 {dimension_numbers = #tpu.dot_dimension_numbers<[1], [0], [0], [1], [0, 0, 1, 1], [], []>} : vector<64x300xbf16>, vector<300x64xbf16>, vector<64x64xf32> -> vector<64x64xf32>
    %c1_i32_14 = arith.constant 1 : i32
    %31 = tpu.dynamic_rotate %24 by %c1_i32_14 dim 0 : vector<64x64xf32>, i32 -> vector<64x64xf32>
    %cst_15 = arith.constant 0.000000e+00 : f32
    %32 = vector.shape_cast %18 : vector<64x1xi1> to vector<64x1xi1>
    %33 = vector.broadcast %32 : vector<64x1xi1> to vector<64x64xi1>
    %34 = vector.broadcast %cst_15 : f32 to vector<64x64xf32>
    %35 = arith.select %33, %31, %34 : vector<64x64xi1>, vector<64x64xf32>
    %36 = arith.addf %27, %35 : vector<64x64xf32>
    %c63_i32 = arith.constant 63 : i32
    %37 = tpu.dynamic_rotate %30 by %c63_i32 dim 0 : vector<64x64xf32>, i32 -> vector<64x64xf32>
    %cst_16 = arith.constant 0.000000e+00 : f32
    %38 = vector.shape_cast %20 : vector<64x1xi1> to vector<64x1xi1>
    %39 = vector.broadcast %38 : vector<64x1xi1> to vector<64x64xi1>
    %40 = vector.broadcast %cst_16 : f32 to vector<64x64xf32>
    %41 = arith.select %39, %37, %40 : vector<64x64xi1>, vector<64x64xf32>
    %42 = arith.addf %36, %41 : vector<64x64xf32>
    %c0_17 = arith.constant 0 : index
    %c0_18 = arith.constant 0 : index
    %43 = vector.load %arg3[%c0_17, %c0_18] : memref<1x64xf32, #tpu.memory_space<vmem>>, vector<1x64xf32>
    %44 = vector.broadcast %43 : vector<1x64xf32> to vector<64x64xf32>
    %45 = arith.addf %42, %44 : vector<64x64xf32>
    %cst_19 = arith.constant 0.000000e+00 : f32
    %46 = vector.broadcast %cst_19 : f32 to vector<64x64xf32>
    %47 = arith.maximumf %45, %46 : vector<64x64xf32>
    %48 = arith.truncf %47 : vector<64x64xf32> to vector<64x64xbf16>
    %c0_20 = arith.constant 0 : index
    %c0_21 = arith.constant 0 : index
    %c0_22 = arith.constant 0 : index
    %49 = vector.load %arg4[%c0_20, %c0_21, %c0_22] : memref<3x64x32xbf16, #tpu.memory_space<vmem>>, vector<1x64x32xbf16>
    %50 = vector.shape_cast %49 : vector<1x64x32xbf16> to vector<64x32xbf16>
    %cst_23 = arith.constant dense<0.000000e+00> : vector<64x32xf32>
    %51 = tpu.matmul %48, %50, %cst_23 {dimension_numbers = #tpu.dot_dimension_numbers<[1], [0], [0], [1], [0, 0, 1, 1], [], []>} : vector<64x64xbf16>, vector<64x32xbf16>, vector<64x32xf32> -> vector<64x32xf32>
    %c1_24 = arith.constant 1 : index
    %c0_25 = arith.constant 0 : index
    %c0_26 = arith.constant 0 : index
    %52 = vector.load %arg4[%c1_24, %c0_25, %c0_26] : memref<3x64x32xbf16, #tpu.memory_space<vmem>>, vector<1x64x32xbf16>
    %53 = vector.shape_cast %52 : vector<1x64x32xbf16> to vector<64x32xbf16>
    %cst_27 = arith.constant dense<0.000000e+00> : vector<64x32xf32>
    %54 = tpu.matmul %48, %53, %cst_27 {dimension_numbers = #tpu.dot_dimension_numbers<[1], [0], [0], [1], [0, 0, 1, 1], [], []>} : vector<64x64xbf16>, vector<64x32xbf16>, vector<64x32xf32> -> vector<64x32xf32>
    %c2_28 = arith.constant 2 : index
    %c0_29 = arith.constant 0 : index
    %c0_30 = arith.constant 0 : index
    %55 = vector.load %arg4[%c2_28, %c0_29, %c0_30] : memref<3x64x32xbf16, #tpu.memory_space<vmem>>, vector<1x64x32xbf16>
    %56 = vector.shape_cast %55 : vector<1x64x32xbf16> to vector<64x32xbf16>
    %cst_31 = arith.constant dense<0.000000e+00> : vector<64x32xf32>
    %57 = tpu.matmul %48, %56, %cst_31 {dimension_numbers = #tpu.dot_dimension_numbers<[1], [0], [0], [1], [0, 0, 1, 1], [], []>} : vector<64x64xbf16>, vector<64x32xbf16>, vector<64x32xf32> -> vector<64x32xf32>
    %c1_i32_32 = arith.constant 1 : i32
    %58 = tpu.dynamic_rotate %51 by %c1_i32_32 dim 0 : vector<64x32xf32>, i32 -> vector<64x32xf32>
    %cst_33 = arith.constant 0.000000e+00 : f32
    %59 = vector.shape_cast %18 : vector<64x1xi1> to vector<64x1xi1>
    %60 = vector.broadcast %59 : vector<64x1xi1> to vector<64x32xi1>
    %61 = vector.broadcast %cst_33 : f32 to vector<64x32xf32>
    %62 = arith.select %60, %58, %61 : vector<64x32xi1>, vector<64x32xf32>
    %63 = arith.addf %54, %62 : vector<64x32xf32>
    %c63_i32_34 = arith.constant 63 : i32
    %64 = tpu.dynamic_rotate %57 by %c63_i32_34 dim 0 : vector<64x32xf32>, i32 -> vector<64x32xf32>
    %cst_35 = arith.constant 0.000000e+00 : f32
    %65 = vector.shape_cast %20 : vector<64x1xi1> to vector<64x1xi1>
    %66 = vector.broadcast %65 : vector<64x1xi1> to vector<64x32xi1>
    %67 = vector.broadcast %cst_35 : f32 to vector<64x32xf32>
    %68 = arith.select %66, %64, %67 : vector<64x32xi1>, vector<64x32xf32>
    %69 = arith.addf %63, %68 : vector<64x32xf32>
    %c0_36 = arith.constant 0 : index
    %c0_37 = arith.constant 0 : index
    %70 = vector.load %arg5[%c0_36, %c0_37] : memref<1x32xf32, #tpu.memory_space<vmem>>, vector<1x32xf32>
    %71 = vector.broadcast %70 : vector<1x32xf32> to vector<64x32xf32>
    %72 = arith.addf %69, %71 : vector<64x32xf32>
    %cst_38 = arith.constant 0.000000e+00 : f32
    %73 = vector.broadcast %cst_38 : f32 to vector<64x32xf32>
    %74 = arith.maximumf %72, %73 : vector<64x32xf32>
    %c0_39 = arith.constant 0 : index
    %c0_40 = arith.constant 0 : index
    %75 = vector.load %arg6[%c0_39, %c0_40] : memref<64x32xf32, #tpu.memory_space<vmem>>, vector<64x32xf32>
    %76 = arith.mulf %74, %75 : vector<64x32xf32>
    %cst_41 = arith.constant dense<0.000000e+00> : vector<64xf32>
    %77 = vector.multi_reduction <add>, %76, %cst_41 [1] : vector<64x32xf32> to vector<64xf32>
    %78 = vector.shape_cast %77 : vector<64xf32> to vector<64x1xf32>
    %c0_42 = arith.constant 0 : index
    %c0_43 = arith.constant 0 : index
    %79 = vector.load %arg7[%c0_42, %c0_43] : memref<64x1xf32, #tpu.memory_space<vmem>>, vector<64x1xf32>
    tpu.vector_store %arg7[%c0_42, %c0_43], %78 {strides = array<i32>} : memref<64x1xf32, #tpu.memory_space<vmem>>, vector<64x1xf32>,
    return
  }
  func.func @transform_0(%arg0: i32) -> (i32, i32) {
    %c0_i32 = arith.constant 0 : i32
    %c0_i32_0 = arith.constant 0 : i32
    return %arg0, %c0_i32 : i32, i32
  }
  func.func @transform_1(%arg0: i32) -> (i32, i32, i32) {
    %c0_i32 = arith.constant 0 : i32
    %c0_i32_0 = arith.constant 0 : i32
    %c0_i32_1 = arith.constant 0 : i32
    %c0_i32_2 = arith.constant 0 : i32
    return %c0_i32, %c0_i32_0, %c0_i32_1 : i32, i32, i32
  }
  func.func @transform_2(%arg0: i32) -> (i32, i32) {
    %c0_i32 = arith.constant 0 : i32
    %c0_i32_0 = arith.constant 0 : i32
    %c0_i32_1 = arith.constant 0 : i32
    return %c0_i32, %c0_i32_0 : i32, i32
  }
  func.func @transform_3(%arg0: i32) -> (i32, i32, i32) {
    %c0_i32 = arith.constant 0 : i32
    %c0_i32_0 = arith.constant 0 : i32
    %c0_i32_1 = arith.constant 0 : i32
    %c0_i32_2 = arith.constant 0 : i32
    return %c0_i32, %c0_i32_0, %c0_i32_1 : i32, i32, i32
  }
  func.func @transform_4(%arg0: i32) -> (i32, i32) {
    %c0_i32 = arith.constant 0 : i32
    %c0_i32_0 = arith.constant 0 : i32
    %c0_i32_1 = arith.constant 0 : i32
    return %c0_i32, %c0_i32_0 : i32, i32
  }
  func.func @transform_5(%arg0: i32) -> (i32, i32) {
    %c0_i32 = arith.constant 0 : i32
    %c0_i32_0 = arith.constant 0 : i32
    %c0_i32_1 = arith.constant 0 : i32
    return %c0_i32, %c0_i32_0 : i32, i32
  }
  func.func @transform_6(%arg0: i32) -> (i32, i32) {
    %c0_i32 = arith.constant 0 : i32
    %c0_i32_0 = arith.constant 0 : i32
    return %arg0, %c0_i32 : i32, i32
  }
}

module attributes {stable_mosaic.version = 11 : i64} {
  func.func @branch_fused_kernel(%arg0: i32, %arg1: memref<32x300xbf16, #tpu.memory_space<vmem>>, %arg2: memref<3x300x64xbf16, #tpu.memory_space<vmem>>, %arg3: memref<1x64xf32, #tpu.memory_space<vmem>>, %arg4: memref<3x64x32xbf16, #tpu.memory_space<vmem>>, %arg5: memref<1x32xf32, #tpu.memory_space<vmem>>, %arg6: memref<32x32xf32, #tpu.memory_space<vmem>>, %arg7: memref<32x1xf32, #tpu.memory_space<vmem>>) attributes {dimension_semantics = [#tpu.dimension_semantics<parallel>], iteration_bounds = array<i64: 1>, scalar_prefetch = 0 : i64, scratch_operands = 0 : i64, tpu.core_type = #tpu.core_type<tc>, window_params = [{transform_indices = @transform_0, window_bounds = array<i64: 32, 300>}, {pipeline_mode = #tpu.pipeline_mode<synchronous>, transform_indices = @transform_1, window_bounds = array<i64: 3, 300, 64>}, {pipeline_mode = #tpu.pipeline_mode<synchronous>, transform_indices = @transform_2, window_bounds = array<i64: 1, 64>}, {pipeline_mode = #tpu.pipeline_mode<synchronous>, transform_indices = @transform_3, window_bounds = array<i64: 3, 64, 32>}, {pipeline_mode = #tpu.pipeline_mode<synchronous>, transform_indices = @transform_4, window_bounds = array<i64: 1, 32>}, {pipeline_mode = #tpu.pipeline_mode<synchronous>, transform_indices = @transform_5, window_bounds = array<i64: 32, 32>}, {transform_indices = @transform_6, window_bounds = array<i64: 32, 1>}]} {
    %0 = tpu.iota {dimensions = array<i32: 0>} : vector<32x1xi32>
    %c16_i32 = arith.constant 16 : i32
    %c0_i32 = arith.constant 0 : i32
    %1 = arith.cmpi eq, %c16_i32, %c0_i32 : i32
    %c1_i32 = arith.constant 1 : i32
    %2 = arith.select %1, %c1_i32, %c16_i32 : i32
    %3 = vector.broadcast %2 : i32 to vector<32x1xi32>
    %4 = arith.remsi %0, %3 : vector<32x1xi32>
    %c0_i32_0 = arith.constant 0 : i32
    %5 = vector.broadcast %c0_i32_0 : i32 to vector<32x1xi32>
    %6 = arith.cmpi ne, %4, %5 : vector<32x1xi32>
    %c0_i32_1 = arith.constant 0 : i32
    %7 = vector.broadcast %c0_i32_1 : i32 to vector<32x1xi32>
    %8 = arith.cmpi slt, %4, %7 : vector<32x1xi32>
    %c0_i32_2 = arith.constant 0 : i32
    %9 = arith.cmpi slt, %2, %c0_i32_2 : i32
    %10 = vector.broadcast %9 : i1 to vector<32x1xi1>
    %11 = vector.broadcast %10 : vector<32x1xi1> to vector<32x1xi1>
    %12 = arith.xori %8, %11 : vector<32x1xi1>
    %13 = arith.andi %12, %6 : vector<32x1xi1>
    %14 = vector.broadcast %2 : i32 to vector<32x1xi32>
    %15 = arith.addi %4, %14 : vector<32x1xi32>
    %16 = arith.select %13, %15, %4 : vector<32x1xi1>, vector<32x1xi32>
    %c0_i32_3 = arith.constant 0 : i32
    %17 = vector.broadcast %c0_i32_3 : i32 to vector<32x1xi32>
    %18 = arith.cmpi ne, %16, %17 : vector<32x1xi32>
    %c15_i32 = arith.constant 15 : i32
    %19 = vector.broadcast %c15_i32 : i32 to vector<32x1xi32>
    %20 = arith.cmpi ne, %16, %19 : vector<32x1xi32>
    %c0 = arith.constant 0 : index
    %c0_4 = arith.constant 0 : index
    %21 = vector.load %arg1[%c0, %c0_4] : memref<32x300xbf16, #tpu.memory_space<vmem>>, vector<32x300xbf16>
    %c0_5 = arith.constant 0 : index
    %c0_6 = arith.constant 0 : index
    %c0_7 = arith.constant 0 : index
    %22 = vector.load %arg2[%c0_5, %c0_6, %c0_7] : memref<3x300x64xbf16, #tpu.memory_space<vmem>>, vector<1x300x64xbf16>
    %23 = vector.shape_cast %22 : vector<1x300x64xbf16> to vector<300x64xbf16>
    %cst = arith.constant dense<0.000000e+00> : vector<32x64xf32>
    %24 = tpu.matmul %21, %23, %cst {dimension_numbers = #tpu.dot_dimension_numbers<[1], [0], [0], [1], [0, 0, 1, 1], [], []>} : vector<32x300xbf16>, vector<300x64xbf16>, vector<32x64xf32> -> vector<32x64xf32>
    %c1 = arith.constant 1 : index
    %c0_8 = arith.constant 0 : index
    %c0_9 = arith.constant 0 : index
    %25 = vector.load %arg2[%c1, %c0_8, %c0_9] : memref<3x300x64xbf16, #tpu.memory_space<vmem>>, vector<1x300x64xbf16>
    %26 = vector.shape_cast %25 : vector<1x300x64xbf16> to vector<300x64xbf16>
    %cst_10 = arith.constant dense<0.000000e+00> : vector<32x64xf32>
    %27 = tpu.matmul %21, %26, %cst_10 {dimension_numbers = #tpu.dot_dimension_numbers<[1], [0], [0], [1], [0, 0, 1, 1], [], []>} : vector<32x300xbf16>, vector<300x64xbf16>, vector<32x64xf32> -> vector<32x64xf32>
    %c2 = arith.constant 2 : index
    %c0_11 = arith.constant 0 : index
    %c0_12 = arith.constant 0 : index
    %28 = vector.load %arg2[%c2, %c0_11, %c0_12] : memref<3x300x64xbf16, #tpu.memory_space<vmem>>, vector<1x300x64xbf16>
    %29 = vector.shape_cast %28 : vector<1x300x64xbf16> to vector<300x64xbf16>
    %cst_13 = arith.constant dense<0.000000e+00> : vector<32x64xf32>
    %30 = tpu.matmul %21, %29, %cst_13 {dimension_numbers = #tpu.dot_dimension_numbers<[1], [0], [0], [1], [0, 0, 1, 1], [], []>} : vector<32x300xbf16>, vector<300x64xbf16>, vector<32x64xf32> -> vector<32x64xf32>
    %c1_i32_14 = arith.constant 1 : i32
    %31 = tpu.dynamic_rotate %24 by %c1_i32_14 dim 0 : vector<32x64xf32>, i32 -> vector<32x64xf32>
    %cst_15 = arith.constant 0.000000e+00 : f32
    %32 = vector.shape_cast %18 : vector<32x1xi1> to vector<32x1xi1>
    %33 = vector.broadcast %32 : vector<32x1xi1> to vector<32x64xi1>
    %34 = vector.broadcast %cst_15 : f32 to vector<32x64xf32>
    %35 = arith.select %33, %31, %34 : vector<32x64xi1>, vector<32x64xf32>
    %36 = arith.addf %27, %35 : vector<32x64xf32>
    %c31_i32 = arith.constant 31 : i32
    %37 = tpu.dynamic_rotate %30 by %c31_i32 dim 0 : vector<32x64xf32>, i32 -> vector<32x64xf32>
    %cst_16 = arith.constant 0.000000e+00 : f32
    %38 = vector.shape_cast %20 : vector<32x1xi1> to vector<32x1xi1>
    %39 = vector.broadcast %38 : vector<32x1xi1> to vector<32x64xi1>
    %40 = vector.broadcast %cst_16 : f32 to vector<32x64xf32>
    %41 = arith.select %39, %37, %40 : vector<32x64xi1>, vector<32x64xf32>
    %42 = arith.addf %36, %41 : vector<32x64xf32>
    %c0_17 = arith.constant 0 : index
    %c0_18 = arith.constant 0 : index
    %43 = vector.load %arg3[%c0_17, %c0_18] : memref<1x64xf32, #tpu.memory_space<vmem>>, vector<1x64xf32>
    %44 = vector.broadcast %43 : vector<1x64xf32> to vector<32x64xf32>
    %45 = arith.addf %42, %44 : vector<32x64xf32>
    %cst_19 = arith.constant 0.000000e+00 : f32
    %46 = vector.broadcast %cst_19 : f32 to vector<32x64xf32>
    %47 = arith.maximumf %45, %46 : vector<32x64xf32>
    %48 = arith.truncf %47 : vector<32x64xf32> to vector<32x64xbf16>
    %c0_20 = arith.constant 0 : index
    %c0_21 = arith.constant 0 : index
    %c0_22 = arith.constant 0 : index
    %49 = vector.load %arg4[%c0_20, %c0_21, %c0_22] : memref<3x64x32xbf16, #tpu.memory_space<vmem>>, vector<1x64x32xbf16>
    %50 = vector.shape_cast %49 : vector<1x64x32xbf16> to vector<64x32xbf16>
    %cst_23 = arith.constant dense<0.000000e+00> : vector<32x32xf32>
    %51 = tpu.matmul %48, %50, %cst_23 {dimension_numbers = #tpu.dot_dimension_numbers<[1], [0], [0], [1], [0, 0, 1, 1], [], []>} : vector<32x64xbf16>, vector<64x32xbf16>, vector<32x32xf32> -> vector<32x32xf32>
    %c1_24 = arith.constant 1 : index
    %c0_25 = arith.constant 0 : index
    %c0_26 = arith.constant 0 : index
    %52 = vector.load %arg4[%c1_24, %c0_25, %c0_26] : memref<3x64x32xbf16, #tpu.memory_space<vmem>>, vector<1x64x32xbf16>
    %53 = vector.shape_cast %52 : vector<1x64x32xbf16> to vector<64x32xbf16>
    %cst_27 = arith.constant dense<0.000000e+00> : vector<32x32xf32>
    %54 = tpu.matmul %48, %53, %cst_27 {dimension_numbers = #tpu.dot_dimension_numbers<[1], [0], [0], [1], [0, 0, 1, 1], [], []>} : vector<32x64xbf16>, vector<64x32xbf16>, vector<32x32xf32> -> vector<32x32xf32>
    %c2_28 = arith.constant 2 : index
    %c0_29 = arith.constant 0 : index
    %c0_30 = arith.constant 0 : index
    %55 = vector.load %arg4[%c2_28, %c0_29, %c0_30] : memref<3x64x32xbf16, #tpu.memory_space<vmem>>, vector<1x64x32xbf16>
    %56 = vector.shape_cast %55 : vector<1x64x32xbf16> to vector<64x32xbf16>
    %cst_31 = arith.constant dense<0.000000e+00> : vector<32x32xf32>
    %57 = tpu.matmul %48, %56, %cst_31 {dimension_numbers = #tpu.dot_dimension_numbers<[1], [0], [0], [1], [0, 0, 1, 1], [], []>} : vector<32x64xbf16>, vector<64x32xbf16>, vector<32x32xf32> -> vector<32x32xf32>
    %c1_i32_32 = arith.constant 1 : i32
    %58 = tpu.dynamic_rotate %51 by %c1_i32_32 dim 0 : vector<32x32xf32>, i32 -> vector<32x32xf32>
    %cst_33 = arith.constant 0.000000e+00 : f32
    %59 = vector.shape_cast %18 : vector<32x1xi1> to vector<32x1xi1>
    %60 = vector.broadcast %59 : vector<32x1xi1> to vector<32x32xi1>
    %61 = vector.broadcast %cst_33 : f32 to vector<32x32xf32>
    %62 = arith.select %60, %58, %61 : vector<32x32xi1>, vector<32x32xf32>
    %63 = arith.addf %54, %62 : vector<32x32xf32>
    %c31_i32_34 = arith.constant 31 : i32
    %64 = tpu.dynamic_rotate %57 by %c31_i32_34 dim 0 : vector<32x32xf32>, i32 -> vector<32x32xf32>
    %cst_35 = arith.constant 0.000000e+00 : f32
    %65 = vector.shape_cast %20 : vector<32x1xi1> to vector<32x1xi1>
    %66 = vector.broadcast %65 : vector<32x1xi1> to vector<32x32xi1>
    %67 = vector.broadcast %cst_35 : f32 to vector<32x32xf32>
    %68 = arith.select %66, %64, %67 : vector<32x32xi1>, vector<32x32xf32>
    %69 = arith.addf %63, %68 : vector<32x32xf32>
    %c0_36 = arith.constant 0 : index
    %c0_37 = arith.constant 0 : index
    %70 = vector.load %arg5[%c0_36, %c0_37] : memref<1x32xf32, #tpu.memory_space<vmem>>, vector<1x32xf32>
    %71 = vector.broadcast %70 : vector<1x32xf32> to vector<32x32xf32>
    %72 = arith.addf %69, %71 : vector<32x32xf32>
    %cst_38 = arith.constant 0.000000e+00 : f32
    %73 = vector.broadcast %cst_38 : f32 to vector<32x32xf32>
    %74 = arith.maximumf %72, %73 : vector<32x32xf32>
    %c0_39 = arith.constant 0 : index
    %c0_40 = arith.constant 0 : index
    %75 = vector.load %arg6[%c0_39, %c0_40] : memref<32x32xf32, #tpu.memory_space<vmem>>, vector<32x32xf32>
    %76 = arith.mulf %74, %75 : vector<32x32xf32>
    %cst_41 = arith.constant dense<0.000000e+00> : vector<32xf32>
    %77 = vector.multi_reduction <add>, %76, %cst_41 [1] : vector<32x32xf32> to vector<32xf32>
    %78 = vector.shape_cast %77 : vector<32xf32> to vector<32x1xf32>
    %c0_42 = arith.constant 0 : index
    %c0_43 = arith.constant 0 : index
    %79 = vector.load %arg7[%c0_42, %c0_43] : memref<32x1xf32, #tpu.memory_space<vmem>>, vector<32x1xf32>
    tpu.vector_store %arg7[%c0_42, %c0_43], %78 {strides = array<i32>} : memref<32x1xf32, #tpu.memory_space<vmem>>, vector<32x1xf32>,
    return
  }
  func.func @transform_0(%arg0: i32) -> (i32, i32) {
    %c0_i32 = arith.constant 0 : i32
    %c0_i32_0 = arith.constant 0 : i32
    return %arg0, %c0_i32 : i32, i32
  }
  func.func @transform_1(%arg0: i32) -> (i32, i32, i32) {
    %c0_i32 = arith.constant 0 : i32
    %c0_i32_0 = arith.constant 0 : i32
    %c0_i32_1 = arith.constant 0 : i32
    %c0_i32_2 = arith.constant 0 : i32
    return %c0_i32, %c0_i32_0, %c0_i32_1 : i32, i32, i32
  }
  func.func @transform_2(%arg0: i32) -> (i32, i32) {
    %c0_i32 = arith.constant 0 : i32
    %c0_i32_0 = arith.constant 0 : i32
    %c0_i32_1 = arith.constant 0 : i32
    return %c0_i32, %c0_i32_0 : i32, i32
  }
  func.func @transform_3(%arg0: i32) -> (i32, i32, i32) {
    %c0_i32 = arith.constant 0 : i32
    %c0_i32_0 = arith.constant 0 : i32
    %c0_i32_1 = arith.constant 0 : i32
    %c0_i32_2 = arith.constant 0 : i32
    return %c0_i32, %c0_i32_0, %c0_i32_1 : i32, i32, i32
  }
  func.func @transform_4(%arg0: i32) -> (i32, i32) {
    %c0_i32 = arith.constant 0 : i32
    %c0_i32_0 = arith.constant 0 : i32
    %c0_i32_1 = arith.constant 0 : i32
    return %c0_i32, %c0_i32_0 : i32, i32
  }
  func.func @transform_5(%arg0: i32) -> (i32, i32) {
    %c0_i32 = arith.constant 0 : i32
    %c0_i32_0 = arith.constant 0 : i32
    %c0_i32_1 = arith.constant 0 : i32
    return %c0_i32, %c0_i32_0 : i32, i32
  }
  func.func @transform_6(%arg0: i32) -> (i32, i32) {
    %c0_i32 = arith.constant 0 : i32
    %c0_i32_0 = arith.constant 0 : i32
    return %arg0, %c0_i32 : i32, i32
  }
}

module attributes {stable_mosaic.version = 11 : i64} {
  func.func @branch_fused_kernel(%arg0: i32, %arg1: memref<16x300xbf16, #tpu.memory_space<vmem>>, %arg2: memref<3x300x64xbf16, #tpu.memory_space<vmem>>, %arg3: memref<1x64xf32, #tpu.memory_space<vmem>>, %arg4: memref<3x64x32xbf16, #tpu.memory_space<vmem>>, %arg5: memref<1x32xf32, #tpu.memory_space<vmem>>, %arg6: memref<16x32xf32, #tpu.memory_space<vmem>>, %arg7: memref<16x1xf32, #tpu.memory_space<vmem>>) attributes {dimension_semantics = [#tpu.dimension_semantics<parallel>], iteration_bounds = array<i64: 1>, scalar_prefetch = 0 : i64, scratch_operands = 0 : i64, tpu.core_type = #tpu.core_type<tc>, window_params = [{transform_indices = @transform_0, window_bounds = array<i64: 16, 300>}, {pipeline_mode = #tpu.pipeline_mode<synchronous>, transform_indices = @transform_1, window_bounds = array<i64: 3, 300, 64>}, {pipeline_mode = #tpu.pipeline_mode<synchronous>, transform_indices = @transform_2, window_bounds = array<i64: 1, 64>}, {pipeline_mode = #tpu.pipeline_mode<synchronous>, transform_indices = @transform_3, window_bounds = array<i64: 3, 64, 32>}, {pipeline_mode = #tpu.pipeline_mode<synchronous>, transform_indices = @transform_4, window_bounds = array<i64: 1, 32>}, {pipeline_mode = #tpu.pipeline_mode<synchronous>, transform_indices = @transform_5, window_bounds = array<i64: 16, 32>}, {transform_indices = @transform_6, window_bounds = array<i64: 16, 1>}]} {
    %0 = tpu.iota {dimensions = array<i32: 0>} : vector<16x1xi32>
    %c8_i32 = arith.constant 8 : i32
    %c0_i32 = arith.constant 0 : i32
    %1 = arith.cmpi eq, %c8_i32, %c0_i32 : i32
    %c1_i32 = arith.constant 1 : i32
    %2 = arith.select %1, %c1_i32, %c8_i32 : i32
    %3 = vector.broadcast %2 : i32 to vector<16x1xi32>
    %4 = arith.remsi %0, %3 : vector<16x1xi32>
    %c0_i32_0 = arith.constant 0 : i32
    %5 = vector.broadcast %c0_i32_0 : i32 to vector<16x1xi32>
    %6 = arith.cmpi ne, %4, %5 : vector<16x1xi32>
    %c0_i32_1 = arith.constant 0 : i32
    %7 = vector.broadcast %c0_i32_1 : i32 to vector<16x1xi32>
    %8 = arith.cmpi slt, %4, %7 : vector<16x1xi32>
    %c0_i32_2 = arith.constant 0 : i32
    %9 = arith.cmpi slt, %2, %c0_i32_2 : i32
    %10 = vector.broadcast %9 : i1 to vector<16x1xi1>
    %11 = vector.broadcast %10 : vector<16x1xi1> to vector<16x1xi1>
    %12 = arith.xori %8, %11 : vector<16x1xi1>
    %13 = arith.andi %12, %6 : vector<16x1xi1>
    %14 = vector.broadcast %2 : i32 to vector<16x1xi32>
    %15 = arith.addi %4, %14 : vector<16x1xi32>
    %16 = arith.select %13, %15, %4 : vector<16x1xi1>, vector<16x1xi32>
    %c0_i32_3 = arith.constant 0 : i32
    %17 = vector.broadcast %c0_i32_3 : i32 to vector<16x1xi32>
    %18 = arith.cmpi ne, %16, %17 : vector<16x1xi32>
    %c7_i32 = arith.constant 7 : i32
    %19 = vector.broadcast %c7_i32 : i32 to vector<16x1xi32>
    %20 = arith.cmpi ne, %16, %19 : vector<16x1xi32>
    %c0 = arith.constant 0 : index
    %c0_4 = arith.constant 0 : index
    %21 = vector.load %arg1[%c0, %c0_4] : memref<16x300xbf16, #tpu.memory_space<vmem>>, vector<16x300xbf16>
    %c0_5 = arith.constant 0 : index
    %c0_6 = arith.constant 0 : index
    %c0_7 = arith.constant 0 : index
    %22 = vector.load %arg2[%c0_5, %c0_6, %c0_7] : memref<3x300x64xbf16, #tpu.memory_space<vmem>>, vector<1x300x64xbf16>
    %23 = vector.shape_cast %22 : vector<1x300x64xbf16> to vector<300x64xbf16>
    %cst = arith.constant dense<0.000000e+00> : vector<16x64xf32>
    %24 = tpu.matmul %21, %23, %cst {dimension_numbers = #tpu.dot_dimension_numbers<[1], [0], [0], [1], [0, 0, 1, 1], [], []>} : vector<16x300xbf16>, vector<300x64xbf16>, vector<16x64xf32> -> vector<16x64xf32>
    %c1 = arith.constant 1 : index
    %c0_8 = arith.constant 0 : index
    %c0_9 = arith.constant 0 : index
    %25 = vector.load %arg2[%c1, %c0_8, %c0_9] : memref<3x300x64xbf16, #tpu.memory_space<vmem>>, vector<1x300x64xbf16>
    %26 = vector.shape_cast %25 : vector<1x300x64xbf16> to vector<300x64xbf16>
    %cst_10 = arith.constant dense<0.000000e+00> : vector<16x64xf32>
    %27 = tpu.matmul %21, %26, %cst_10 {dimension_numbers = #tpu.dot_dimension_numbers<[1], [0], [0], [1], [0, 0, 1, 1], [], []>} : vector<16x300xbf16>, vector<300x64xbf16>, vector<16x64xf32> -> vector<16x64xf32>
    %c2 = arith.constant 2 : index
    %c0_11 = arith.constant 0 : index
    %c0_12 = arith.constant 0 : index
    %28 = vector.load %arg2[%c2, %c0_11, %c0_12] : memref<3x300x64xbf16, #tpu.memory_space<vmem>>, vector<1x300x64xbf16>
    %29 = vector.shape_cast %28 : vector<1x300x64xbf16> to vector<300x64xbf16>
    %cst_13 = arith.constant dense<0.000000e+00> : vector<16x64xf32>
    %30 = tpu.matmul %21, %29, %cst_13 {dimension_numbers = #tpu.dot_dimension_numbers<[1], [0], [0], [1], [0, 0, 1, 1], [], []>} : vector<16x300xbf16>, vector<300x64xbf16>, vector<16x64xf32> -> vector<16x64xf32>
    %c1_i32_14 = arith.constant 1 : i32
    %31 = tpu.dynamic_rotate %24 by %c1_i32_14 dim 0 : vector<16x64xf32>, i32 -> vector<16x64xf32>
    %cst_15 = arith.constant 0.000000e+00 : f32
    %32 = vector.shape_cast %18 : vector<16x1xi1> to vector<16x1xi1>
    %33 = vector.broadcast %32 : vector<16x1xi1> to vector<16x64xi1>
    %34 = vector.broadcast %cst_15 : f32 to vector<16x64xf32>
    %35 = arith.select %33, %31, %34 : vector<16x64xi1>, vector<16x64xf32>
    %36 = arith.addf %27, %35 : vector<16x64xf32>
    %c15_i32 = arith.constant 15 : i32
    %37 = tpu.dynamic_rotate %30 by %c15_i32 dim 0 : vector<16x64xf32>, i32 -> vector<16x64xf32>
    %cst_16 = arith.constant 0.000000e+00 : f32
    %38 = vector.shape_cast %20 : vector<16x1xi1> to vector<16x1xi1>
    %39 = vector.broadcast %38 : vector<16x1xi1> to vector<16x64xi1>
    %40 = vector.broadcast %cst_16 : f32 to vector<16x64xf32>
    %41 = arith.select %39, %37, %40 : vector<16x64xi1>, vector<16x64xf32>
    %42 = arith.addf %36, %41 : vector<16x64xf32>
    %c0_17 = arith.constant 0 : index
    %c0_18 = arith.constant 0 : index
    %43 = vector.load %arg3[%c0_17, %c0_18] : memref<1x64xf32, #tpu.memory_space<vmem>>, vector<1x64xf32>
    %44 = vector.broadcast %43 : vector<1x64xf32> to vector<16x64xf32>
    %45 = arith.addf %42, %44 : vector<16x64xf32>
    %cst_19 = arith.constant 0.000000e+00 : f32
    %46 = vector.broadcast %cst_19 : f32 to vector<16x64xf32>
    %47 = arith.maximumf %45, %46 : vector<16x64xf32>
    %48 = arith.truncf %47 : vector<16x64xf32> to vector<16x64xbf16>
    %c0_20 = arith.constant 0 : index
    %c0_21 = arith.constant 0 : index
    %c0_22 = arith.constant 0 : index
    %49 = vector.load %arg4[%c0_20, %c0_21, %c0_22] : memref<3x64x32xbf16, #tpu.memory_space<vmem>>, vector<1x64x32xbf16>
    %50 = vector.shape_cast %49 : vector<1x64x32xbf16> to vector<64x32xbf16>
    %cst_23 = arith.constant dense<0.000000e+00> : vector<16x32xf32>
    %51 = tpu.matmul %48, %50, %cst_23 {dimension_numbers = #tpu.dot_dimension_numbers<[1], [0], [0], [1], [0, 0, 1, 1], [], []>} : vector<16x64xbf16>, vector<64x32xbf16>, vector<16x32xf32> -> vector<16x32xf32>
    %c1_24 = arith.constant 1 : index
    %c0_25 = arith.constant 0 : index
    %c0_26 = arith.constant 0 : index
    %52 = vector.load %arg4[%c1_24, %c0_25, %c0_26] : memref<3x64x32xbf16, #tpu.memory_space<vmem>>, vector<1x64x32xbf16>
    %53 = vector.shape_cast %52 : vector<1x64x32xbf16> to vector<64x32xbf16>
    %cst_27 = arith.constant dense<0.000000e+00> : vector<16x32xf32>
    %54 = tpu.matmul %48, %53, %cst_27 {dimension_numbers = #tpu.dot_dimension_numbers<[1], [0], [0], [1], [0, 0, 1, 1], [], []>} : vector<16x64xbf16>, vector<64x32xbf16>, vector<16x32xf32> -> vector<16x32xf32>
    %c2_28 = arith.constant 2 : index
    %c0_29 = arith.constant 0 : index
    %c0_30 = arith.constant 0 : index
    %55 = vector.load %arg4[%c2_28, %c0_29, %c0_30] : memref<3x64x32xbf16, #tpu.memory_space<vmem>>, vector<1x64x32xbf16>
    %56 = vector.shape_cast %55 : vector<1x64x32xbf16> to vector<64x32xbf16>
    %cst_31 = arith.constant dense<0.000000e+00> : vector<16x32xf32>
    %57 = tpu.matmul %48, %56, %cst_31 {dimension_numbers = #tpu.dot_dimension_numbers<[1], [0], [0], [1], [0, 0, 1, 1], [], []>} : vector<16x64xbf16>, vector<64x32xbf16>, vector<16x32xf32> -> vector<16x32xf32>
    %c1_i32_32 = arith.constant 1 : i32
    %58 = tpu.dynamic_rotate %51 by %c1_i32_32 dim 0 : vector<16x32xf32>, i32 -> vector<16x32xf32>
    %cst_33 = arith.constant 0.000000e+00 : f32
    %59 = vector.shape_cast %18 : vector<16x1xi1> to vector<16x1xi1>
    %60 = vector.broadcast %59 : vector<16x1xi1> to vector<16x32xi1>
    %61 = vector.broadcast %cst_33 : f32 to vector<16x32xf32>
    %62 = arith.select %60, %58, %61 : vector<16x32xi1>, vector<16x32xf32>
    %63 = arith.addf %54, %62 : vector<16x32xf32>
    %c15_i32_34 = arith.constant 15 : i32
    %64 = tpu.dynamic_rotate %57 by %c15_i32_34 dim 0 : vector<16x32xf32>, i32 -> vector<16x32xf32>
    %cst_35 = arith.constant 0.000000e+00 : f32
    %65 = vector.shape_cast %20 : vector<16x1xi1> to vector<16x1xi1>
    %66 = vector.broadcast %65 : vector<16x1xi1> to vector<16x32xi1>
    %67 = vector.broadcast %cst_35 : f32 to vector<16x32xf32>
    %68 = arith.select %66, %64, %67 : vector<16x32xi1>, vector<16x32xf32>
    %69 = arith.addf %63, %68 : vector<16x32xf32>
    %c0_36 = arith.constant 0 : index
    %c0_37 = arith.constant 0 : index
    %70 = vector.load %arg5[%c0_36, %c0_37] : memref<1x32xf32, #tpu.memory_space<vmem>>, vector<1x32xf32>
    %71 = vector.broadcast %70 : vector<1x32xf32> to vector<16x32xf32>
    %72 = arith.addf %69, %71 : vector<16x32xf32>
    %cst_38 = arith.constant 0.000000e+00 : f32
    %73 = vector.broadcast %cst_38 : f32 to vector<16x32xf32>
    %74 = arith.maximumf %72, %73 : vector<16x32xf32>
    %c0_39 = arith.constant 0 : index
    %c0_40 = arith.constant 0 : index
    %75 = vector.load %arg6[%c0_39, %c0_40] : memref<16x32xf32, #tpu.memory_space<vmem>>, vector<16x32xf32>
    %76 = arith.mulf %74, %75 : vector<16x32xf32>
    %cst_41 = arith.constant dense<0.000000e+00> : vector<16xf32>
    %77 = vector.multi_reduction <add>, %76, %cst_41 [1] : vector<16x32xf32> to vector<16xf32>
    %78 = vector.shape_cast %77 : vector<16xf32> to vector<16x1xf32>
    %c0_42 = arith.constant 0 : index
    %c0_43 = arith.constant 0 : index
    %79 = vector.load %arg7[%c0_42, %c0_43] : memref<16x1xf32, #tpu.memory_space<vmem>>, vector<16x1xf32>
    tpu.vector_store %arg7[%c0_42, %c0_43], %78 {strides = array<i32>} : memref<16x1xf32, #tpu.memory_space<vmem>>, vector<16x1xf32>,
    return
  }
  func.func @transform_0(%arg0: i32) -> (i32, i32) {
    %c0_i32 = arith.constant 0 : i32
    %c0_i32_0 = arith.constant 0 : i32
    return %arg0, %c0_i32 : i32, i32
  }
  func.func @transform_1(%arg0: i32) -> (i32, i32, i32) {
    %c0_i32 = arith.constant 0 : i32
    %c0_i32_0 = arith.constant 0 : i32
    %c0_i32_1 = arith.constant 0 : i32
    %c0_i32_2 = arith.constant 0 : i32
    return %c0_i32, %c0_i32_0, %c0_i32_1 : i32, i32, i32
  }
  func.func @transform_2(%arg0: i32) -> (i32, i32) {
    %c0_i32 = arith.constant 0 : i32
    %c0_i32_0 = arith.constant 0 : i32
    %c0_i32_1 = arith.constant 0 : i32
    return %c0_i32, %c0_i32_0 : i32, i32
  }
  func.func @transform_3(%arg0: i32) -> (i32, i32, i32) {
    %c0_i32 = arith.constant 0 : i32
    %c0_i32_0 = arith.constant 0 : i32
    %c0_i32_1 = arith.constant 0 : i32
    %c0_i32_2 = arith.constant 0 : i32
    return %c0_i32, %c0_i32_0, %c0_i32_1 : i32, i32, i32
  }
  func.func @transform_4(%arg0: i32) -> (i32, i32) {
    %c0_i32 = arith.constant 0 : i32
    %c0_i32_0 = arith.constant 0 : i32
    %c0_i32_1 = arith.constant 0 : i32
    return %c0_i32, %c0_i32_0 : i32, i32
  }
  func.func @transform_5(%arg0: i32) -> (i32, i32) {
    %c0_i32 = arith.constant 0 : i32
    %c0_i32_0 = arith.constant 0 : i32
    %c0_i32_1 = arith.constant 0 : i32
    return %c0_i32, %c0_i32_0 : i32, i32
  }
  func.func @transform_6(%arg0: i32) -> (i32, i32) {
    %c0_i32 = arith.constant 0 : i32
    %c0_i32_0 = arith.constant 0 : i32
    return %arg0, %c0_i32 : i32, i32
  }
}

</mosaic_0001>

<llo_original>
// kernel: cnn_forward.3
$region0: #{cnn_forward.3}
  #allocation0 [shape = 'u32[]', space=smem, size = 0x4, offset = 0x4, fixed_abs, tag = 'smem constant byte address 0x4 - core index']
  #allocation1 [shape = 'u32[144,128]{1,0:T(1,128)}', space=vmem, size = 0x12000, scoped, tag = 'internal scratch']
  %s0 = inlined_call_operand.vmem [shape: bf16[32,300], index: 0, kind: input, shape index: {}]
  %s1 = inlined_call_operand.vmem [shape: bf16[3,300,64], index: 1, kind: input, shape index: {}]
  %s2 = inlined_call_operand.vmem [shape: f32[1,64], index: 2, kind: input, shape index: {}]
  %s3 = inlined_call_operand.vmem [shape: bf16[3,64,32], index: 3, kind: input, shape index: {}]
  %s4 = inlined_call_operand.vmem [shape: f32[1,32], index: 4, kind: input, shape index: {}]
  %s5 = inlined_call_operand.vmem [shape: f32[32,32], index: 5, kind: input, shape index: {}]
  %s6 = inlined_call_operand.vmem [shape: f32[32,1], index: 6, kind: output, shape index: {}]
  %s7 = sld [smem:[#allocation0]]
  $region34: #{cnn_forward.3} parent=0
    _
  %s9 = ssub.s32 1, %s7
  %s10 = scalar_select 0, %s9, %s7
  // Predicated region
  $region2: #{cnn_forward.3} parent=0 // pred_check
    _
  $region3: #{cnn_forward.3} parent=0 // pred_check_branch
    %12 = sbr.rel (0) target = $region5
  $region4: #{cnn_forward.3} parent=0 // pred_region
    _
  $region5: #{cnn_forward.3} parent=0 // pred_fallthru
    _
  // Predicated region
  $region6: #{cnn_forward.3} parent=0 // pred_check
    _
  $region7: #{cnn_forward.3} parent=0 // pred_check_branch
    %14 = sbr.rel (0) target = $region9
  $region8: #{cnn_forward.3} parent=0 // pred_region
    _
  $region9: #{cnn_forward.3} parent=0 // pred_fallthru
    _
  // Predicated region
  $region10: #{cnn_forward.3} parent=0 // pred_check
    _
  $region11: #{cnn_forward.3} parent=0 // pred_check_branch
    %16 = sbr.rel (0) target = $region13
  $region12: #{cnn_forward.3} parent=0 // pred_region
    _
  $region13: #{cnn_forward.3} parent=0 // pred_fallthru
    _
  // Predicated region
  $region14: #{cnn_forward.3} parent=0 // pred_check
    _
  $region15: #{cnn_forward.3} parent=0 // pred_check_branch
    %18 = sbr.rel (0) target = $region17
  $region16: #{cnn_forward.3} parent=0 // pred_region
    _
  $region17: #{cnn_forward.3} parent=0 // pred_fallthru
    _
  // Predicated region
  $region18: #{cnn_forward.3} parent=0 // pred_check
    _
  $region19: #{cnn_forward.3} parent=0 // pred_check_branch
    %20 = sbr.rel (0) target = $region21
  $region20: #{cnn_forward.3} parent=0 // pred_region
    _
  $region21: #{cnn_forward.3} parent=0 // pred_fallthru
    _
  // Predicated region
  $region22: #{cnn_forward.3} parent=0 // pred_check
    _
  $region23: #{cnn_forward.3} parent=0 // pred_check_branch
    %22 = sbr.rel (0) target = $region25
  $region24: #{cnn_forward.3} parent=0 // pred_region
    _
  $region25: #{cnn_forward.3} parent=0 // pred_fallthru
    _
  %v24 = vlaneseq
  %v25 = vshrl.u32 %v24, 7
  %v26 = vadd.s32 %v25, 8
  %v27 = vadd.s32 %v25, 16
  %v28 = vadd.s32 %v25, 24
  %vm29 = vcmp.lt.s32.totalorder %v25, 0
  %v30 = vsub.s32 0, %v25
  %v31 = vsel %vm29, %v30, %v25
  %v32 = vshrl.u32 %v31, 4
  %v33 = vand.u32 %v31, 15
  %v34 = vsub.s32 0, %v33
  %v35 = vsel %vm29, %v34, %v33
  %vm36 = vcmp.lt.s32.totalorder %v26, 0
  %v37 = vsub.s32 0, %v26
  %v38 = vsel %vm36, %v37, %v26
  %v39 = vshrl.u32 %v38, 4
  %v40 = vand.u32 %v38, 15
  %v41 = vsub.s32 0, %v40
  %v42 = vsel %vm36, %v41, %v40
  %vm43 = vcmp.lt.s32.totalorder %v27, 0
  %v44 = vsub.s32 0, %v27
  %v45 = vsel %vm43, %v44, %v27
  %v46 = vshrl.u32 %v45, 4
  %v47 = vand.u32 %v45, 15
  %v48 = vsub.s32 0, %v47
  %v49 = vsel %vm43, %v48, %v47
  %vm50 = vcmp.lt.s32.totalorder %v28, 0
  %v51 = vsub.s32 0, %v28
  %v52 = vsel %vm50, %v51, %v28
  %v53 = vshrl.u32 %v52, 4
  %v54 = vand.u32 %v52, 15
  %v55 = vsub.s32 0, %v54
  %v56 = vsel %vm50, %v55, %v54
  %vm57 = vcmp.ne.s32.totalorder %v35, 0
  %vm58 = vcmp.ne.s32.totalorder %v42, 0
  %vm59 = vcmp.ne.s32.totalorder %v49, 0
  %vm60 = vcmp.ne.s32.totalorder %v56, 0
  %vm61 = vcmp.lt.s32.totalorder %v35, 0
  %vm62 = vcmp.lt.s32.totalorder %v42, 0
  %vm63 = vcmp.lt.s32.totalorder %v49, 0
  %vm64 = vcmp.lt.s32.totalorder %v56, 0
  %vm65 = vmand %vm61, %vm57
  %vm66 = vmand %vm62, %vm58
  %vm67 = vmand %vm63, %vm59
  %vm68 = vmand %vm64, %vm60
  %v69 = vadd.s32 %v35, 16
  %v70 = vadd.s32 %v42, 16
  %v71 = vadd.s32 %v49, 16
  %v72 = vadd.s32 %v56, 16
  %v73 = vsel %vm65, %v69, %v35
  %v74 = vsel %vm66, %v70, %v42
  %v75 = vsel %vm67, %v71, %v49
  %v76 = vsel %vm68, %v72, %v56
  %vm77 = vcmp.ne.s32.totalorder %v73, 0
  %vm78 = vcmp.ne.s32.totalorder %v74, 0
  %vm79 = vcmp.ne.s32.totalorder %v75, 0
  %vm80 = vcmp.ne.s32.totalorder %v76, 0
  %vm81 = vcmp.ne.s32.totalorder %v73, 15
  %vm82 = vcmp.ne.s32.totalorder %v74, 15
  %vm83 = vcmp.ne.s32.totalorder %v75, 15
  %vm84 = vcmp.ne.s32.totalorder %v76, 15
  %v85 = vld [vmem:[%s0] sm:$0xff]
  %v86 = vld [vmem:[%s0 + $0x8] sm:$0xf]
  %v87 = vld [vmem:[%s0 + $0xc] sm:$0xff]
  %v88 = vld [vmem:[%s0 + $0x14] sm:$0xf]
  %v89 = vld [vmem:[%s0 + $0x18] sm:$0xff]
  %v90 = vld [vmem:[%s0 + $0x20] sm:$0xf]
  %v91 = vld [vmem:[%s0 + $0x24] sm:$0xff]
  %v92 = vld [vmem:[%s0 + $0x2c] sm:$0xf]
  %v93 = vld [vmem:[%s1] sm:$0xf]
  %v94 = vld [vmem:[%s1 + $0x4] sm:$0xf]
  %v95 = vld [vmem:[%s1 + $0x8] sm:$0xf]
  %v96 = vld [vmem:[%s1 + $0xc] sm:$0xf]
  %v97 = vld [vmem:[%s1 + $0x10] sm:$0xf]
  %v98 = vld [vmem:[%s1 + $0x14] sm:$0xf]
  %v99 = vld [vmem:[%s1 + $0x18] sm:$0xf]
  %v100 = vld [vmem:[%s1 + $0x1c] sm:$0xf]
  %v101 = vld [vmem:[%s1 + $0x20] sm:$0xf]
  %v102 = vld [vmem:[%s1 + $0x24] sm:$0xf]
  %v103 = vld [vmem:[%s1 + $0x28] sm:$0xf]
  %v104 = vld [vmem:[%s1 + $0x2c] sm:$0xf]
  %v105 = vld [vmem:[%s1 + $0x30] sm:$0xf]
  %v106 = vld [vmem:[%s1 + $0x34] sm:$0xf]
  %v107 = vld [vmem:[%s1 + $0x38] sm:$0xf]
  %v108 = vld [vmem:[%s1 + $0x3c] sm:$0xf]
  %v109 = vld [vmem:[%s1 + $0x40] sm:$0xf]
  %v110 = vld [vmem:[%s1 + $0x44] sm:$0xf]
  %v111 = vld [vmem:[%s1 + $0x48] sm:$0xf]
  %v112 = vld [vmem:[%s1 + $0x4c] sm:$0xf]
  %v113 = vld [vmem:[%s1 + $0x50] sm:$0xf]
  %v114 = vld [vmem:[%s1 + $0x54] sm:$0xf]
  %v115 = vld [vmem:[%s1 + $0x58] sm:$0xf]
  %v116 = vld [vmem:[%s1 + $0x5c] sm:$0xf]
  %v117 = vld [vmem:[%s1 + $0x60] sm:$0xf]
  %v118 = vld [vmem:[%s1 + $0x64] sm:$0xf]
  %v119 = vld [vmem:[%s1 + $0x68] sm:$0xf]
  %v120 = vld [vmem:[%s1 + $0x6c] sm:$0xf]
  %v121 = vld [vmem:[%s1 + $0x70] sm:$0xf]
  %v122 = vld [vmem:[%s1 + $0x74] sm:$0xf]
  %v123 = vld [vmem:[%s1 + $0x78] sm:$0xf]
  %v124 = vld [vmem:[%s1 + $0x7c] sm:$0xf]
  %v125 = vld [vmem:[%s1 + $0x80] sm:$0xf]
  %v126 = vld [vmem:[%s1 + $0x84] sm:$0xf]
  %v127 = vld [vmem:[%s1 + $0x88] sm:$0xf]
  %v128 = vld [vmem:[%s1 + $0x8c] sm:$0xf]
  %v129 = vld [vmem:[%s1 + $0x90] sm:$0xf]
  %v130 = vld [vmem:[%s1 + $0x94] sm:$0x3]
  %v139 = vunpack.c.l.b16 %v85
  %v140 = vunpack.c.h.b16 %v85
  %v141 = vunpack.c.l.b16 %v86
  %v142 = vunpack.c.l.b16 %v87
  %v143 = vunpack.c.h.b16 %v87
  %v144 = vunpack.c.l.b16 %v88
  %v145 = vunpack.c.l.b16 %v89
  %v146 = vunpack.c.h.b16 %v89
  %v147 = vunpack.c.l.b16 %v90
  %v148 = vunpack.c.l.b16 %v91
  %v149 = vunpack.c.h.b16 %v91
  %v150 = vunpack.c.l.b16 %v92
  %v151 = vpack.c.b16 %v142, %v139
  %v152 = vpack.c.b16 %v143, %v140
  %v153 = vpack.c.b16 %v144, %v141
  %v154 = vpack.c.b16 %v148, %v145
  %v155 = vpack.c.b16 %v149, %v146
  %v156 = vpack.c.b16 %v150, %v147
  %v199 = vunpack.c.l.b16 %v93
  %v200 = vunpack.c.l.b16 %v94
  %v201 = vunpack.c.l.b16 %v95
  %v202 = vunpack.c.l.b16 %v96
  %v203 = vunpack.c.l.b16 %v97
  %v204 = vunpack.c.l.b16 %v98
  %v205 = vunpack.c.l.b16 %v99
  %v206 = vunpack.c.l.b16 %v100
  %v207 = vunpack.c.l.b16 %v101
  %v208 = vunpack.c.l.b16 %v102
  %v209 = vunpack.c.l.b16 %v103
  %v210 = vunpack.c.l.b16 %v104
  %v211 = vunpack.c.l.b16 %v105
  %v212 = vunpack.c.l.b16 %v106
  %v213 = vunpack.c.l.b16 %v107
  %v214 = vunpack.c.l.b16 %v108
  %v215 = vunpack.c.l.b16 %v109
  %v216 = vunpack.c.l.b16 %v110
  %v217 = vunpack.c.l.b16 %v111
  %v218 = vunpack.c.l.b16 %v112
  %v219 = vunpack.c.l.b16 %v113
  %v220 = vunpack.c.l.b16 %v114
  %v221 = vunpack.c.l.b16 %v115
  %v222 = vunpack.c.l.b16 %v116
  %v223 = vunpack.c.l.b16 %v117
  %v224 = vunpack.c.l.b16 %v118
  %v225 = vunpack.c.l.b16 %v119
  %v226 = vunpack.c.l.b16 %v120
  %v227 = vunpack.c.l.b16 %v121
  %v228 = vunpack.c.l.b16 %v122
  %v229 = vunpack.c.l.b16 %v123
  %v230 = vunpack.c.l.b16 %v124
  %v231 = vunpack.c.l.b16 %v125
  %v232 = vunpack.c.l.b16 %v126
  %v233 = vunpack.c.l.b16 %v127
  %v234 = vunpack.c.l.b16 %v128
  %v235 = vunpack.c.l.b16 %v129
  %v236 = vunpack.c.l.b16 %v130
  %v237 = vpack.c.b16 %v200, %v199
  %v238 = vpack.c.b16 %v202, %v201
  %v239 = vpack.c.b16 %v204, %v203
  %v240 = vpack.c.b16 %v206, %v205
  %v241 = vpack.c.b16 %v208, %v207
  %v242 = vpack.c.b16 %v210, %v209
  %v243 = vpack.c.b16 %v212, %v211
  %v244 = vpack.c.b16 %v214, %v213
  %v245 = vpack.c.b16 %v216, %v215
  %v246 = vpack.c.b16 %v218, %v217
  %v247 = vpack.c.b16 %v220, %v219
  %v248 = vpack.c.b16 %v222, %v221
  %v249 = vpack.c.b16 %v224, %v223
  %v250 = vpack.c.b16 %v226, %v225
  %v251 = vpack.c.b16 %v228, %v227
  %v252 = vpack.c.b16 %v230, %v229
  %v253 = vpack.c.b16 %v232, %v231
  %v254 = vpack.c.b16 %v234, %v233
  %v255 = vpack.c.b16 %v236, %v235
  %vm274 = vcmask 359424
  %v276 = vsel %vm274, %v153, 0
  %v279 = vsel %vm274, %v156, 0
  %vm281 = vcmask 1045504
  %v283 = vsel %vm281, %v255, 0
  %285 = vmatprep.subr.bf16.mxu0 0
  %286 = vmatpush1.bf16.msra.mxu0 %v244
  %287 = vmatprep.subr.bf16.mxu0 0
  %288 = vmatpush1.bf16.msra.mxu0 %v243
  %289 = vmatprep.subr.bf16.mxu0 0
  %290 = vmatpush1.bf16.msra.mxu0 %v242
  %291 = vmatprep.subr.bf16.mxu0 0
  %292 = vmatpush1.bf16.msra.mxu0 %v241
  %293 = vmatprep.subr.bf16.mxu0 0
  %294 = vmatpush1.bf16.msra.mxu0 %v240
  %295 = vmatprep.subr.bf16.mxu0 0
  %296 = vmatpush1.bf16.msra.mxu0 %v239
  %297 = vmatprep.subr.bf16.mxu0 0
  %298 = vmatpush1.bf16.msra.mxu0 %v238
  %299 = vmatprep.subr.bf16.mxu0 0
  %300 = vmatpush1.bf16.msra.mxu0 %v237
  %301 = vmatprep.subr.bf16.mxu0 0
  %302 = vmatpush2.bf16.msra.mxu0 %v252
  %303 = vmatprep.subr.bf16.mxu0 0
  %304 = vmatpush2.bf16.msra.mxu0 %v251
  %305 = vmatprep.subr.bf16.mxu0 0
  %306 = vmatpush2.bf16.msra.mxu0 %v250
  %307 = vmatprep.subr.bf16.mxu0 0
  %308 = vmatpush2.bf16.msra.mxu0 %v249
  %309 = vmatprep.subr.bf16.mxu0 0
  %310 = vmatpush2.bf16.msra.mxu0 %v248
  %311 = vmatprep.subr.bf16.mxu0 0
  %312 = vmatpush2.bf16.msra.mxu0 %v247
  %313 = vmatprep.subr.bf16.mxu0 0
  %314 = vmatpush2.bf16.msra.mxu0 %v246
  %315 = vmatprep.subr.bf16.mxu0 0
  %316 = vmatpush2.bf16.msra.mxu0 %v245
  %317 = vmatprep.mubr.bf16.mxu0 %v152
  %318 = vmatmul.mubr.bf16.gmra.mxu0 %v151
  %v319 = vpop.f32.mrf.mxu0
  %v320 = vadd.f32 0.0, %v319
  %v321 = vpop.f32.mrf.mxu0
  %v322 = vpop.f32.mrf.mxu0
  %v323 = vadd.f32 0.0, %v322
  %v324 = vpop.f32.mrf.mxu0
  %325 = vmatprep.mubr.bf16.mxu0 %v155
  %326 = vmatmul.mubr.bf16.gmra.mxu0 %v154
  %v327 = vpop.f32.mrf.mxu0
  %v328 = vadd.f32 0.0, %v327
  %v329 = vpop.f32.mrf.mxu0
  %v330 = vpop.f32.mrf.mxu0
  %v331 = vadd.f32 0.0, %v330
  %v332 = vpop.f32.mrf.mxu0
  %333 = vdwg.mxu0
  %334 = vmatprep.subr.bf16.mxu0 0
  %335 = vmatpush1.bf16.msra.mxu0 0
  %336 = vmatprep.subr.bf16.mxu0 0
  %337 = vmatpush1.bf16.msra.mxu0 0
  %338 = vmatprep.subr.bf16.mxu0 0
  %339 = vmatpush1.bf16.msra.mxu0 0
  %340 = vmatprep.subr.bf16.mxu0 0
  %341 = vmatpush1.bf16.msra.mxu0 0
  %342 = vmatprep.subr.bf16.mxu0 0
  %343 = vmatpush1.bf16.msra.mxu0 0
  %344 = vmatprep.subr.bf16.mxu0 0
  %345 = vmatpush1.bf16.msra.mxu0 %v283
  %346 = vmatprep.subr.bf16.mxu0 0
  %347 = vmatpush1.bf16.msra.mxu0 %v254
  %348 = vmatprep.subr.bf16.mxu0 0
  %349 = vmatpush1.bf16.msra.mxu0 %v253
  %350 = vmatprep.subr.bf16.mxu0 0
  %351 = vmatpush2.bf16.msra.mxu0 0
  %352 = vmatprep.subr.bf16.mxu0 0
  %353 = vmatpush2.bf16.msra.mxu0 0
  %354 = vmatprep.subr.bf16.mxu0 0
  %355 = vmatpush2.bf16.msra.mxu0 0
  %356 = vmatprep.subr.bf16.mxu0 0
  %357 = vmatpush2.bf16.msra.mxu0 0
  %358 = vmatprep.subr.bf16.mxu0 0
  %359 = vmatpush2.bf16.msra.mxu0 0
  %360 = vmatprep.subr.bf16.mxu0 0
  %361 = vmatpush2.bf16.msra.mxu0 0
  %362 = vmatprep.subr.bf16.mxu0 0
  %363 = vmatpush2.bf16.msra.mxu0 0
  %364 = vmatprep.subr.bf16.mxu0 0
  %365 = vmatpush2.bf16.msra.mxu0 0
  %366 = vmatprep.mubr.bf16.mxu0 0
  %367 = vmatmul.mubr.bf16.gmra.mxu0 %v276
  %v368 = vpop.f32.mrf.mxu0
  %v369 = vadd.f32 %v320, %v368
  %v370 = vpop.f32.mrf.mxu0
  %v371 = vpop.f32.mrf.mxu0
  %v372 = vadd.f32 %v323, %v371
  %v373 = vpop.f32.mrf.mxu0
  %374 = vmatprep.mubr.bf16.mxu0 0
  %375 = vmatmul.mubr.bf16.gmra.mxu0 %v279
  %v376 = vpop.f32.mrf.mxu0
  %v377 = vadd.f32 %v328, %v376
  %v378 = vpop.f32.mrf.mxu0
  %v379 = vpop.f32.mrf.mxu0
  %v380 = vadd.f32 %v331, %v379
  %v381 = vpop.f32.mrf.mxu0
  %382 = vdwg.mxu0
  %s383 = scalar_lea.vmem %s1, 152
  %v384 = vld [vmem:[%s383] sm:$0xf]
  %v385 = vld [vmem:[%s383 + $0x4] sm:$0xf]
  %v386 = vld [vmem:[%s383 + $0x8] sm:$0xf]
  %v387 = vld [vmem:[%s383 + $0xc] sm:$0xf]
  %v388 = vld [vmem:[%s383 + $0x10] sm:$0xf]
  %v389 = vld [vmem:[%s383 + $0x14] sm:$0xf]
  %v390 = vld [vmem:[%s383 + $0x18] sm:$0xf]
  %v391 = vld [vmem:[%s383 + $0x1c] sm:$0xf]
  %v392 = vld [vmem:[%s383 + $0x20] sm:$0xf]
  %v393 = vld [vmem:[%s383 + $0x24] sm:$0xf]
  %v394 = vld [vmem:[%s383 + $0x28] sm:$0xf]
  %v395 = vld [vmem:[%s383 + $0x2c] sm:$0xf]
  %v396 = vld [vmem:[%s383 + $0x30] sm:$0xf]
  %v397 = vld [vmem:[%s383 + $0x34] sm:$0xf]
  %v398 = vld [vmem:[%s383 + $0x38] sm:$0xf]
  %v399 = vld [vmem:[%s383 + $0x3c] sm:$0xf]
  %v400 = vld [vmem:[%s383 + $0x40] sm:$0xf]
  %v401 = vld [vmem:[%s383 + $0x44] sm:$0xf]
  %v402 = vld [vmem:[%s383 + $0x48] sm:$0xf]
  %v403 = vld [vmem:[%s383 + $0x4c] sm:$0xf]
  %v404 = vld [vmem:[%s383 + $0x50] sm:$0xf]
  %v405 = vld [vmem:[%s383 + $0x54] sm:$0xf]
  %v406 = vld [vmem:[%s383 + $0x58] sm:$0xf]
  %v407 = vld [vmem:[%s383 + $0x5c] sm:$0xf]
  %v408 = vld [vmem:[%s383 + $0x60] sm:$0xf]
  %v409 = vld [vmem:[%s383 + $0x64] sm:$0xf]
  %v410 = vld [vmem:[%s383 + $0x68] sm:$0xf]
  %v411 = vld [vmem:[%s383 + $0x6c] sm:$0xf]
  %v412 = vld [vmem:[%s383 + $0x70] sm:$0xf]
  %v413 = vld [vmem:[%s383 + $0x74] sm:$0xf]
  %v414 = vld [vmem:[%s383 + $0x78] sm:$0xf]
  %v415 = vld [vmem:[%s383 + $0x7c] sm:$0xf]
  %v416 = vld [vmem:[%s383 + $0x80] sm:$0xf]
  %v417 = vld [vmem:[%s383 + $0x84] sm:$0xf]
  %v418 = vld [vmem:[%s383 + $0x88] sm:$0xf]
  %v419 = vld [vmem:[%s383 + $0x8c] sm:$0xf]
  %v420 = vld [vmem:[%s383 + $0x90] sm:$0xf]
  %v421 = vld [vmem:[%s383 + $0x94] sm:$0x3]
  %s422 = scalar_lea.vmem %s1, 304
  %v423 = vld [vmem:[%s422] sm:$0xf]
  %v424 = vld [vmem:[%s422 + $0x4] sm:$0xf]
  %v425 = vld [vmem:[%s422 + $0x8] sm:$0xf]
  %v426 = vld [vmem:[%s422 + $0xc] sm:$0xf]
  %v427 = vld [vmem:[%s422 + $0x10] sm:$0xf]
  %v428 = vld [vmem:[%s422 + $0x14] sm:$0xf]
  %v429 = vld [vmem:[%s422 + $0x18] sm:$0xf]
  %v430 = vld [vmem:[%s422 + $0x1c] sm:$0xf]
  %v431 = vld [vmem:[%s422 + $0x20] sm:$0xf]
  %v432 = vld [vmem:[%s422 + $0x24] sm:$0xf]
  %v433 = vld [vmem:[%s422 + $0x28] sm:$0xf]
  %v434 = vld [vmem:[%s422 + $0x2c] sm:$0xf]
  %v435 = vld [vmem:[%s422 + $0x30] sm:$0xf]
  %v436 = vld [vmem:[%s422 + $0x34] sm:$0xf]
  %v437 = vld [vmem:[%s422 + $0x38] sm:$0xf]
  %v438 = vld [vmem:[%s422 + $0x3c] sm:$0xf]
  %v439 = vld [vmem:[%s422 + $0x40] sm:$0xf]
  %v440 = vld [vmem:[%s422 + $0x44] sm:$0xf]
  %v441 = vld [vmem:[%s422 + $0x48] sm:$0xf]
  %v442 = vld [vmem:[%s422 + $0x4c] sm:$0xf]
  %v443 = vld [vmem:[%s422 + $0x50] sm:$0xf]
  %v444 = vld [vmem:[%s422 + $0x54] sm:$0xf]
  %v445 = vld [vmem:[%s422 + $0x58] sm:$0xf]
  %v446 = vld [vmem:[%s422 + $0x5c] sm:$0xf]
  %v447 = vld [vmem:[%s422 + $0x60] sm:$0xf]
  %v448 = vld [vmem:[%s422 + $0x64] sm:$0xf]
  %v449 = vld [vmem:[%s422 + $0x68] sm:$0xf]
  %v450 = vld [vmem:[%s422 + $0x6c] sm:$0xf]
  %v451 = vld [vmem:[%s422 + $0x70] sm:$0xf]
  %v452 = vld [vmem:[%s422 + $0x74] sm:$0xf]
  %v453 = vld [vmem:[%s422 + $0x78] sm:$0xf]
  %v454 = vld [vmem:[%s422 + $0x7c] sm:$0xf]
  %v455 = vld [vmem:[%s422 + $0x80] sm:$0xf]
  %v456 = vld [vmem:[%s422 + $0x84] sm:$0xf]
  %v457 = vld [vmem:[%s422 + $0x88] sm:$0xf]
  %v458 = vld [vmem:[%s422 + $0x8c] sm:$0xf]
  %v459 = vld [vmem:[%s422 + $0x90] sm:$0xf]
  %v460 = vld [vmem:[%s422 + $0x94] sm:$0x3]
  %v499 = vunpack.c.l.b16 %v423
  %v500 = vunpack.c.l.b16 %v424
  %v501 = vunpack.c.l.b16 %v425
  %v502 = vunpack.c.l.b16 %v426
  %v503 = vunpack.c.l.b16 %v427
  %v504 = vunpack.c.l.b16 %v428
  %v505 = vunpack.c.l.b16 %v429
  %v506 = vunpack.c.l.b16 %v430
  %v507 = vunpack.c.l.b16 %v431
  %v508 = vunpack.c.l.b16 %v432
  %v509 = vunpack.c.l.b16 %v433
  %v510 = vunpack.c.l.b16 %v434
  %v511 = vunpack.c.l.b16 %v435
  %v512 = vunpack.c.l.b16 %v436
  %v513 = vunpack.c.l.b16 %v437
  %v514 = vunpack.c.l.b16 %v438
  %v515 = vunpack.c.l.b16 %v439
  %v516 = vunpack.c.l.b16 %v440
  %v517 = vunpack.c.l.b16 %v441
  %v518 = vunpack.c.l.b16 %v442
  %v519 = vunpack.c.l.b16 %v443
  %v520 = vunpack.c.l.b16 %v444
  %v521 = vunpack.c.l.b16 %v445
  %v522 = vunpack.c.l.b16 %v446
  %v523 = vunpack.c.l.b16 %v447
  %v524 = vunpack.c.l.b16 %v448
  %v525 = vunpack.c.l.b16 %v449
  %v526 = vunpack.c.l.b16 %v450
  %v527 = vunpack.c.l.b16 %v451
  %v528 = vunpack.c.l.b16 %v452
  %v529 = vunpack.c.l.b16 %v453
  %v530 = vunpack.c.l.b16 %v454
  %v531 = vunpack.c.l.b16 %v455
  %v532 = vunpack.c.l.b16 %v456
  %v533 = vunpack.c.l.b16 %v457
  %v534 = vunpack.c.l.b16 %v458
  %v535 = vunpack.c.l.b16 %v459
  %v536 = vunpack.c.l.b16 %v460
  %v537 = vpack.c.b16 %v500, %v499
  %v538 = vpack.c.b16 %v502, %v501
  %v539 = vpack.c.b16 %v504, %v503
  %v540 = vpack.c.b16 %v506, %v505
  %v541 = vpack.c.b16 %v508, %v507
  %v542 = vpack.c.b16 %v510, %v509
  %v543 = vpack.c.b16 %v512, %v511
  %v544 = vpack.c.b16 %v514, %v513
  %v545 = vpack.c.b16 %v516, %v515
  %v546 = vpack.c.b16 %v518, %v517
  %v547 = vpack.c.b16 %v520, %v519
  %v548 = vpack.c.b16 %v522, %v521
  %v549 = vpack.c.b16 %v524, %v523
  %v550 = vpack.c.b16 %v526, %v525
  %v551 = vpack.c.b16 %v528, %v527
  %v552 = vpack.c.b16 %v530, %v529
  %v553 = vpack.c.b16 %v532, %v531
  %v554 = vpack.c.b16 %v534, %v533
  %v555 = vpack.c.b16 %v536, %v535
  %v575 = vsel %vm281, %v555, 0
  %577 = vmatprep.subr.bf16.mxu0 0
  %578 = vmatpush1.bf16.msra.mxu0 %v544
  %579 = vmatprep.subr.bf16.mxu0 0
  %580 = vmatpush1.bf16.msra.mxu0 %v543
  %581 = vmatprep.subr.bf16.mxu0 0
  %582 = vmatpush1.bf16.msra.mxu0 %v542
  %583 = vmatprep.subr.bf16.mxu0 0
  %584 = vmatpush1.bf16.msra.mxu0 %v541
  %585 = vmatprep.subr.bf16.mxu0 0
  %586 = vmatpush1.bf16.msra.mxu0 %v540
  %587 = vmatprep.subr.bf16.mxu0 0
  %588 = vmatpush1.bf16.msra.mxu0 %v539
  %589 = vmatprep.subr.bf16.mxu0 0
  %590 = vmatpush1.bf16.msra.mxu0 %v538
  %591 = vmatprep.subr.bf16.mxu0 0
  %592 = vmatpush1.bf16.msra.mxu0 %v537
  %593 = vmatprep.subr.bf16.mxu0 0
  %594 = vmatpush2.bf16.msra.mxu0 %v552
  %595 = vmatprep.subr.bf16.mxu0 0
  %596 = vmatpush2.bf16.msra.mxu0 %v551
  %597 = vmatprep.subr.bf16.mxu0 0
  %598 = vmatpush2.bf16.msra.mxu0 %v550
  %599 = vmatprep.subr.bf16.mxu0 0
  %600 = vmatpush2.bf16.msra.mxu0 %v549
  %601 = vmatprep.subr.bf16.mxu0 0
  %602 = vmatpush2.bf16.msra.mxu0 %v548
  %603 = vmatprep.subr.bf16.mxu0 0
  %604 = vmatpush2.bf16.msra.mxu0 %v547
  %605 = vmatprep.subr.bf16.mxu0 0
  %606 = vmatpush2.bf16.msra.mxu0 %v546
  %607 = vmatprep.subr.bf16.mxu0 0
  %608 = vmatpush2.bf16.msra.mxu0 %v545
  %609 = vmatprep.mubr.bf16.mxu0 %v152
  %610 = vmatmul.mubr.bf16.gmra.mxu0 %v151
  %v611 = vpop.f32.mrf.mxu0
  %v612 = vadd.f32 0.0, %v611
  %v613 = vpop.f32.mrf.mxu0
  %v614 = vpop.f32.mrf.mxu0
  %v615 = vadd.f32 0.0, %v614
  %v616 = vpop.f32.mrf.mxu0
  %617 = vmatprep.mubr.bf16.mxu0 %v155
  %618 = vmatmul.mubr.bf16.gmra.mxu0 %v154
  %v619 = vpop.f32.mrf.mxu0
  %v620 = vadd.f32 0.0, %v619
  %v621 = vpop.f32.mrf.mxu0
  %v622 = vpop.f32.mrf.mxu0
  %v623 = vadd.f32 0.0, %v622
  %v624 = vpop.f32.mrf.mxu0
  %625 = vdwg.mxu0
  %626 = vmatprep.subr.bf16.mxu0 0
  %627 = vmatpush1.bf16.msra.mxu0 0
  %628 = vmatprep.subr.bf16.mxu0 0
  %629 = vmatpush1.bf16.msra.mxu0 0
  %630 = vmatprep.subr.bf16.mxu0 0
  %631 = vmatpush1.bf16.msra.mxu0 0
  %632 = vmatprep.subr.bf16.mxu0 0
  %633 = vmatpush1.bf16.msra.mxu0 0
  %634 = vmatprep.subr.bf16.mxu0 0
  %635 = vmatpush1.bf16.msra.mxu0 0
  %636 = vmatprep.subr.bf16.mxu0 0
  %637 = vmatpush1.bf16.msra.mxu0 %v575
  %638 = vmatprep.subr.bf16.mxu0 0
  %639 = vmatpush1.bf16.msra.mxu0 %v554
  %640 = vmatprep.subr.bf16.mxu0 0
  %641 = vmatpush1.bf16.msra.mxu0 %v553
  %642 = vmatprep.subr.bf16.mxu0 0
  %643 = vmatpush2.bf16.msra.mxu0 0
  %644 = vmatprep.subr.bf16.mxu0 0
  %645 = vmatpush2.bf16.msra.mxu0 0
  %646 = vmatprep.subr.bf16.mxu0 0
  %647 = vmatpush2.bf16.msra.mxu0 0
  %648 = vmatprep.subr.bf16.mxu0 0
  %649 = vmatpush2.bf16.msra.mxu0 0
  %650 = vmatprep.subr.bf16.mxu0 0
  %651 = vmatpush2.bf16.msra.mxu0 0
  %652 = vmatprep.subr.bf16.mxu0 0
  %653 = vmatpush2.bf16.msra.mxu0 0
  %654 = vmatprep.subr.bf16.mxu0 0
  %655 = vmatpush2.bf16.msra.mxu0 0
  %656 = vmatprep.subr.bf16.mxu0 0
  %657 = vmatpush2.bf16.msra.mxu0 0
  %658 = vmatprep.mubr.bf16.mxu0 0
  %659 = vmatmul.mubr.bf16.gmra.mxu0 %v276
  %v660 = vpop.f32.mrf.mxu0
  %v661 = vadd.f32 %v612, %v660
  %v662 = vpop.f32.mrf.mxu0
  %v663 = vpop.f32.mrf.mxu0
  %v664 = vadd.f32 %v615, %v663
  %v665 = vpop.f32.mrf.mxu0
  %666 = vmatprep.mubr.bf16.mxu0 0
  %667 = vmatmul.mubr.bf16.gmra.mxu0 %v279
  %v668 = vpop.f32.mrf.mxu0
  %v669 = vadd.f32 %v620, %v668
  %v670 = vpop.f32.mrf.mxu0
  %v671 = vpop.f32.mrf.mxu0
  %v672 = vadd.f32 %v623, %v671
  %v673 = vpop.f32.mrf.mxu0
  %674 = vdwg.mxu0
  %v675 = vrot.slane %v369, 7
  %v676 = vrot.slane %v372, 7
  %v677 = vrot.slane %v377, 7
  %v678 = vrot.slane %v380, 7
  %vm679 = vcmp.lt.s32.totalorder %v25, 1
  %v680 = vsel %vm679, %v677, %v678
  %v681 = vsel %vm679, %v676, %v677
  %v682 = vsel %vm679, %v675, %v676
  %v683 = vsel %vm679, %v678, %v675
  %v684 = vsel %vm77, 1, 0
  %v685 = vsel %vm78, 1, 0
  %v686 = vsel %vm79, 1, 0
  %v687 = vsel %vm80, 1, 0
  %vm688 = vcmp.eq.s32.totalorder %v684, 1
  %vm689 = vcmp.eq.s32.totalorder %v685, 1
  %vm690 = vcmp.eq.s32.totalorder %v686, 1
  %vm691 = vcmp.eq.s32.totalorder %v687, 1
  %v692 = vsel %vm688, %v683, 0.0
  %v693 = vsel %vm689, %v682, 0.0
  %v694 = vsel %vm690, %v681, 0.0
  %v695 = vsel %vm691, %v680, 0.0
  %v734 = vunpack.c.l.b16 %v384
  %v735 = vunpack.c.l.b16 %v385
  %v736 = vunpack.c.l.b16 %v386
  %v737 = vunpack.c.l.b16 %v387
  %v738 = vunpack.c.l.b16 %v388
  %v739 = vunpack.c.l.b16 %v389
  %v740 = vunpack.c.l.b16 %v390
  %v741 = vunpack.c.l.b16 %v391
  %v742 = vunpack.c.l.b16 %v392
  %v743 = vunpack.c.l.b16 %v393
  %v744 = vunpack.c.l.b16 %v394
  %v745 = vunpack.c.l.b16 %v395
  %v746 = vunpack.c.l.b16 %v396
  %v747 = vunpack.c.l.b16 %v397
  %v748 = vunpack.c.l.b16 %v398
  %v749 = vunpack.c.l.b16 %v399
  %v750 = vunpack.c.l.b16 %v400
  %v751 = vunpack.c.l.b16 %v401
  %v752 = vunpack.c.l.b16 %v402
  %v753 = vunpack.c.l.b16 %v403
  %v754 = vunpack.c.l.b16 %v404
  %v755 = vunpack.c.l.b16 %v405
  %v756 = vunpack.c.l.b16 %v406
  %v757 = vunpack.c.l.b16 %v407
  %v758 = vunpack.c.l.b16 %v408
  %v759 = vunpack.c.l.b16 %v409
  %v760 = vunpack.c.l.b16 %v410
  %v761 = vunpack.c.l.b16 %v411
  %v762 = vunpack.c.l.b16 %v412
  %v763 = vunpack.c.l.b16 %v413
  %v764 = vunpack.c.l.b16 %v414
  %v765 = vunpack.c.l.b16 %v415
  %v766 = vunpack.c.l.b16 %v416
  %v767 = vunpack.c.l.b16 %v417
  %v768 = vunpack.c.l.b16 %v418
  %v769 = vunpack.c.l.b16 %v419
  %v770 = vunpack.c.l.b16 %v420
  %v771 = vunpack.c.l.b16 %v421
  %v772 = vpack.c.b16 %v735, %v734
  %v773 = vpack.c.b16 %v737, %v736
  %v774 = vpack.c.b16 %v739, %v738
  %v775 = vpack.c.b16 %v741, %v740
  %v776 = vpack.c.b16 %v743, %v742
  %v777 = vpack.c.b16 %v745, %v744
  %v778 = vpack.c.b16 %v747, %v746
  %v779 = vpack.c.b16 %v749, %v748
  %v780 = vpack.c.b16 %v751, %v750
  %v781 = vpack.c.b16 %v753, %v752
  %v782 = vpack.c.b16 %v755, %v754
  %v783 = vpack.c.b16 %v757, %v756
  %v784 = vpack.c.b16 %v759, %v758
  %v785 = vpack.c.b16 %v761, %v760
  %v786 = vpack.c.b16 %v763, %v762
  %v787 = vpack.c.b16 %v765, %v764
  %v788 = vpack.c.b16 %v767, %v766
  %v789 = vpack.c.b16 %v769, %v768
  %v790 = vpack.c.b16 %v771, %v770
  %v810 = vsel %vm281, %v790, 0
  %812 = vmatprep.subr.bf16.mxu0 0
  %813 = vmatpush1.bf16.msra.mxu0 %v779
  %814 = vmatprep.subr.bf16.mxu0 0
  %815 = vmatpush1.bf16.msra.mxu0 %v778
  %816 = vmatprep.subr.bf16.mxu0 0
  %817 = vmatpush1.bf16.msra.mxu0 %v777
  %818 = vmatprep.subr.bf16.mxu0 0
  %819 = vmatpush1.bf16.msra.mxu0 %v776
  %820 = vmatprep.subr.bf16.mxu0 0
  %821 = vmatpush1.bf16.msra.mxu0 %v775
  %822 = vmatprep.subr.bf16.mxu0 0
  %823 = vmatpush1.bf16.msra.mxu0 %v774
  %824 = vmatprep.subr.bf16.mxu0 0
  %825 = vmatpush1.bf16.msra.mxu0 %v773
  %826 = vmatprep.subr.bf16.mxu0 0
  %827 = vmatpush1.bf16.msra.mxu0 %v772
  %828 = vmatprep.subr.bf16.mxu0 0
  %829 = vmatpush2.bf16.msra.mxu0 %v787
  %830 = vmatprep.subr.bf16.mxu0 0
  %831 = vmatpush2.bf16.msra.mxu0 %v786
  %832 = vmatprep.subr.bf16.mxu0 0
  %833 = vmatpush2.bf16.msra.mxu0 %v785
  %834 = vmatprep.subr.bf16.mxu0 0
  %835 = vmatpush2.bf16.msra.mxu0 %v784
  %836 = vmatprep.subr.bf16.mxu0 0
  %837 = vmatpush2.bf16.msra.mxu0 %v783
  %838 = vmatprep.subr.bf16.mxu0 0
  %839 = vmatpush2.bf16.msra.mxu0 %v782
  %840 = vmatprep.subr.bf16.mxu0 0
  %841 = vmatpush2.bf16.msra.mxu0 %v781
  %842 = vmatprep.subr.bf16.mxu0 0
  %843 = vmatpush2.bf16.msra.mxu0 %v780
  %844 = vmatprep.mubr.bf16.mxu0 %v152
  %845 = vmatmul.mubr.bf16.gmra.mxu0 %v151
  %v846 = vpop.f32.mrf.mxu0
  %v847 = vadd.f32 %v692, %v846
  %v848 = vpop.f32.mrf.mxu0
  %v849 = vpop.f32.mrf.mxu0
  %v850 = vadd.f32 %v693, %v849
  %v851 = vpop.f32.mrf.mxu0
  %852 = vmatprep.mubr.bf16.mxu0 %v155
  %853 = vmatmul.mubr.bf16.gmra.mxu0 %v154
  %v854 = vpop.f32.mrf.mxu0
  %v855 = vadd.f32 %v694, %v854
  %v856 = vpop.f32.mrf.mxu0
  %v857 = vpop.f32.mrf.mxu0
  %v858 = vadd.f32 %v695, %v857
  %v859 = vpop.f32.mrf.mxu0
  %860 = vdwg.mxu0
  %861 = vmatprep.subr.bf16.mxu0 0
  %862 = vmatpush1.bf16.msra.mxu0 0
  %863 = vmatprep.subr.bf16.mxu0 0
  %864 = vmatpush1.bf16.msra.mxu0 0
  %865 = vmatprep.subr.bf16.mxu0 0
  %866 = vmatpush1.bf16.msra.mxu0 0
  %867 = vmatprep.subr.bf16.mxu0 0
  %868 = vmatpush1.bf16.msra.mxu0 0
  %869 = vmatprep.subr.bf16.mxu0 0
  %870 = vmatpush1.bf16.msra.mxu0 0
  %871 = vmatprep.subr.bf16.mxu0 0
  %872 = vmatpush1.bf16.msra.mxu0 %v810
  %873 = vmatprep.subr.bf16.mxu0 0
  %874 = vmatpush1.bf16.msra.mxu0 %v789
  %875 = vmatprep.subr.bf16.mxu0 0
  %876 = vmatpush1.bf16.msra.mxu0 %v788
  %877 = vmatprep.subr.bf16.mxu0 0
  %878 = vmatpush2.bf16.msra.mxu0 0
  %879 = vmatprep.subr.bf16.mxu0 0
  %880 = vmatpush2.bf16.msra.mxu0 0
  %881 = vmatprep.subr.bf16.mxu0 0
  %882 = vmatpush2.bf16.msra.mxu0 0
  %883 = vmatprep.subr.bf16.mxu0 0
  %884 = vmatpush2.bf16.msra.mxu0 0
  %885 = vmatprep.subr.bf16.mxu0 0
  %886 = vmatpush2.bf16.msra.mxu0 0
  %887 = vmatprep.subr.bf16.mxu0 0
  %888 = vmatpush2.bf16.msra.mxu0 0
  %889 = vmatprep.subr.bf16.mxu0 0
  %890 = vmatpush2.bf16.msra.mxu0 0
  %891 = vmatprep.subr.bf16.mxu0 0
  %892 = vmatpush2.bf16.msra.mxu0 0
  %893 = vmatprep.mubr.bf16.mxu0 0
  %894 = vmatmul.mubr.bf16.gmra.mxu0 %v276
  %v895 = vpop.f32.mrf.mxu0
  %v896 = vadd.f32 %v847, %v895
  %v897 = vpop.f32.mrf.mxu0
  %v898 = vpop.f32.mrf.mxu0
  %v899 = vadd.f32 %v850, %v898
  %v900 = vpop.f32.mrf.mxu0
  %901 = vmatprep.mubr.bf16.mxu0 0
  %902 = vmatmul.mubr.bf16.gmra.mxu0 %v279
  %v903 = vpop.f32.mrf.mxu0
  %v904 = vadd.f32 %v855, %v903
  %v905 = vpop.f32.mrf.mxu0
  %v906 = vpop.f32.mrf.mxu0
  %v907 = vadd.f32 %v858, %v906
  %v908 = vpop.f32.mrf.mxu0
  %909 = vdwg.mxu0
  %v910 = vrot.slane %v661, 1
  %v911 = vrot.slane %v664, 1
  %v912 = vrot.slane %v669, 1
  %v913 = vrot.slane %v672, 1
  %vm914 = vcmp.lt.s32.totalorder %v25, 7
  %v915 = vsel %vm914, %v912, %v913
  %v916 = vsel %vm914, %v911, %v912
  %v917 = vsel %vm914, %v910, %v911
  %v918 = vsel %vm914, %v913, %v910
  %v919 = vsel %vm81, 1, 0
  %v920 = vsel %vm82, 1, 0
  %v921 = vsel %vm83, 1, 0
  %v922 = vsel %vm84, 1, 0
  %vm923 = vcmp.eq.s32.totalorder %v919, 1
  %vm924 = vcmp.eq.s32.totalorder %v920, 1
  %vm925 = vcmp.eq.s32.totalorder %v921, 1
  %vm926 = vcmp.eq.s32.totalorder %v922, 1
  %v927 = vsel %vm923, %v917, 0.0
  %v928 = vsel %vm924, %v916, 0.0
  %v929 = vsel %vm925, %v915, 0.0
  %v930 = vsel %vm926, %v918, 0.0
  %v931 = vadd.f32 %v896, %v927
  %v932 = vadd.f32 %v899, %v928
  %v933 = vadd.f32 %v904, %v929
  %v934 = vadd.f32 %v907, %v930
  %v935 = vld [vmem:[%s2] sm:$0x1]
  %v937 = vlaneseq
  %v938 = vshrl.u32 %v937, 7
  %v939 = vsub.s32 0, %v938
  %v940 = vrot.slane %v935, %v939
  %v942 = vadd.f32 %v931, %v940
  %v943 = vadd.f32 %v932, %v940
  %v944 = vadd.f32 %v933, %v940
  %v945 = vadd.f32 %v934, %v940
  %v946 = vmax.f32 %v942, 0.0
  %v947 = vmax.f32 %v943, 0.0
  %v948 = vmax.f32 %v944, 0.0
  %v949 = vmax.f32 %v945, 0.0
  %v950 = vpack.c.bf16 %v947, %v946
  %v951 = vpack.c.bf16 %v949, %v948
  %v952 = vld [vmem:[%s3] sm:$0xf]
  %v953 = vld [vmem:[%s3 + $0x4] sm:$0xf]
  %v954 = vld [vmem:[%s3 + $0x8] sm:$0xf]
  %v955 = vld [vmem:[%s3 + $0xc] sm:$0xf]
  %v956 = vld [vmem:[%s3 + $0x10] sm:$0xf]
  %v957 = vld [vmem:[%s3 + $0x14] sm:$0xf]
  %v958 = vld [vmem:[%s3 + $0x18] sm:$0xf]
  %v959 = vld [vmem:[%s3 + $0x1c] sm:$0xf]
  %v968 = vunpack.c.l.b16 %v952
  %v969 = vunpack.c.l.b16 %v953
  %v970 = vunpack.c.l.b16 %v954
  %v971 = vunpack.c.l.b16 %v955
  %v972 = vunpack.c.l.b16 %v956
  %v973 = vunpack.c.l.b16 %v957
  %v974 = vunpack.c.l.b16 %v958
  %v975 = vunpack.c.l.b16 %v959
  %v976 = vpack.c.b16 %v969, %v968
  %v977 = vpack.c.b16 %v971, %v970
  %v978 = vpack.c.b16 %v973, %v972
  %v979 = vpack.c.b16 %v975, %v974
  %vm984 = vcmask 523264
  %v986 = vsel %vm984, %v950, 0
  %v989 = vsel %vm984, %v951, 0
  %991 = vmatprep.subr.bf16.mxu0 0
  %992 = vmatpush1.bf16.msra.mxu0 0
  %993 = vmatprep.subr.bf16.mxu0 0
  %994 = vmatpush1.bf16.msra.mxu0 0
  %995 = vmatprep.subr.bf16.mxu0 0
  %996 = vmatpush1.bf16.msra.mxu0 0
  %997 = vmatprep.subr.bf16.mxu0 0
  %998 = vmatpush1.bf16.msra.mxu0 0
  %999 = vmatprep.subr.bf16.mxu0 0
  %1000 = vmatpush1.bf16.msra.mxu0 %v979
  %1001 = vmatprep.subr.bf16.mxu0 0
  %1002 = vmatpush1.bf16.msra.mxu0 %v978
  %1003 = vmatprep.subr.bf16.mxu0 0
  %1004 = vmatpush1.bf16.msra.mxu0 %v977
  %1005 = vmatprep.subr.bf16.mxu0 0
  %1006 = vmatpush1.bf16.msra.mxu0 %v976
  %1007 = vmatprep.subr.bf16.mxu0 0
  %1008 = vmatpush2.bf16.msra.mxu0 0
  %1009 = vmatprep.subr.bf16.mxu0 0
  %1010 = vmatpush2.bf16.msra.mxu0 0
  %1011 = vmatprep.subr.bf16.mxu0 0
  %1012 = vmatpush2.bf16.msra.mxu0 0
  %1013 = vmatprep.subr.bf16.mxu0 0
  %1014 = vmatpush2.bf16.msra.mxu0 0
  %1015 = vmatprep.subr.bf16.mxu0 0
  %1016 = vmatpush2.bf16.msra.mxu0 0
  %1017 = vmatprep.subr.bf16.mxu0 0
  %1018 = vmatpush2.bf16.msra.mxu0 0
  %1019 = vmatprep.subr.bf16.mxu0 0
  %1020 = vmatpush2.bf16.msra.mxu0 0
  %1021 = vmatprep.subr.bf16.mxu0 0
  %1022 = vmatpush2.bf16.msra.mxu0 0
  %1023 = vmatprep.mubr.bf16.mxu0 0
  %1024 = vmatmul.mubr.bf16.gmra.mxu0 %v986
  %v1025 = vpop.f32.mrf.mxu0
  %v1026 = vadd.f32 0.0, %v1025
  %v1027 = vpop.f32.mrf.mxu0
  %v1028 = vpop.f32.mrf.mxu0
  %v1029 = vadd.f32 0.0, %v1028
  %v1030 = vpop.f32.mrf.mxu0
  %1031 = vmatprep.mubr.bf16.mxu0 0
  %1032 = vmatmul.mubr.bf16.gmra.mxu0 %v989
  %v1033 = vpop.f32.mrf.mxu0
  %v1034 = vadd.f32 0.0, %v1033
  %v1035 = vpop.f32.mrf.mxu0
  %v1036 = vpop.f32.mrf.mxu0
  %v1037 = vadd.f32 0.0, %v1036
  %v1038 = vpop.f32.mrf.mxu0
  %1039 = vdwg.mxu0
  %s1040 = scalar_lea.vmem %s3, 32
  %v1041 = vld [vmem:[%s1040] sm:$0xf]
  %v1042 = vld [vmem:[%s1040 + $0x4] sm:$0xf]
  %v1043 = vld [vmem:[%s1040 + $0x8] sm:$0xf]
  %v1044 = vld [vmem:[%s1040 + $0xc] sm:$0xf]
  %v1045 = vld [vmem:[%s1040 + $0x10] sm:$0xf]
  %v1046 = vld [vmem:[%s1040 + $0x14] sm:$0xf]
  %v1047 = vld [vmem:[%s1040 + $0x18] sm:$0xf]
  %v1048 = vld [vmem:[%s1040 + $0x1c] sm:$0xf]
  %s1049 = scalar_lea.vmem %s3, 64
  %v1050 = vld [vmem:[%s1049] sm:$0xf]
  %v1051 = vld [vmem:[%s1049 + $0x4] sm:$0xf]
  %v1052 = vld [vmem:[%s1049 + $0x8] sm:$0xf]
  %v1053 = vld [vmem:[%s1049 + $0xc] sm:$0xf]
  %v1054 = vld [vmem:[%s1049 + $0x10] sm:$0xf]
  %v1055 = vld [vmem:[%s1049 + $0x14] sm:$0xf]
  %v1056 = vld [vmem:[%s1049 + $0x18] sm:$0xf]
  %v1057 = vld [vmem:[%s1049 + $0x1c] sm:$0xf]
  %v1066 = vunpack.c.l.b16 %v1050
  %v1067 = vunpack.c.l.b16 %v1051
  %v1068 = vunpack.c.l.b16 %v1052
  %v1069 = vunpack.c.l.b16 %v1053
  %v1070 = vunpack.c.l.b16 %v1054
  %v1071 = vunpack.c.l.b16 %v1055
  %v1072 = vunpack.c.l.b16 %v1056
  %v1073 = vunpack.c.l.b16 %v1057
  %v1074 = vpack.c.b16 %v1067, %v1066
  %v1075 = vpack.c.b16 %v1069, %v1068
  %v1076 = vpack.c.b16 %v1071, %v1070
  %v1077 = vpack.c.b16 %v1073, %v1072
  %1082 = vmatprep.subr.bf16.mxu0 0
  %1083 = vmatpush1.bf16.msra.mxu0 0
  %1084 = vmatprep.subr.bf16.mxu0 0
  %1085 = vmatpush1.bf16.msra.mxu0 0
  %1086 = vmatprep.subr.bf16.mxu0 0
  %1087 = vmatpush1.bf16.msra.mxu0 0
  %1088 = vmatprep.subr.bf16.mxu0 0
  %1089 = vmatpush1.bf16.msra.mxu0 0
  %1090 = vmatprep.subr.bf16.mxu0 0
  %1091 = vmatpush1.bf16.msra.mxu0 %v1077
  %1092 = vmatprep.subr.bf16.mxu0 0
  %1093 = vmatpush1.bf16.msra.mxu0 %v1076
  %1094 = vmatprep.subr.bf16.mxu0 0
  %1095 = vmatpush1.bf16.msra.mxu0 %v1075
  %1096 = vmatprep.subr.bf16.mxu0 0
  %1097 = vmatpush1.bf16.msra.mxu0 %v1074
  %1098 = vmatprep.subr.bf16.mxu0 0
  %1099 = vmatpush2.bf16.msra.mxu0 0
  %1100 = vmatprep.subr.bf16.mxu0 0
  %1101 = vmatpush2.bf16.msra.mxu0 0
  %1102 = vmatprep.subr.bf16.mxu0 0
  %1103 = vmatpush2.bf16.msra.mxu0 0
  %1104 = vmatprep.subr.bf16.mxu0 0
  %1105 = vmatpush2.bf16.msra.mxu0 0
  %1106 = vmatprep.subr.bf16.mxu0 0
  %1107 = vmatpush2.bf16.msra.mxu0 0
  %1108 = vmatprep.subr.bf16.mxu0 0
  %1109 = vmatpush2.bf16.msra.mxu0 0
  %1110 = vmatprep.subr.bf16.mxu0 0
  %1111 = vmatpush2.bf16.msra.mxu0 0
  %1112 = vmatprep.subr.bf16.mxu0 0
  %1113 = vmatpush2.bf16.msra.mxu0 0
  %1114 = vmatprep.mubr.bf16.mxu0 0
  %1115 = vmatmul.mubr.bf16.gmra.mxu0 %v986
  %v1116 = vpop.f32.mrf.mxu0
  %v1117 = vadd.f32 0.0, %v1116
  %v1118 = vpop.f32.mrf.mxu0
  %v1119 = vpop.f32.mrf.mxu0
  %v1120 = vadd.f32 0.0, %v1119
  %v1121 = vpop.f32.mrf.mxu0
  %1122 = vmatprep.mubr.bf16.mxu0 0
  %1123 = vmatmul.mubr.bf16.gmra.mxu0 %v989
  %v1124 = vpop.f32.mrf.mxu0
  %v1125 = vadd.f32 0.0, %v1124
  %v1126 = vpop.f32.mrf.mxu0
  %v1127 = vpop.f32.mrf.mxu0
  %v1128 = vadd.f32 0.0, %v1127
  %v1129 = vpop.f32.mrf.mxu0
  %1130 = vdwg.mxu0
  %v1131 = vrot.slane %v1026, 7
  %v1132 = vrot.slane %v1029, 7
  %v1133 = vrot.slane %v1034, 7
  %v1134 = vrot.slane %v1037, 7
  %v1135 = vsel %vm679, %v1133, %v1134
  %v1136 = vsel %vm679, %v1132, %v1133
  %v1137 = vsel %vm679, %v1131, %v1132
  %v1138 = vsel %vm679, %v1134, %v1131
  %v1139 = vsel %vm688, %v1138, 0.0
  %v1140 = vsel %vm689, %v1137, 0.0
  %v1141 = vsel %vm690, %v1136, 0.0
  %v1142 = vsel %vm691, %v1135, 0.0
  %v1151 = vunpack.c.l.b16 %v1041
  %v1152 = vunpack.c.l.b16 %v1042
  %v1153 = vunpack.c.l.b16 %v1043
  %v1154 = vunpack.c.l.b16 %v1044
  %v1155 = vunpack.c.l.b16 %v1045
  %v1156 = vunpack.c.l.b16 %v1046
  %v1157 = vunpack.c.l.b16 %v1047
  %v1158 = vunpack.c.l.b16 %v1048
  %v1159 = vpack.c.b16 %v1152, %v1151
  %v1160 = vpack.c.b16 %v1154, %v1153
  %v1161 = vpack.c.b16 %v1156, %v1155
  %v1162 = vpack.c.b16 %v1158, %v1157
  %1167 = vmatprep.subr.bf16.mxu0 0
  %1168 = vmatpush1.bf16.msra.mxu0 0
  %1169 = vmatprep.subr.bf16.mxu0 0
  %1170 = vmatpush1.bf16.msra.mxu0 0
  %1171 = vmatprep.subr.bf16.mxu0 0
  %1172 = vmatpush1.bf16.msra.mxu0 0
  %1173 = vmatprep.subr.bf16.mxu0 0
  %1174 = vmatpush1.bf16.msra.mxu0 0
  %1175 = vmatprep.subr.bf16.mxu0 0
  %1176 = vmatpush1.bf16.msra.mxu0 %v1162
  %1177 = vmatprep.subr.bf16.mxu0 0
  %1178 = vmatpush1.bf16.msra.mxu0 %v1161
  %1179 = vmatprep.subr.bf16.mxu0 0
  %1180 = vmatpush1.bf16.msra.mxu0 %v1160
  %1181 = vmatprep.subr.bf16.mxu0 0
  %1182 = vmatpush1.bf16.msra.mxu0 %v1159
  %1183 = vmatprep.subr.bf16.mxu0 0
  %1184 = vmatpush2.bf16.msra.mxu0 0
  %1185 = vmatprep.subr.bf16.mxu0 0
  %1186 = vmatpush2.bf16.msra.mxu0 0
  %1187 = vmatprep.subr.bf16.mxu0 0
  %1188 = vmatpush2.bf16.msra.mxu0 0
  %1189 = vmatprep.subr.bf16.mxu0 0
  %1190 = vmatpush2.bf16.msra.mxu0 0
  %1191 = vmatprep.subr.bf16.mxu0 0
  %1192 = vmatpush2.bf16.msra.mxu0 0
  %1193 = vmatprep.subr.bf16.mxu0 0
  %1194 = vmatpush2.bf16.msra.mxu0 0
  %1195 = vmatprep.subr.bf16.mxu0 0
  %1196 = vmatpush2.bf16.msra.mxu0 0
  %1197 = vmatprep.subr.bf16.mxu0 0
  %1198 = vmatpush2.bf16.msra.mxu0 0
  %1199 = vmatprep.mubr.bf16.mxu0 0
  %1200 = vmatmul.mubr.bf16.gmra.mxu0 %v986
  %v1201 = vpop.f32.mrf.mxu0
  %v1202 = vadd.f32 %v1139, %v1201
  %v1203 = vpop.f32.mrf.mxu0
  %v1204 = vpop.f32.mrf.mxu0
  %v1205 = vadd.f32 %v1140, %v1204
  %v1206 = vpop.f32.mrf.mxu0
  %1207 = vmatprep.mubr.bf16.mxu0 0
  %1208 = vmatmul.mubr.bf16.gmra.mxu0 %v989
  %v1209 = vpop.f32.mrf.mxu0
  %v1210 = vadd.f32 %v1141, %v1209
  %v1211 = vpop.f32.mrf.mxu0
  %v1212 = vpop.f32.mrf.mxu0
  %v1213 = vadd.f32 %v1142, %v1212
  %v1214 = vpop.f32.mrf.mxu0
  %1215 = vdwg.mxu0
  %v1216 = vrot.slane %v1117, 1
  %v1217 = vrot.slane %v1120, 1
  %v1218 = vrot.slane %v1125, 1
  %v1219 = vrot.slane %v1128, 1
  %v1220 = vsel %vm914, %v1218, %v1219
  %v1221 = vsel %vm914, %v1217, %v1218
  %v1222 = vsel %vm914, %v1216, %v1217
  %v1223 = vsel %vm914, %v1219, %v1216
  %v1224 = vsel %vm923, %v1222, 0.0
  %v1225 = vsel %vm924, %v1221, 0.0
  %v1226 = vsel %vm925, %v1220, 0.0
  %v1227 = vsel %vm926, %v1223, 0.0
  %v1228 = vadd.f32 %v1202, %v1224
  %v1229 = vadd.f32 %v1205, %v1225
  %v1230 = vadd.f32 %v1210, %v1226
  %v1231 = vadd.f32 %v1213, %v1227
  %v1232 = vld [vmem:[%s4] sm:$0x1]
  %v1234 = vlaneseq
  %v1235 = vshrl.u32 %v1234, 7
  %v1236 = vsub.s32 0, %v1235
  %v1237 = vrot.slane %v1232, %v1236
  %v1239 = vadd.f32 %v1228, %v1237
  %v1240 = vadd.f32 %v1229, %v1237
  %v1241 = vadd.f32 %v1230, %v1237
  %v1242 = vadd.f32 %v1231, %v1237
  %v1243 = vmax.f32 %v1239, 0.0
  %v1244 = vmax.f32 %v1240, 0.0
  %v1245 = vmax.f32 %v1241, 0.0
  %v1246 = vmax.f32 %v1242, 0.0
  %v1247 = vld [vmem:[%s5] sm:$0xff]
  %v1248 = vld [vmem:[%s5 + $0x8] sm:$0xff]
  %v1249 = vld [vmem:[%s5 + $0x10] sm:$0xff]
  %v1250 = vld [vmem:[%s5 + $0x18] sm:$0xff]
  %v1251 = vmul.f32 %v1243, %v1247
  %v1252 = vmul.f32 %v1244, %v1248
  %v1253 = vmul.f32 %v1245, %v1249
  %v1254 = vmul.f32 %v1246, %v1250
  %vm1255 = vcmask 261120
  %v1256 = vsel %vm1255, %v1251, 0.0
  %1257 = vadd.xlane.f32.xlu0 %v1256
  %v1258 = vpop.xlane.xlu0 %1257
  %v1259 = vsel %vm1255, %v1252, 0.0
  %1260 = vadd.xlane.f32.xlu0 %v1259
  %v1261 = vpop.xlane.xlu0 %1260
  %v1262 = vsel %vm1255, %v1253, 0.0
  %1263 = vadd.xlane.f32.xlu0 %v1262
  %v1264 = vpop.xlane.xlu0 %1263
  %v1265 = vsel %vm1255, %v1254, 0.0
  %1266 = vadd.xlane.f32.xlu0 %v1265
  %v1267 = vpop.xlane.xlu0 %1266
  %vm1268 = vcmask 7168
  %1269 = vst.msk [vmem:[%s6] sm:$0xff] %vm1268, %v1258
  %1270 = vst.msk [vmem:[%s6 + $0x8] sm:$0xff] %vm1268, %v1261
  %1271 = vst.msk [vmem:[%s6 + $0x10] sm:$0xff] %vm1268, %v1264
  %1272 = vst.msk [vmem:[%s6 + $0x18] sm:$0xff] %vm1268, %v1267
  // Predicated region
  $region26: #{cnn_forward.3} parent=0 // pred_check
    _
  $region27: #{cnn_forward.3} parent=0 // pred_check_branch
    %1274 = sbr.rel (0) target = $region29
  $region28: #{cnn_forward.3} parent=0 // pred_region
    _
  $region29: #{cnn_forward.3} parent=0 // pred_fallthru
    _
  // Predicated region
  $region30: #{cnn_forward.3} parent=0 // pred_check
    _
  $region31: #{cnn_forward.3} parent=0 // pred_check_branch
    %1276 = sbr.rel (0) target = $region33
  $region32: #{cnn_forward.3} parent=0 // pred_region
    _
  $region33: #{cnn_forward.3} parent=0 // pred_fallthru
    _

// kernel: cnn_forward.5
$region0: #{cnn_forward.5}
  #allocation0 [shape = 'u32[]', space=smem, size = 0x4, offset = 0x4, fixed_abs, tag = 'smem constant byte address 0x4 - core index']
  #allocation1 [shape = 'u32[144,128]{1,0:T(1,128)}', space=vmem, size = 0x12000, scoped, tag = 'internal scratch']
  %s0 = inlined_call_operand.vmem [shape: bf16[64,300], index: 0, kind: input, shape index: {}]
  %s1 = inlined_call_operand.vmem [shape: bf16[3,300,64], index: 1, kind: input, shape index: {}]
  %s2 = inlined_call_operand.vmem [shape: f32[1,64], index: 2, kind: input, shape index: {}]
  %s3 = inlined_call_operand.vmem [shape: bf16[3,64,32], index: 3, kind: input, shape index: {}]
  %s4 = inlined_call_operand.vmem [shape: f32[1,32], index: 4, kind: input, shape index: {}]
  %s5 = inlined_call_operand.vmem [shape: f32[64,32], index: 5, kind: input, shape index: {}]
  %s6 = inlined_call_operand.vmem [shape: f32[64,1], index: 6, kind: output, shape index: {}]
  %s7 = sld [smem:[#allocation0]]
  $region34: #{cnn_forward.5} parent=0
    _
  %s9 = ssub.s32 1, %s7
  %s10 = scalar_select 0, %s9, %s7
  // Predicated region
  $region2: #{cnn_forward.5} parent=0 // pred_check
    _
  $region3: #{cnn_forward.5} parent=0 // pred_check_branch
    %12 = sbr.rel (0) target = $region5
  $region4: #{cnn_forward.5} parent=0 // pred_region
    _
  $region5: #{cnn_forward.5} parent=0 // pred_fallthru
    _
  // Predicated region
  $region6: #{cnn_forward.5} parent=0 // pred_check
    _
  $region7: #{cnn_forward.5} parent=0 // pred_check_branch
    %14 = sbr.rel (0) target = $region9
  $region8: #{cnn_forward.5} parent=0 // pred_region
    _
  $region9: #{cnn_forward.5} parent=0 // pred_fallthru
    _
  // Predicated region
  $region10: #{cnn_forward.5} parent=0 // pred_check
    _
  $region11: #{cnn_forward.5} parent=0 // pred_check_branch
    %16 = sbr.rel (0) target = $region13
  $region12: #{cnn_forward.5} parent=0 // pred_region
    _
  $region13: #{cnn_forward.5} parent=0 // pred_fallthru
    _
  // Predicated region
  $region14: #{cnn_forward.5} parent=0 // pred_check
    _
  $region15: #{cnn_forward.5} parent=0 // pred_check_branch
    %18 = sbr.rel (0) target = $region17
  $region16: #{cnn_forward.5} parent=0 // pred_region
    _
  $region17: #{cnn_forward.5} parent=0 // pred_fallthru
    _
  // Predicated region
  $region18: #{cnn_forward.5} parent=0 // pred_check
    _
  $region19: #{cnn_forward.5} parent=0 // pred_check_branch
    %20 = sbr.rel (0) target = $region21
  $region20: #{cnn_forward.5} parent=0 // pred_region
    _
  $region21: #{cnn_forward.5} parent=0 // pred_fallthru
    _
  // Predicated region
  $region22: #{cnn_forward.5} parent=0 // pred_check
    _
  $region23: #{cnn_forward.5} parent=0 // pred_check_branch
    %22 = sbr.rel (0) target = $region25
  $region24: #{cnn_forward.5} parent=0 // pred_region
    _
  $region25: #{cnn_forward.5} parent=0 // pred_fallthru
    _
  %v24 = vlaneseq
  %v25 = vshrl.u32 %v24, 7
  %v26 = vadd.s32 %v25, 8
  %v27 = vadd.s32 %v25, 16
  %v28 = vadd.s32 %v25, 24
  %v29 = vadd.s32 %v25, 32
  %v30 = vadd.s32 %v25, 40
  %v31 = vadd.s32 %v25, 48
  %v32 = vadd.s32 %v25, 56
  %vm33 = vcmp.lt.s32.totalorder %v25, 0
  %v34 = vsub.s32 0, %v25
  %v35 = vsel %vm33, %v34, %v25
  %v36 = vshrl.u32 %v35, 3
  %v37 = vand.u32 %v35, 7
  %v38 = vsub.s32 0, %v37
  %v39 = vsel %vm33, %v38, %v37
  %vm40 = vcmp.lt.s32.totalorder %v26, 0
  %v41 = vsub.s32 0, %v26
  %v42 = vsel %vm40, %v41, %v26
  %v43 = vshrl.u32 %v42, 3
  %v44 = vand.u32 %v42, 7
  %v45 = vsub.s32 0, %v44
  %v46 = vsel %vm40, %v45, %v44
  %vm47 = vcmp.lt.s32.totalorder %v27, 0
  %v48 = vsub.s32 0, %v27
  %v49 = vsel %vm47, %v48, %v27
  %v50 = vshrl.u32 %v49, 3
  %v51 = vand.u32 %v49, 7
  %v52 = vsub.s32 0, %v51
  %v53 = vsel %vm47, %v52, %v51
  %vm54 = vcmp.lt.s32.totalorder %v28, 0
  %v55 = vsub.s32 0, %v28
  %v56 = vsel %vm54, %v55, %v28
  %v57 = vshrl.u32 %v56, 3
  %v58 = vand.u32 %v56, 7
  %v59 = vsub.s32 0, %v58
  %v60 = vsel %vm54, %v59, %v58
  %vm61 = vcmp.lt.s32.totalorder %v29, 0
  %v62 = vsub.s32 0, %v29
  %v63 = vsel %vm61, %v62, %v29
  %v64 = vshrl.u32 %v63, 3
  %v65 = vand.u32 %v63, 7
  %v66 = vsub.s32 0, %v65
  %v67 = vsel %vm61, %v66, %v65
  %vm68 = vcmp.lt.s32.totalorder %v30, 0
  %v69 = vsub.s32 0, %v30
  %v70 = vsel %vm68, %v69, %v30
  %v71 = vshrl.u32 %v70, 3
  %v72 = vand.u32 %v70, 7
  %v73 = vsub.s32 0, %v72
  %v74 = vsel %vm68, %v73, %v72
  %vm75 = vcmp.lt.s32.totalorder %v31, 0
  %v76 = vsub.s32 0, %v31
  %v77 = vsel %vm75, %v76, %v31
  %v78 = vshrl.u32 %v77, 3
  %v79 = vand.u32 %v77, 7
  %v80 = vsub.s32 0, %v79
  %v81 = vsel %vm75, %v80, %v79
  %vm82 = vcmp.lt.s32.totalorder %v32, 0
  %v83 = vsub.s32 0, %v32
  %v84 = vsel %vm82, %v83, %v32
  %v85 = vshrl.u32 %v84, 3
  %v86 = vand.u32 %v84, 7
  %v87 = vsub.s32 0, %v86
  %v88 = vsel %vm82, %v87, %v86
  %vm89 = vcmp.ne.s32.totalorder %v39, 0
  %vm90 = vcmp.ne.s32.totalorder %v46, 0
  %vm91 = vcmp.ne.s32.totalorder %v53, 0
  %vm92 = vcmp.ne.s32.totalorder %v60, 0
  %vm93 = vcmp.ne.s32.totalorder %v67, 0
  %vm94 = vcmp.ne.s32.totalorder %v74, 0
  %vm95 = vcmp.ne.s32.totalorder %v81, 0
  %vm96 = vcmp.ne.s32.totalorder %v88, 0
  %vm97 = vcmp.lt.s32.totalorder %v39, 0
  %vm98 = vcmp.lt.s32.totalorder %v46, 0
  %vm99 = vcmp.lt.s32.totalorder %v53, 0
  %vm100 = vcmp.lt.s32.totalorder %v60, 0
  %vm101 = vcmp.lt.s32.totalorder %v67, 0
  %vm102 = vcmp.lt.s32.totalorder %v74, 0
  %vm103 = vcmp.lt.s32.totalorder %v81, 0
  %vm104 = vcmp.lt.s32.totalorder %v88, 0
  %vm105 = vmand %vm97, %vm89
  %vm106 = vmand %vm98, %vm90
  %vm107 = vmand %vm99, %vm91
  %vm108 = vmand %vm100, %vm92
  %vm109 = vmand %vm101, %vm93
  %vm110 = vmand %vm102, %vm94
  %vm111 = vmand %vm103, %vm95
  %vm112 = vmand %vm104, %vm96
  %v113 = vadd.s32 %v39, 8
  %v114 = vadd.s32 %v46, 8
  %v115 = vadd.s32 %v53, 8
  %v116 = vadd.s32 %v60, 8
  %v117 = vadd.s32 %v67, 8
  %v118 = vadd.s32 %v74, 8
  %v119 = vadd.s32 %v81, 8
  %v120 = vadd.s32 %v88, 8
  %v121 = vsel %vm105, %v113, %v39
  %v122 = vsel %vm106, %v114, %v46
  %v123 = vsel %vm107, %v115, %v53
  %v124 = vsel %vm108, %v116, %v60
  %v125 = vsel %vm109, %v117, %v67
  %v126 = vsel %vm110, %v118, %v74
  %v127 = vsel %vm111, %v119, %v81
  %v128 = vsel %vm112, %v120, %v88
  %vm129 = vcmp.ne.s32.totalorder %v121, 0
  %vm130 = vcmp.ne.s32.totalorder %v122, 0
  %vm131 = vcmp.ne.s32.totalorder %v123, 0
  %vm132 = vcmp.ne.s32.totalorder %v124, 0
  %vm133 = vcmp.ne.s32.totalorder %v125, 0
  %vm134 = vcmp.ne.s32.totalorder %v126, 0
  %vm135 = vcmp.ne.s32.totalorder %v127, 0
  %vm136 = vcmp.ne.s32.totalorder %v128, 0
  %vm137 = vcmp.ne.s32.totalorder %v121, 7
  %vm138 = vcmp.ne.s32.totalorder %v122, 7
  %vm139 = vcmp.ne.s32.totalorder %v123, 7
  %vm140 = vcmp.ne.s32.totalorder %v124, 7
  %vm141 = vcmp.ne.s32.totalorder %v125, 7
  %vm142 = vcmp.ne.s32.totalorder %v126, 7
  %vm143 = vcmp.ne.s32.totalorder %v127, 7
  %vm144 = vcmp.ne.s32.totalorder %v128, 7
  %v145 = vld [vmem:[%s0] sm:$0xff]
  %v146 = vld [vmem:[%s0 + $0x8] sm:$0xf]
  %v147 = vld [vmem:[%s0 + $0xc] sm:$0xff]
  %v148 = vld [vmem:[%s0 + $0x14] sm:$0xf]
  %v149 = vld [vmem:[%s0 + $0x18] sm:$0xff]
  %v150 = vld [vmem:[%s0 + $0x20] sm:$0xf]
  %v151 = vld [vmem:[%s0 + $0x24] sm:$0xff]
  %v152 = vld [vmem:[%s0 + $0x2c] sm:$0xf]
  %v153 = vld [vmem:[%s0 + $0x30] sm:$0xff]
  %v154 = vld [vmem:[%s0 + $0x38] sm:$0xf]
  %v155 = vld [vmem:[%s0 + $0x3c] sm:$0xff]
  %v156 = vld [vmem:[%s0 + $0x44] sm:$0xf]
  %v157 = vld [vmem:[%s0 + $0x48] sm:$0xff]
  %v158 = vld [vmem:[%s0 + $0x50] sm:$0xf]
  %v159 = vld [vmem:[%s0 + $0x54] sm:$0xff]
  %v160 = vld [vmem:[%s0 + $0x5c] sm:$0xf]
  %v161 = vld [vmem:[%s1] sm:$0xf]
  %v162 = vld [vmem:[%s1 + $0x4] sm:$0xf]
  %v163 = vld [vmem:[%s1 + $0x8] sm:$0xf]
  %v164 = vld [vmem:[%s1 + $0xc] sm:$0xf]
  %v165 = vld [vmem:[%s1 + $0x10] sm:$0xf]
  %v166 = vld [vmem:[%s1 + $0x14] sm:$0xf]
  %v167 = vld [vmem:[%s1 + $0x18] sm:$0xf]
  %v168 = vld [vmem:[%s1 + $0x1c] sm:$0xf]
  %v169 = vld [vmem:[%s1 + $0x20] sm:$0xf]
  %v170 = vld [vmem:[%s1 + $0x24] sm:$0xf]
  %v171 = vld [vmem:[%s1 + $0x28] sm:$0xf]
  %v172 = vld [vmem:[%s1 + $0x2c] sm:$0xf]
  %v173 = vld [vmem:[%s1 + $0x30] sm:$0xf]
  %v174 = vld [vmem:[%s1 + $0x34] sm:$0xf]
  %v175 = vld [vmem:[%s1 + $0x38] sm:$0xf]
  %v176 = vld [vmem:[%s1 + $0x3c] sm:$0xf]
  %v177 = vld [vmem:[%s1 + $0x40] sm:$0xf]
  %v178 = vld [vmem:[%s1 + $0x44] sm:$0xf]
  %v179 = vld [vmem:[%s1 + $0x48] sm:$0xf]
  %v180 = vld [vmem:[%s1 + $0x4c] sm:$0xf]
  %v181 = vld [vmem:[%s1 + $0x50] sm:$0xf]
  %v182 = vld [vmem:[%s1 + $0x54] sm:$0xf]
  %v183 = vld [vmem:[%s1 + $0x58] sm:$0xf]
  %v184 = vld [vmem:[%s1 + $0x5c] sm:$0xf]
  %v185 = vld [vmem:[%s1 + $0x60] sm:$0xf]
  %v186 = vld [vmem:[%s1 + $0x64] sm:$0xf]
  %v187 = vld [vmem:[%s1 + $0x68] sm:$0xf]
  %v188 = vld [vmem:[%s1 + $0x6c] sm:$0xf]
  %v189 = vld [vmem:[%s1 + $0x70] sm:$0xf]
  %v190 = vld [vmem:[%s1 + $0x74] sm:$0xf]
  %v191 = vld [vmem:[%s1 + $0x78] sm:$0xf]
  %v192 = vld [vmem:[%s1 + $0x7c] sm:$0xf]
  %v193 = vld [vmem:[%s1 + $0x80] sm:$0xf]
  %v194 = vld [vmem:[%s1 + $0x84] sm:$0xf]
  %v195 = vld [vmem:[%s1 + $0x88] sm:$0xf]
  %v196 = vld [vmem:[%s1 + $0x8c] sm:$0xf]
  %v197 = vld [vmem:[%s1 + $0x90] sm:$0xf]
  %v198 = vld [vmem:[%s1 + $0x94] sm:$0x3]
  %v215 = vunpack.c.l.b16 %v145
  %v216 = vunpack.c.h.b16 %v145
  %v217 = vunpack.c.l.b16 %v146
  %v218 = vunpack.c.l.b16 %v147
  %v219 = vunpack.c.h.b16 %v147
  %v220 = vunpack.c.l.b16 %v148
  %v221 = vunpack.c.l.b16 %v149
  %v222 = vunpack.c.h.b16 %v149
  %v223 = vunpack.c.l.b16 %v150
  %v224 = vunpack.c.l.b16 %v151
  %v225 = vunpack.c.h.b16 %v151
  %v226 = vunpack.c.l.b16 %v152
  %v227 = vunpack.c.l.b16 %v153
  %v228 = vunpack.c.h.b16 %v153
  %v229 = vunpack.c.l.b16 %v154
  %v230 = vunpack.c.l.b16 %v155
  %v231 = vunpack.c.h.b16 %v155
  %v232 = vunpack.c.l.b16 %v156
  %v233 = vunpack.c.l.b16 %v157
  %v234 = vunpack.c.h.b16 %v157
  %v235 = vunpack.c.l.b16 %v158
  %v236 = vunpack.c.l.b16 %v159
  %v237 = vunpack.c.h.b16 %v159
  %v238 = vunpack.c.l.b16 %v160
  %v239 = vpack.c.b16 %v218, %v215
  %v240 = vpack.c.b16 %v219, %v216
  %v241 = vpack.c.b16 %v220, %v217
  %v242 = vpack.c.b16 %v224, %v221
  %v243 = vpack.c.b16 %v225, %v222
  %v244 = vpack.c.b16 %v226, %v223
  %v245 = vpack.c.b16 %v230, %v227
  %v246 = vpack.c.b16 %v231, %v228
  %v247 = vpack.c.b16 %v232, %v229
  %v248 = vpack.c.b16 %v236, %v233
  %v249 = vpack.c.b16 %v237, %v234
  %v250 = vpack.c.b16 %v238, %v235
  %v297 = vunpack.c.l.b16 %v161
  %v298 = vunpack.c.l.b16 %v162
  %v299 = vunpack.c.l.b16 %v163
  %v300 = vunpack.c.l.b16 %v164
  %v301 = vunpack.c.l.b16 %v165
  %v302 = vunpack.c.l.b16 %v166
  %v303 = vunpack.c.l.b16 %v167
  %v304 = vunpack.c.l.b16 %v168
  %v305 = vunpack.c.l.b16 %v169
  %v306 = vunpack.c.l.b16 %v170
  %v307 = vunpack.c.l.b16 %v171
  %v308 = vunpack.c.l.b16 %v172
  %v309 = vunpack.c.l.b16 %v173
  %v310 = vunpack.c.l.b16 %v174
  %v311 = vunpack.c.l.b16 %v175
  %v312 = vunpack.c.l.b16 %v176
  %v313 = vunpack.c.l.b16 %v177
  %v314 = vunpack.c.l.b16 %v178
  %v315 = vunpack.c.l.b16 %v179
  %v316 = vunpack.c.l.b16 %v180
  %v317 = vunpack.c.l.b16 %v181
  %v318 = vunpack.c.l.b16 %v182
  %v319 = vunpack.c.l.b16 %v183
  %v320 = vunpack.c.l.b16 %v184
  %v321 = vunpack.c.l.b16 %v185
  %v322 = vunpack.c.l.b16 %v186
  %v323 = vunpack.c.l.b16 %v187
  %v324 = vunpack.c.l.b16 %v188
  %v325 = vunpack.c.l.b16 %v189
  %v326 = vunpack.c.l.b16 %v190
  %v327 = vunpack.c.l.b16 %v191
  %v328 = vunpack.c.l.b16 %v192
  %v329 = vunpack.c.l.b16 %v193
  %v330 = vunpack.c.l.b16 %v194
  %v331 = vunpack.c.l.b16 %v195
  %v332 = vunpack.c.l.b16 %v196
  %v333 = vunpack.c.l.b16 %v197
  %v334 = vunpack.c.l.b16 %v198
  %v335 = vpack.c.b16 %v298, %v297
  %v336 = vpack.c.b16 %v300, %v299
  %v337 = vpack.c.b16 %v302, %v301
  %v338 = vpack.c.b16 %v304, %v303
  %v339 = vpack.c.b16 %v306, %v305
  %v340 = vpack.c.b16 %v308, %v307
  %v341 = vpack.c.b16 %v310, %v309
  %v342 = vpack.c.b16 %v312, %v311
  %v343 = vpack.c.b16 %v314, %v313
  %v344 = vpack.c.b16 %v316, %v315
  %v345 = vpack.c.b16 %v318, %v317
  %v346 = vpack.c.b16 %v320, %v319
  %v347 = vpack.c.b16 %v322, %v321
  %v348 = vpack.c.b16 %v324, %v323
  %v349 = vpack.c.b16 %v326, %v325
  %v350 = vpack.c.b16 %v328, %v327
  %v351 = vpack.c.b16 %v330, %v329
  %v352 = vpack.c.b16 %v332, %v331
  %v353 = vpack.c.b16 %v334, %v333
  %vm372 = vcmask 359424
  %v374 = vsel %vm372, %v241, 0
  %v377 = vsel %vm372, %v244, 0
  %v380 = vsel %vm372, %v247, 0
  %v383 = vsel %vm372, %v250, 0
  %vm385 = vcmask 1045504
  %v387 = vsel %vm385, %v353, 0
  %389 = vmatprep.subr.bf16.mxu0 0
  %390 = vmatpush1.bf16.msra.mxu0 %v342
  %391 = vmatprep.subr.bf16.mxu0 0
  %392 = vmatpush1.bf16.msra.mxu0 %v341
  %393 = vmatprep.subr.bf16.mxu0 0
  %394 = vmatpush1.bf16.msra.mxu0 %v340
  %395 = vmatprep.subr.bf16.mxu0 0
  %396 = vmatpush1.bf16.msra.mxu0 %v339
  %397 = vmatprep.subr.bf16.mxu0 0
  %398 = vmatpush1.bf16.msra.mxu0 %v338
  %399 = vmatprep.subr.bf16.mxu0 0
  %400 = vmatpush1.bf16.msra.mxu0 %v337
  %401 = vmatprep.subr.bf16.mxu0 0
  %402 = vmatpush1.bf16.msra.mxu0 %v336
  %403 = vmatprep.subr.bf16.mxu0 0
  %404 = vmatpush1.bf16.msra.mxu0 %v335
  %405 = vmatprep.subr.bf16.mxu0 0
  %406 = vmatpush2.bf16.msra.mxu0 %v350
  %407 = vmatprep.subr.bf16.mxu0 0
  %408 = vmatpush2.bf16.msra.mxu0 %v349
  %409 = vmatprep.subr.bf16.mxu0 0
  %410 = vmatpush2.bf16.msra.mxu0 %v348
  %411 = vmatprep.subr.bf16.mxu0 0
  %412 = vmatpush2.bf16.msra.mxu0 %v347
  %413 = vmatprep.subr.bf16.mxu0 0
  %414 = vmatpush2.bf16.msra.mxu0 %v346
  %415 = vmatprep.subr.bf16.mxu0 0
  %416 = vmatpush2.bf16.msra.mxu0 %v345
  %417 = vmatprep.subr.bf16.mxu0 0
  %418 = vmatpush2.bf16.msra.mxu0 %v344
  %419 = vmatprep.subr.bf16.mxu0 0
  %420 = vmatpush2.bf16.msra.mxu0 %v343
  %421 = vmatprep.mubr.bf16.mxu0 %v240
  %422 = vmatmul.mubr.bf16.gmra.mxu0 %v239
  %v423 = vpop.f32.mrf.mxu0
  %v424 = vadd.f32 0.0, %v423
  %v425 = vpop.f32.mrf.mxu0
  %v426 = vpop.f32.mrf.mxu0
  %v427 = vadd.f32 0.0, %v426
  %v428 = vpop.f32.mrf.mxu0
  %429 = vmatprep.mubr.bf16.mxu0 %v243
  %430 = vmatmul.mubr.bf16.gmra.mxu0 %v242
  %v431 = vpop.f32.mrf.mxu0
  %v432 = vadd.f32 0.0, %v431
  %v433 = vpop.f32.mrf.mxu0
  %v434 = vpop.f32.mrf.mxu0
  %v435 = vadd.f32 0.0, %v434
  %v436 = vpop.f32.mrf.mxu0
  %437 = vmatprep.mubr.bf16.mxu0 %v246
  %438 = vmatmul.mubr.bf16.gmra.mxu0 %v245
  %v439 = vpop.f32.mrf.mxu0
  %v440 = vadd.f32 0.0, %v439
  %v441 = vpop.f32.mrf.mxu0
  %v442 = vpop.f32.mrf.mxu0
  %v443 = vadd.f32 0.0, %v442
  %v444 = vpop.f32.mrf.mxu0
  %445 = vmatprep.mubr.bf16.mxu0 %v249
  %446 = vmatmul.mubr.bf16.gmra.mxu0 %v248
  %v447 = vpop.f32.mrf.mxu0
  %v448 = vadd.f32 0.0, %v447
  %v449 = vpop.f32.mrf.mxu0
  %v450 = vpop.f32.mrf.mxu0
  %v451 = vadd.f32 0.0, %v450
  %v452 = vpop.f32.mrf.mxu0
  %453 = vdwg.mxu0
  %454 = vmatprep.subr.bf16.mxu0 0
  %455 = vmatpush1.bf16.msra.mxu0 0
  %456 = vmatprep.subr.bf16.mxu0 0
  %457 = vmatpush1.bf16.msra.mxu0 0
  %458 = vmatprep.subr.bf16.mxu0 0
  %459 = vmatpush1.bf16.msra.mxu0 0
  %460 = vmatprep.subr.bf16.mxu0 0
  %461 = vmatpush1.bf16.msra.mxu0 0
  %462 = vmatprep.subr.bf16.mxu0 0
  %463 = vmatpush1.bf16.msra.mxu0 0
  %464 = vmatprep.subr.bf16.mxu0 0
  %465 = vmatpush1.bf16.msra.mxu0 %v387
  %466 = vmatprep.subr.bf16.mxu0 0
  %467 = vmatpush1.bf16.msra.mxu0 %v352
  %468 = vmatprep.subr.bf16.mxu0 0
  %469 = vmatpush1.bf16.msra.mxu0 %v351
  %470 = vmatprep.subr.bf16.mxu0 0
  %471 = vmatpush2.bf16.msra.mxu0 0
  %472 = vmatprep.subr.bf16.mxu0 0
  %473 = vmatpush2.bf16.msra.mxu0 0
  %474 = vmatprep.subr.bf16.mxu0 0
  %475 = vmatpush2.bf16.msra.mxu0 0
  %476 = vmatprep.subr.bf16.mxu0 0
  %477 = vmatpush2.bf16.msra.mxu0 0
  %478 = vmatprep.subr.bf16.mxu0 0
  %479 = vmatpush2.bf16.msra.mxu0 0
  %480 = vmatprep.subr.bf16.mxu0 0
  %481 = vmatpush2.bf16.msra.mxu0 0
  %482 = vmatprep.subr.bf16.mxu0 0
  %483 = vmatpush2.bf16.msra.mxu0 0
  %484 = vmatprep.subr.bf16.mxu0 0
  %485 = vmatpush2.bf16.msra.mxu0 0
  %486 = vmatprep.mubr.bf16.mxu0 0
  %487 = vmatmul.mubr.bf16.gmra.mxu0 %v374
  %v488 = vpop.f32.mrf.mxu0
  %v489 = vadd.f32 %v424, %v488
  %v490 = vpop.f32.mrf.mxu0
  %v491 = vpop.f32.mrf.mxu0
  %v492 = vadd.f32 %v427, %v491
  %v493 = vpop.f32.mrf.mxu0
  %494 = vmatprep.mubr.bf16.mxu0 0
  %495 = vmatmul.mubr.bf16.gmra.mxu0 %v377
  %v496 = vpop.f32.mrf.mxu0
  %v497 = vadd.f32 %v432, %v496
  %v498 = vpop.f32.mrf.mxu0
  %v499 = vpop.f32.mrf.mxu0
  %v500 = vadd.f32 %v435, %v499
  %v501 = vpop.f32.mrf.mxu0
  %502 = vmatprep.mubr.bf16.mxu0 0
  %503 = vmatmul.mubr.bf16.gmra.mxu0 %v380
  %v504 = vpop.f32.mrf.mxu0
  %v505 = vadd.f32 %v440, %v504
  %v506 = vpop.f32.mrf.mxu0
  %v507 = vpop.f32.mrf.mxu0
  %v508 = vadd.f32 %v443, %v507
  %v509 = vpop.f32.mrf.mxu0
  %510 = vmatprep.mubr.bf16.mxu0 0
  %511 = vmatmul.mubr.bf16.gmra.mxu0 %v383
  %v512 = vpop.f32.mrf.mxu0
  %v513 = vadd.f32 %v448, %v512
  %v514 = vpop.f32.mrf.mxu0
  %v515 = vpop.f32.mrf.mxu0
  %v516 = vadd.f32 %v451, %v515
  %v517 = vpop.f32.mrf.mxu0
  %518 = vdwg.mxu0
  %s519 = scalar_lea.vmem %s1, 152
  %v520 = vld [vmem:[%s519] sm:$0xf]
  %v521 = vld [vmem:[%s519 + $0x4] sm:$0xf]
  %v522 = vld [vmem:[%s519 + $0x8] sm:$0xf]
  %v523 = vld [vmem:[%s519 + $0xc] sm:$0xf]
  %v524 = vld [vmem:[%s519 + $0x10] sm:$0xf]
  %v525 = vld [vmem:[%s519 + $0x14] sm:$0xf]
  %v526 = vld [vmem:[%s519 + $0x18] sm:$0xf]
  %v527 = vld [vmem:[%s519 + $0x1c] sm:$0xf]
  %v528 = vld [vmem:[%s519 + $0x20] sm:$0xf]
  %v529 = vld [vmem:[%s519 + $0x24] sm:$0xf]
  %v530 = vld [vmem:[%s519 + $0x28] sm:$0xf]
  %v531 = vld [vmem:[%s519 + $0x2c] sm:$0xf]
  %v532 = vld [vmem:[%s519 + $0x30] sm:$0xf]
  %v533 = vld [vmem:[%s519 + $0x34] sm:$0xf]
  %v534 = vld [vmem:[%s519 + $0x38] sm:$0xf]
  %v535 = vld [vmem:[%s519 + $0x3c] sm:$0xf]
  %v536 = vld [vmem:[%s519 + $0x40] sm:$0xf]
  %v537 = vld [vmem:[%s519 + $0x44] sm:$0xf]
  %v538 = vld [vmem:[%s519 + $0x48] sm:$0xf]
  %v539 = vld [vmem:[%s519 + $0x4c] sm:$0xf]
  %v540 = vld [vmem:[%s519 + $0x50] sm:$0xf]
  %v541 = vld [vmem:[%s519 + $0x54] sm:$0xf]
  %v542 = vld [vmem:[%s519 + $0x58] sm:$0xf]
  %v543 = vld [vmem:[%s519 + $0x5c] sm:$0xf]
  %v544 = vld [vmem:[%s519 + $0x60] sm:$0xf]
  %v545 = vld [vmem:[%s519 + $0x64] sm:$0xf]
  %v546 = vld [vmem:[%s519 + $0x68] sm:$0xf]
  %v547 = vld [vmem:[%s519 + $0x6c] sm:$0xf]
  %v548 = vld [vmem:[%s519 + $0x70] sm:$0xf]
  %v549 = vld [vmem:[%s519 + $0x74] sm:$0xf]
  %v550 = vld [vmem:[%s519 + $0x78] sm:$0xf]
  %v551 = vld [vmem:[%s519 + $0x7c] sm:$0xf]
  %v552 = vld [vmem:[%s519 + $0x80] sm:$0xf]
  %v553 = vld [vmem:[%s519 + $0x84] sm:$0xf]
  %v554 = vld [vmem:[%s519 + $0x88] sm:$0xf]
  %v555 = vld [vmem:[%s519 + $0x8c] sm:$0xf]
  %v556 = vld [vmem:[%s519 + $0x90] sm:$0xf]
  %v557 = vld [vmem:[%s519 + $0x94] sm:$0x3]
  %s558 = scalar_lea.vmem %s1, 304
  %v559 = vld [vmem:[%s558] sm:$0xf]
  %v560 = vld [vmem:[%s558 + $0x4] sm:$0xf]
  %v561 = vld [vmem:[%s558 + $0x8] sm:$0xf]
  %v562 = vld [vmem:[%s558 + $0xc] sm:$0xf]
  %v563 = vld [vmem:[%s558 + $0x10] sm:$0xf]
  %v564 = vld [vmem:[%s558 + $0x14] sm:$0xf]
  %v565 = vld [vmem:[%s558 + $0x18] sm:$0xf]
  %v566 = vld [vmem:[%s558 + $0x1c] sm:$0xf]
  %v567 = vld [vmem:[%s558 + $0x20] sm:$0xf]
  %v568 = vld [vmem:[%s558 + $0x24] sm:$0xf]
  %v569 = vld [vmem:[%s558 + $0x28] sm:$0xf]
  %v570 = vld [vmem:[%s558 + $0x2c] sm:$0xf]
  %v571 = vld [vmem:[%s558 + $0x30] sm:$0xf]
  %v572 = vld [vmem:[%s558 + $0x34] sm:$0xf]
  %v573 = vld [vmem:[%s558 + $0x38] sm:$0xf]
  %v574 = vld [vmem:[%s558 + $0x3c] sm:$0xf]
  %v575 = vld [vmem:[%s558 + $0x40] sm:$0xf]
  %v576 = vld [vmem:[%s558 + $0x44] sm:$0xf]
  %v577 = vld [vmem:[%s558 + $0x48] sm:$0xf]
  %v578 = vld [vmem:[%s558 + $0x4c] sm:$0xf]
  %v579 = vld [vmem:[%s558 + $0x50] sm:$0xf]
  %v580 = vld [vmem:[%s558 + $0x54] sm:$0xf]
  %v581 = vld [vmem:[%s558 + $0x58] sm:$0xf]
  %v582 = vld [vmem:[%s558 + $0x5c] sm:$0xf]
  %v583 = vld [vmem:[%s558 + $0x60] sm:$0xf]
  %v584 = vld [vmem:[%s558 + $0x64] sm:$0xf]
  %v585 = vld [vmem:[%s558 + $0x68] sm:$0xf]
  %v586 = vld [vmem:[%s558 + $0x6c] sm:$0xf]
  %v587 = vld [vmem:[%s558 + $0x70] sm:$0xf]
  %v588 = vld [vmem:[%s558 + $0x74] sm:$0xf]
  %v589 = vld [vmem:[%s558 + $0x78] sm:$0xf]
  %v590 = vld [vmem:[%s558 + $0x7c] sm:$0xf]
  %v591 = vld [vmem:[%s558 + $0x80] sm:$0xf]
  %v592 = vld [vmem:[%s558 + $0x84] sm:$0xf]
  %v593 = vld [vmem:[%s558 + $0x88] sm:$0xf]
  %v594 = vld [vmem:[%s558 + $0x8c] sm:$0xf]
  %v595 = vld [vmem:[%s558 + $0x90] sm:$0xf]
  %v596 = vld [vmem:[%s558 + $0x94] sm:$0x3]
  %v635 = vunpack.c.l.b16 %v559
  %v636 = vunpack.c.l.b16 %v560
  %v637 = vunpack.c.l.b16 %v561
  %v638 = vunpack.c.l.b16 %v562
  %v639 = vunpack.c.l.b16 %v563
  %v640 = vunpack.c.l.b16 %v564
  %v641 = vunpack.c.l.b16 %v565
  %v642 = vunpack.c.l.b16 %v566
  %v643 = vunpack.c.l.b16 %v567
  %v644 = vunpack.c.l.b16 %v568
  %v645 = vunpack.c.l.b16 %v569
  %v646 = vunpack.c.l.b16 %v570
  %v647 = vunpack.c.l.b16 %v571
  %v648 = vunpack.c.l.b16 %v572
  %v649 = vunpack.c.l.b16 %v573
  %v650 = vunpack.c.l.b16 %v574
  %v651 = vunpack.c.l.b16 %v575
  %v652 = vunpack.c.l.b16 %v576
  %v653 = vunpack.c.l.b16 %v577
  %v654 = vunpack.c.l.b16 %v578
  %v655 = vunpack.c.l.b16 %v579
  %v656 = vunpack.c.l.b16 %v580
  %v657 = vunpack.c.l.b16 %v581
  %v658 = vunpack.c.l.b16 %v582
  %v659 = vunpack.c.l.b16 %v583
  %v660 = vunpack.c.l.b16 %v584
  %v661 = vunpack.c.l.b16 %v585
  %v662 = vunpack.c.l.b16 %v586
  %v663 = vunpack.c.l.b16 %v587
  %v664 = vunpack.c.l.b16 %v588
  %v665 = vunpack.c.l.b16 %v589
  %v666 = vunpack.c.l.b16 %v590
  %v667 = vunpack.c.l.b16 %v591
  %v668 = vunpack.c.l.b16 %v592
  %v669 = vunpack.c.l.b16 %v593
  %v670 = vunpack.c.l.b16 %v594
  %v671 = vunpack.c.l.b16 %v595
  %v672 = vunpack.c.l.b16 %v596
  %v673 = vpack.c.b16 %v636, %v635
  %v674 = vpack.c.b16 %v638, %v637
  %v675 = vpack.c.b16 %v640, %v639
  %v676 = vpack.c.b16 %v642, %v641
  %v677 = vpack.c.b16 %v644, %v643
  %v678 = vpack.c.b16 %v646, %v645
  %v679 = vpack.c.b16 %v648, %v647
  %v680 = vpack.c.b16 %v650, %v649
  %v681 = vpack.c.b16 %v652, %v651
  %v682 = vpack.c.b16 %v654, %v653
  %v683 = vpack.c.b16 %v656, %v655
  %v684 = vpack.c.b16 %v658, %v657
  %v685 = vpack.c.b16 %v660, %v659
  %v686 = vpack.c.b16 %v662, %v661
  %v687 = vpack.c.b16 %v664, %v663
  %v688 = vpack.c.b16 %v666, %v665
  %v689 = vpack.c.b16 %v668, %v667
  %v690 = vpack.c.b16 %v670, %v669
  %v691 = vpack.c.b16 %v672, %v671
  %v711 = vsel %vm385, %v691, 0
  %713 = vmatprep.subr.bf16.mxu0 0
  %714 = vmatpush1.bf16.msra.mxu0 %v680
  %715 = vmatprep.subr.bf16.mxu0 0
  %716 = vmatpush1.bf16.msra.mxu0 %v679
  %717 = vmatprep.subr.bf16.mxu0 0
  %718 = vmatpush1.bf16.msra.mxu0 %v678
  %719 = vmatprep.subr.bf16.mxu0 0
  %720 = vmatpush1.bf16.msra.mxu0 %v677
  %721 = vmatprep.subr.bf16.mxu0 0
  %722 = vmatpush1.bf16.msra.mxu0 %v676
  %723 = vmatprep.subr.bf16.mxu0 0
  %724 = vmatpush1.bf16.msra.mxu0 %v675
  %725 = vmatprep.subr.bf16.mxu0 0
  %726 = vmatpush1.bf16.msra.mxu0 %v674
  %727 = vmatprep.subr.bf16.mxu0 0
  %728 = vmatpush1.bf16.msra.mxu0 %v673
  %729 = vmatprep.subr.bf16.mxu0 0
  %730 = vmatpush2.bf16.msra.mxu0 %v688
  %731 = vmatprep.subr.bf16.mxu0 0
  %732 = vmatpush2.bf16.msra.mxu0 %v687
  %733 = vmatprep.subr.bf16.mxu0 0
  %734 = vmatpush2.bf16.msra.mxu0 %v686
  %735 = vmatprep.subr.bf16.mxu0 0
  %736 = vmatpush2.bf16.msra.mxu0 %v685
  %737 = vmatprep.subr.bf16.mxu0 0
  %738 = vmatpush2.bf16.msra.mxu0 %v684
  %739 = vmatprep.subr.bf16.mxu0 0
  %740 = vmatpush2.bf16.msra.mxu0 %v683
  %741 = vmatprep.subr.bf16.mxu0 0
  %742 = vmatpush2.bf16.msra.mxu0 %v682
  %743 = vmatprep.subr.bf16.mxu0 0
  %744 = vmatpush2.bf16.msra.mxu0 %v681
  %745 = vmatprep.mubr.bf16.mxu0 %v240
  %746 = vmatmul.mubr.bf16.gmra.mxu0 %v239
  %v747 = vpop.f32.mrf.mxu0
  %v748 = vadd.f32 0.0, %v747
  %v749 = vpop.f32.mrf.mxu0
  %v750 = vpop.f32.mrf.mxu0
  %v751 = vadd.f32 0.0, %v750
  %v752 = vpop.f32.mrf.mxu0
  %753 = vmatprep.mubr.bf16.mxu0 %v243
  %754 = vmatmul.mubr.bf16.gmra.mxu0 %v242
  %v755 = vpop.f32.mrf.mxu0
  %v756 = vadd.f32 0.0, %v755
  %v757 = vpop.f32.mrf.mxu0
  %v758 = vpop.f32.mrf.mxu0
  %v759 = vadd.f32 0.0, %v758
  %v760 = vpop.f32.mrf.mxu0
  %761 = vmatprep.mubr.bf16.mxu0 %v246
  %762 = vmatmul.mubr.bf16.gmra.mxu0 %v245
  %v763 = vpop.f32.mrf.mxu0
  %v764 = vadd.f32 0.0, %v763
  %v765 = vpop.f32.mrf.mxu0
  %v766 = vpop.f32.mrf.mxu0
  %v767 = vadd.f32 0.0, %v766
  %v768 = vpop.f32.mrf.mxu0
  %769 = vmatprep.mubr.bf16.mxu0 %v249
  %770 = vmatmul.mubr.bf16.gmra.mxu0 %v248
  %v771 = vpop.f32.mrf.mxu0
  %v772 = vadd.f32 0.0, %v771
  %v773 = vpop.f32.mrf.mxu0
  %v774 = vpop.f32.mrf.mxu0
  %v775 = vadd.f32 0.0, %v774
  %v776 = vpop.f32.mrf.mxu0
  %777 = vdwg.mxu0
  %778 = vmatprep.subr.bf16.mxu0 0
  %779 = vmatpush1.bf16.msra.mxu0 0
  %780 = vmatprep.subr.bf16.mxu0 0
  %781 = vmatpush1.bf16.msra.mxu0 0
  %782 = vmatprep.subr.bf16.mxu0 0
  %783 = vmatpush1.bf16.msra.mxu0 0
  %784 = vmatprep.subr.bf16.mxu0 0
  %785 = vmatpush1.bf16.msra.mxu0 0
  %786 = vmatprep.subr.bf16.mxu0 0
  %787 = vmatpush1.bf16.msra.mxu0 0
  %788 = vmatprep.subr.bf16.mxu0 0
  %789 = vmatpush1.bf16.msra.mxu0 %v711
  %790 = vmatprep.subr.bf16.mxu0 0
  %791 = vmatpush1.bf16.msra.mxu0 %v690
  %792 = vmatprep.subr.bf16.mxu0 0
  %793 = vmatpush1.bf16.msra.mxu0 %v689
  %794 = vmatprep.subr.bf16.mxu0 0
  %795 = vmatpush2.bf16.msra.mxu0 0
  %796 = vmatprep.subr.bf16.mxu0 0
  %797 = vmatpush2.bf16.msra.mxu0 0
  %798 = vmatprep.subr.bf16.mxu0 0
  %799 = vmatpush2.bf16.msra.mxu0 0
  %800 = vmatprep.subr.bf16.mxu0 0
  %801 = vmatpush2.bf16.msra.mxu0 0
  %802 = vmatprep.subr.bf16.mxu0 0
  %803 = vmatpush2.bf16.msra.mxu0 0
  %804 = vmatprep.subr.bf16.mxu0 0
  %805 = vmatpush2.bf16.msra.mxu0 0
  %806 = vmatprep.subr.bf16.mxu0 0
  %807 = vmatpush2.bf16.msra.mxu0 0
  %808 = vmatprep.subr.bf16.mxu0 0
  %809 = vmatpush2.bf16.msra.mxu0 0
  %810 = vmatprep.mubr.bf16.mxu0 0
  %811 = vmatmul.mubr.bf16.gmra.mxu0 %v374
  %v812 = vpop.f32.mrf.mxu0
  %v813 = vadd.f32 %v748, %v812
  %v814 = vpop.f32.mrf.mxu0
  %v815 = vpop.f32.mrf.mxu0
  %v816 = vadd.f32 %v751, %v815
  %v817 = vpop.f32.mrf.mxu0
  %818 = vmatprep.mubr.bf16.mxu0 0
  %819 = vmatmul.mubr.bf16.gmra.mxu0 %v377
  %v820 = vpop.f32.mrf.mxu0
  %v821 = vadd.f32 %v756, %v820
  %v822 = vpop.f32.mrf.mxu0
  %v823 = vpop.f32.mrf.mxu0
  %v824 = vadd.f32 %v759, %v823
  %v825 = vpop.f32.mrf.mxu0
  %826 = vmatprep.mubr.bf16.mxu0 0
  %827 = vmatmul.mubr.bf16.gmra.mxu0 %v380
  %v828 = vpop.f32.mrf.mxu0
  %v829 = vadd.f32 %v764, %v828
  %v830 = vpop.f32.mrf.mxu0
  %v831 = vpop.f32.mrf.mxu0
  %v832 = vadd.f32 %v767, %v831
  %v833 = vpop.f32.mrf.mxu0
  %834 = vmatprep.mubr.bf16.mxu0 0
  %835 = vmatmul.mubr.bf16.gmra.mxu0 %v383
  %v836 = vpop.f32.mrf.mxu0
  %v837 = vadd.f32 %v772, %v836
  %v838 = vpop.f32.mrf.mxu0
  %v839 = vpop.f32.mrf.mxu0
  %v840 = vadd.f32 %v775, %v839
  %v841 = vpop.f32.mrf.mxu0
  %842 = vdwg.mxu0
  %v843 = vrot.slane %v489, 7
  %v844 = vrot.slane %v492, 7
  %v845 = vrot.slane %v497, 7
  %v846 = vrot.slane %v500, 7
  %v847 = vrot.slane %v505, 7
  %v848 = vrot.slane %v508, 7
  %v849 = vrot.slane %v513, 7
  %v850 = vrot.slane %v516, 7
  %vm851 = vcmp.lt.s32.totalorder %v25, 1
  %v852 = vsel %vm851, %v849, %v850
  %v853 = vsel %vm851, %v848, %v849
  %v854 = vsel %vm851, %v847, %v848
  %v855 = vsel %vm851, %v846, %v847
  %v856 = vsel %vm851, %v845, %v846
  %v857 = vsel %vm851, %v844, %v845
  %v858 = vsel %vm851, %v843, %v844
  %v859 = vsel %vm851, %v850, %v843
  %v860 = vsel %vm129, 1, 0
  %v861 = vsel %vm130, 1, 0
  %v862 = vsel %vm131, 1, 0
  %v863 = vsel %vm132, 1, 0
  %v864 = vsel %vm133, 1, 0
  %v865 = vsel %vm134, 1, 0
  %v866 = vsel %vm135, 1, 0
  %v867 = vsel %vm136, 1, 0
  %vm868 = vcmp.eq.s32.totalorder %v860, 1
  %vm869 = vcmp.eq.s32.totalorder %v861, 1
  %vm870 = vcmp.eq.s32.totalorder %v862, 1
  %vm871 = vcmp.eq.s32.totalorder %v863, 1
  %vm872 = vcmp.eq.s32.totalorder %v864, 1
  %vm873 = vcmp.eq.s32.totalorder %v865, 1
  %vm874 = vcmp.eq.s32.totalorder %v866, 1
  %vm875 = vcmp.eq.s32.totalorder %v867, 1
  %v876 = vsel %vm868, %v859, 0.0
  %v877 = vsel %vm869, %v858, 0.0
  %v878 = vsel %vm870, %v857, 0.0
  %v879 = vsel %vm871, %v856, 0.0
  %v880 = vsel %vm872, %v855, 0.0
  %v881 = vsel %vm873, %v854, 0.0
  %v882 = vsel %vm874, %v853, 0.0
  %v883 = vsel %vm875, %v852, 0.0
  %v922 = vunpack.c.l.b16 %v520
  %v923 = vunpack.c.l.b16 %v521
  %v924 = vunpack.c.l.b16 %v522
  %v925 = vunpack.c.l.b16 %v523
  %v926 = vunpack.c.l.b16 %v524
  %v927 = vunpack.c.l.b16 %v525
  %v928 = vunpack.c.l.b16 %v526
  %v929 = vunpack.c.l.b16 %v527
  %v930 = vunpack.c.l.b16 %v528
  %v931 = vunpack.c.l.b16 %v529
  %v932 = vunpack.c.l.b16 %v530
  %v933 = vunpack.c.l.b16 %v531
  %v934 = vunpack.c.l.b16 %v532
  %v935 = vunpack.c.l.b16 %v533
  %v936 = vunpack.c.l.b16 %v534
  %v937 = vunpack.c.l.b16 %v535
  %v938 = vunpack.c.l.b16 %v536
  %v939 = vunpack.c.l.b16 %v537
  %v940 = vunpack.c.l.b16 %v538
  %v941 = vunpack.c.l.b16 %v539
  %v942 = vunpack.c.l.b16 %v540
  %v943 = vunpack.c.l.b16 %v541
  %v944 = vunpack.c.l.b16 %v542
  %v945 = vunpack.c.l.b16 %v543
  %v946 = vunpack.c.l.b16 %v544
  %v947 = vunpack.c.l.b16 %v545
  %v948 = vunpack.c.l.b16 %v546
  %v949 = vunpack.c.l.b16 %v547
  %v950 = vunpack.c.l.b16 %v548
  %v951 = vunpack.c.l.b16 %v549
  %v952 = vunpack.c.l.b16 %v550
  %v953 = vunpack.c.l.b16 %v551
  %v954 = vunpack.c.l.b16 %v552
  %v955 = vunpack.c.l.b16 %v553
  %v956 = vunpack.c.l.b16 %v554
  %v957 = vunpack.c.l.b16 %v555
  %v958 = vunpack.c.l.b16 %v556
  %v959 = vunpack.c.l.b16 %v557
  %v960 = vpack.c.b16 %v923, %v922
  %v961 = vpack.c.b16 %v925, %v924
  %v962 = vpack.c.b16 %v927, %v926
  %v963 = vpack.c.b16 %v929, %v928
  %v964 = vpack.c.b16 %v931, %v930
  %v965 = vpack.c.b16 %v933, %v932
  %v966 = vpack.c.b16 %v935, %v934
  %v967 = vpack.c.b16 %v937, %v936
  %v968 = vpack.c.b16 %v939, %v938
  %v969 = vpack.c.b16 %v941, %v940
  %v970 = vpack.c.b16 %v943, %v942
  %v971 = vpack.c.b16 %v945, %v944
  %v972 = vpack.c.b16 %v947, %v946
  %v973 = vpack.c.b16 %v949, %v948
  %v974 = vpack.c.b16 %v951, %v950
  %v975 = vpack.c.b16 %v953, %v952
  %v976 = vpack.c.b16 %v955, %v954
  %v977 = vpack.c.b16 %v957, %v956
  %v978 = vpack.c.b16 %v959, %v958
  %v998 = vsel %vm385, %v978, 0
  %1000 = vmatprep.subr.bf16.mxu0 0
  %1001 = vmatpush1.bf16.msra.mxu0 %v967
  %1002 = vmatprep.subr.bf16.mxu0 0
  %1003 = vmatpush1.bf16.msra.mxu0 %v966
  %1004 = vmatprep.subr.bf16.mxu0 0
  %1005 = vmatpush1.bf16.msra.mxu0 %v965
  %1006 = vmatprep.subr.bf16.mxu0 0
  %1007 = vmatpush1.bf16.msra.mxu0 %v964
  %1008 = vmatprep.subr.bf16.mxu0 0
  %1009 = vmatpush1.bf16.msra.mxu0 %v963
  %1010 = vmatprep.subr.bf16.mxu0 0
  %1011 = vmatpush1.bf16.msra.mxu0 %v962
  %1012 = vmatprep.subr.bf16.mxu0 0
  %1013 = vmatpush1.bf16.msra.mxu0 %v961
  %1014 = vmatprep.subr.bf16.mxu0 0
  %1015 = vmatpush1.bf16.msra.mxu0 %v960
  %1016 = vmatprep.subr.bf16.mxu0 0
  %1017 = vmatpush2.bf16.msra.mxu0 %v975
  %1018 = vmatprep.subr.bf16.mxu0 0
  %1019 = vmatpush2.bf16.msra.mxu0 %v974
  %1020 = vmatprep.subr.bf16.mxu0 0
  %1021 = vmatpush2.bf16.msra.mxu0 %v973
  %1022 = vmatprep.subr.bf16.mxu0 0
  %1023 = vmatpush2.bf16.msra.mxu0 %v972
  %1024 = vmatprep.subr.bf16.mxu0 0
  %1025 = vmatpush2.bf16.msra.mxu0 %v971
  %1026 = vmatprep.subr.bf16.mxu0 0
  %1027 = vmatpush2.bf16.msra.mxu0 %v970
  %1028 = vmatprep.subr.bf16.mxu0 0
  %1029 = vmatpush2.bf16.msra.mxu0 %v969
  %1030 = vmatprep.subr.bf16.mxu0 0
  %1031 = vmatpush2.bf16.msra.mxu0 %v968
  %1032 = vmatprep.mubr.bf16.mxu0 %v240
  %1033 = vmatmul.mubr.bf16.gmra.mxu0 %v239
  %v1034 = vpop.f32.mrf.mxu0
  %v1035 = vadd.f32 %v876, %v1034
  %v1036 = vpop.f32.mrf.mxu0
  %v1037 = vpop.f32.mrf.mxu0
  %v1038 = vadd.f32 %v877, %v1037
  %v1039 = vpop.f32.mrf.mxu0
  %1040 = vmatprep.mubr.bf16.mxu0 %v243
  %1041 = vmatmul.mubr.bf16.gmra.mxu0 %v242
  %v1042 = vpop.f32.mrf.mxu0
  %v1043 = vadd.f32 %v878, %v1042
  %v1044 = vpop.f32.mrf.mxu0
  %v1045 = vpop.f32.mrf.mxu0
  %v1046 = vadd.f32 %v879, %v1045
  %v1047 = vpop.f32.mrf.mxu0
  %1048 = vmatprep.mubr.bf16.mxu0 %v246
  %1049 = vmatmul.mubr.bf16.gmra.mxu0 %v245
  %v1050 = vpop.f32.mrf.mxu0
  %v1051 = vadd.f32 %v880, %v1050
  %v1052 = vpop.f32.mrf.mxu0
  %v1053 = vpop.f32.mrf.mxu0
  %v1054 = vadd.f32 %v881, %v1053
  %v1055 = vpop.f32.mrf.mxu0
  %1056 = vmatprep.mubr.bf16.mxu0 %v249
  %1057 = vmatmul.mubr.bf16.gmra.mxu0 %v248
  %v1058 = vpop.f32.mrf.mxu0
  %v1059 = vadd.f32 %v882, %v1058
  %v1060 = vpop.f32.mrf.mxu0
  %v1061 = vpop.f32.mrf.mxu0
  %v1062 = vadd.f32 %v883, %v1061
  %v1063 = vpop.f32.mrf.mxu0
  %1064 = vdwg.mxu0
  %1065 = vmatprep.subr.bf16.mxu0 0
  %1066 = vmatpush1.bf16.msra.mxu0 0
  %1067 = vmatprep.subr.bf16.mxu0 0
  %1068 = vmatpush1.bf16.msra.mxu0 0
  %1069 = vmatprep.subr.bf16.mxu0 0
  %1070 = vmatpush1.bf16.msra.mxu0 0
  %1071 = vmatprep.subr.bf16.mxu0 0
  %1072 = vmatpush1.bf16.msra.mxu0 0
  %1073 = vmatprep.subr.bf16.mxu0 0
  %1074 = vmatpush1.bf16.msra.mxu0 0
  %1075 = vmatprep.subr.bf16.mxu0 0
  %1076 = vmatpush1.bf16.msra.mxu0 %v998
  %1077 = vmatprep.subr.bf16.mxu0 0
  %1078 = vmatpush1.bf16.msra.mxu0 %v977
  %1079 = vmatprep.subr.bf16.mxu0 0
  %1080 = vmatpush1.bf16.msra.mxu0 %v976
  %1081 = vmatprep.subr.bf16.mxu0 0
  %1082 = vmatpush2.bf16.msra.mxu0 0
  %1083 = vmatprep.subr.bf16.mxu0 0
  %1084 = vmatpush2.bf16.msra.mxu0 0
  %1085 = vmatprep.subr.bf16.mxu0 0
  %1086 = vmatpush2.bf16.msra.mxu0 0
  %1087 = vmatprep.subr.bf16.mxu0 0
  %1088 = vmatpush2.bf16.msra.mxu0 0
  %1089 = vmatprep.subr.bf16.mxu0 0
  %1090 = vmatpush2.bf16.msra.mxu0 0
  %1091 = vmatprep.subr.bf16.mxu0 0
  %1092 = vmatpush2.bf16.msra.mxu0 0
  %1093 = vmatprep.subr.bf16.mxu0 0
  %1094 = vmatpush2.bf16.msra.mxu0 0
  %1095 = vmatprep.subr.bf16.mxu0 0
  %1096 = vmatpush2.bf16.msra.mxu0 0
  %1097 = vmatprep.mubr.bf16.mxu0 0
  %1098 = vmatmul.mubr.bf16.gmra.mxu0 %v374
  %v1099 = vpop.f32.mrf.mxu0
  %v1100 = vadd.f32 %v1035, %v1099
  %v1101 = vpop.f32.mrf.mxu0
  %v1102 = vpop.f32.mrf.mxu0
  %v1103 = vadd.f32 %v1038, %v1102
  %v1104 = vpop.f32.mrf.mxu0
  %1105 = vmatprep.mubr.bf16.mxu0 0
  %1106 = vmatmul.mubr.bf16.gmra.mxu0 %v377
  %v1107 = vpop.f32.mrf.mxu0
  %v1108 = vadd.f32 %v1043, %v1107
  %v1109 = vpop.f32.mrf.mxu0
  %v1110 = vpop.f32.mrf.mxu0
  %v1111 = vadd.f32 %v1046, %v1110
  %v1112 = vpop.f32.mrf.mxu0
  %1113 = vmatprep.mubr.bf16.mxu0 0
  %1114 = vmatmul.mubr.bf16.gmra.mxu0 %v380
  %v1115 = vpop.f32.mrf.mxu0
  %v1116 = vadd.f32 %v1051, %v1115
  %v1117 = vpop.f32.mrf.mxu0
  %v1118 = vpop.f32.mrf.mxu0
  %v1119 = vadd.f32 %v1054, %v1118
  %v1120 = vpop.f32.mrf.mxu0
  %1121 = vmatprep.mubr.bf16.mxu0 0
  %1122 = vmatmul.mubr.bf16.gmra.mxu0 %v383
  %v1123 = vpop.f32.mrf.mxu0
  %v1124 = vadd.f32 %v1059, %v1123
  %v1125 = vpop.f32.mrf.mxu0
  %v1126 = vpop.f32.mrf.mxu0
  %v1127 = vadd.f32 %v1062, %v1126
  %v1128 = vpop.f32.mrf.mxu0
  %1129 = vdwg.mxu0
  %v1130 = vrot.slane %v813, 1
  %v1131 = vrot.slane %v816, 1
  %v1132 = vrot.slane %v821, 1
  %v1133 = vrot.slane %v824, 1
  %v1134 = vrot.slane %v829, 1
  %v1135 = vrot.slane %v832, 1
  %v1136 = vrot.slane %v837, 1
  %v1137 = vrot.slane %v840, 1
  %vm1138 = vcmp.lt.s32.totalorder %v25, 7
  %v1139 = vsel %vm1138, %v1136, %v1137
  %v1140 = vsel %vm1138, %v1135, %v1136
  %v1141 = vsel %vm1138, %v1134, %v1135
  %v1142 = vsel %vm1138, %v1133, %v1134
  %v1143 = vsel %vm1138, %v1132, %v1133
  %v1144 = vsel %vm1138, %v1131, %v1132
  %v1145 = vsel %vm1138, %v1130, %v1131
  %v1146 = vsel %vm1138, %v1137, %v1130
  %v1147 = vsel %vm137, 1, 0
  %v1148 = vsel %vm138, 1, 0
  %v1149 = vsel %vm139, 1, 0
  %v1150 = vsel %vm140, 1, 0
  %v1151 = vsel %vm141, 1, 0
  %v1152 = vsel %vm142, 1, 0
  %v1153 = vsel %vm143, 1, 0
  %v1154 = vsel %vm144, 1, 0
  %vm1155 = vcmp.eq.s32.totalorder %v1147, 1
  %vm1156 = vcmp.eq.s32.totalorder %v1148, 1
  %vm1157 = vcmp.eq.s32.totalorder %v1149, 1
  %vm1158 = vcmp.eq.s32.totalorder %v1150, 1
  %vm1159 = vcmp.eq.s32.totalorder %v1151, 1
  %vm1160 = vcmp.eq.s32.totalorder %v1152, 1
  %vm1161 = vcmp.eq.s32.totalorder %v1153, 1
  %vm1162 = vcmp.eq.s32.totalorder %v1154, 1
  %v1163 = vsel %vm1155, %v1145, 0.0
  %v1164 = vsel %vm1156, %v1144, 0.0
  %v1165 = vsel %vm1157, %v1143, 0.0
  %v1166 = vsel %vm1158, %v1142, 0.0
  %v1167 = vsel %vm1159, %v1141, 0.0
  %v1168 = vsel %vm1160, %v1140, 0.0
  %v1169 = vsel %vm1161, %v1139, 0.0
  %v1170 = vsel %vm1162, %v1146, 0.0
  %v1171 = vadd.f32 %v1100, %v1163
  %v1172 = vadd.f32 %v1103, %v1164
  %v1173 = vadd.f32 %v1108, %v1165
  %v1174 = vadd.f32 %v1111, %v1166
  %v1175 = vadd.f32 %v1116, %v1167
  %v1176 = vadd.f32 %v1119, %v1168
  %v1177 = vadd.f32 %v1124, %v1169
  %v1178 = vadd.f32 %v1127, %v1170
  %v1179 = vld [vmem:[%s2] sm:$0x1]
  %v1181 = vlaneseq
  %v1182 = vshrl.u32 %v1181, 7
  %v1183 = vsub.s32 0, %v1182
  %v1184 = vrot.slane %v1179, %v1183
  %v1186 = vadd.f32 %v1171, %v1184
  %v1187 = vadd.f32 %v1172, %v1184
  %v1188 = vadd.f32 %v1173, %v1184
  %v1189 = vadd.f32 %v1174, %v1184
  %v1190 = vadd.f32 %v1175, %v1184
  %v1191 = vadd.f32 %v1176, %v1184
  %v1192 = vadd.f32 %v1177, %v1184
  %v1193 = vadd.f32 %v1178, %v1184
  %v1194 = vmax.f32 %v1186, 0.0
  %v1195 = vmax.f32 %v1187, 0.0
  %v1196 = vmax.f32 %v1188, 0.0
  %v1197 = vmax.f32 %v1189, 0.0
  %v1198 = vmax.f32 %v1190, 0.0
  %v1199 = vmax.f32 %v1191, 0.0
  %v1200 = vmax.f32 %v1192, 0.0
  %v1201 = vmax.f32 %v1193, 0.0
  %v1202 = vpack.c.bf16 %v1195, %v1194
  %v1203 = vpack.c.bf16 %v1197, %v1196
  %v1204 = vpack.c.bf16 %v1199, %v1198
  %v1205 = vpack.c.bf16 %v1201, %v1200
  %v1206 = vld [vmem:[%s3] sm:$0xf]
  %v1207 = vld [vmem:[%s3 + $0x4] sm:$0xf]
  %v1208 = vld [vmem:[%s3 + $0x8] sm:$0xf]
  %v1209 = vld [vmem:[%s3 + $0xc] sm:$0xf]
  %v1210 = vld [vmem:[%s3 + $0x10] sm:$0xf]
  %v1211 = vld [vmem:[%s3 + $0x14] sm:$0xf]
  %v1212 = vld [vmem:[%s3 + $0x18] sm:$0xf]
  %v1213 = vld [vmem:[%s3 + $0x1c] sm:$0xf]
  %v1222 = vunpack.c.l.b16 %v1206
  %v1223 = vunpack.c.l.b16 %v1207
  %v1224 = vunpack.c.l.b16 %v1208
  %v1225 = vunpack.c.l.b16 %v1209
  %v1226 = vunpack.c.l.b16 %v1210
  %v1227 = vunpack.c.l.b16 %v1211
  %v1228 = vunpack.c.l.b16 %v1212
  %v1229 = vunpack.c.l.b16 %v1213
  %v1230 = vpack.c.b16 %v1223, %v1222
  %v1231 = vpack.c.b16 %v1225, %v1224
  %v1232 = vpack.c.b16 %v1227, %v1226
  %v1233 = vpack.c.b16 %v1229, %v1228
  %vm1238 = vcmask 523264
  %v1240 = vsel %vm1238, %v1202, 0
  %v1243 = vsel %vm1238, %v1203, 0
  %v1246 = vsel %vm1238, %v1204, 0
  %v1249 = vsel %vm1238, %v1205, 0
  %1251 = vmatprep.subr.bf16.mxu0 0
  %1252 = vmatpush1.bf16.msra.mxu0 0
  %1253 = vmatprep.subr.bf16.mxu0 0
  %1254 = vmatpush1.bf16.msra.mxu0 0
  %1255 = vmatprep.subr.bf16.mxu0 0
  %1256 = vmatpush1.bf16.msra.mxu0 0
  %1257 = vmatprep.subr.bf16.mxu0 0
  %1258 = vmatpush1.bf16.msra.mxu0 0
  %1259 = vmatprep.subr.bf16.mxu0 0
  %1260 = vmatpush1.bf16.msra.mxu0 %v1233
  %1261 = vmatprep.subr.bf16.mxu0 0
  %1262 = vmatpush1.bf16.msra.mxu0 %v1232
  %1263 = vmatprep.subr.bf16.mxu0 0
  %1264 = vmatpush1.bf16.msra.mxu0 %v1231
  %1265 = vmatprep.subr.bf16.mxu0 0
  %1266 = vmatpush1.bf16.msra.mxu0 %v1230
  %1267 = vmatprep.subr.bf16.mxu0 0
  %1268 = vmatpush2.bf16.msra.mxu0 0
  %1269 = vmatprep.subr.bf16.mxu0 0
  %1270 = vmatpush2.bf16.msra.mxu0 0
  %1271 = vmatprep.subr.bf16.mxu0 0
  %1272 = vmatpush2.bf16.msra.mxu0 0
  %1273 = vmatprep.subr.bf16.mxu0 0
  %1274 = vmatpush2.bf16.msra.mxu0 0
  %1275 = vmatprep.subr.bf16.mxu0 0
  %1276 = vmatpush2.bf16.msra.mxu0 0
  %1277 = vmatprep.subr.bf16.mxu0 0
  %1278 = vmatpush2.bf16.msra.mxu0 0
  %1279 = vmatprep.subr.bf16.mxu0 0
  %1280 = vmatpush2.bf16.msra.mxu0 0
  %1281 = vmatprep.subr.bf16.mxu0 0
  %1282 = vmatpush2.bf16.msra.mxu0 0
  %1283 = vmatprep.mubr.bf16.mxu0 0
  %1284 = vmatmul.mubr.bf16.gmra.mxu0 %v1240
  %v1285 = vpop.f32.mrf.mxu0
  %v1286 = vadd.f32 0.0, %v1285
  %v1287 = vpop.f32.mrf.mxu0
  %v1288 = vpop.f32.mrf.mxu0
  %v1289 = vadd.f32 0.0, %v1288
  %v1290 = vpop.f32.mrf.mxu0
  %1291 = vmatprep.mubr.bf16.mxu0 0
  %1292 = vmatmul.mubr.bf16.gmra.mxu0 %v1243
  %v1293 = vpop.f32.mrf.mxu0
  %v1294 = vadd.f32 0.0, %v1293
  %v1295 = vpop.f32.mrf.mxu0
  %v1296 = vpop.f32.mrf.mxu0
  %v1297 = vadd.f32 0.0, %v1296
  %v1298 = vpop.f32.mrf.mxu0
  %1299 = vmatprep.mubr.bf16.mxu0 0
  %1300 = vmatmul.mubr.bf16.gmra.mxu0 %v1246
  %v1301 = vpop.f32.mrf.mxu0
  %v1302 = vadd.f32 0.0, %v1301
  %v1303 = vpop.f32.mrf.mxu0
  %v1304 = vpop.f32.mrf.mxu0
  %v1305 = vadd.f32 0.0, %v1304
  %v1306 = vpop.f32.mrf.mxu0
  %1307 = vmatprep.mubr.bf16.mxu0 0
  %1308 = vmatmul.mubr.bf16.gmra.mxu0 %v1249
  %v1309 = vpop.f32.mrf.mxu0
  %v1310 = vadd.f32 0.0, %v1309
  %v1311 = vpop.f32.mrf.mxu0
  %v1312 = vpop.f32.mrf.mxu0
  %v1313 = vadd.f32 0.0, %v1312
  %v1314 = vpop.f32.mrf.mxu0
  %1315 = vdwg.mxu0
  %s1316 = scalar_lea.vmem %s3, 32
  %v1317 = vld [vmem:[%s1316] sm:$0xf]
  %v1318 = vld [vmem:[%s1316 + $0x4] sm:$0xf]
  %v1319 = vld [vmem:[%s1316 + $0x8] sm:$0xf]
  %v1320 = vld [vmem:[%s1316 + $0xc] sm:$0xf]
  %v1321 = vld [vmem:[%s1316 + $0x10] sm:$0xf]
  %v1322 = vld [vmem:[%s1316 + $0x14] sm:$0xf]
  %v1323 = vld [vmem:[%s1316 + $0x18] sm:$0xf]
  %v1324 = vld [vmem:[%s1316 + $0x1c] sm:$0xf]
  %s1325 = scalar_lea.vmem %s3, 64
  %v1326 = vld [vmem:[%s1325] sm:$0xf]
  %v1327 = vld [vmem:[%s1325 + $0x4] sm:$0xf]
  %v1328 = vld [vmem:[%s1325 + $0x8] sm:$0xf]
  %v1329 = vld [vmem:[%s1325 + $0xc] sm:$0xf]
  %v1330 = vld [vmem:[%s1325 + $0x10] sm:$0xf]
  %v1331 = vld [vmem:[%s1325 + $0x14] sm:$0xf]
  %v1332 = vld [vmem:[%s1325 + $0x18] sm:$0xf]
  %v1333 = vld [vmem:[%s1325 + $0x1c] sm:$0xf]
  %v1342 = vunpack.c.l.b16 %v1326
  %v1343 = vunpack.c.l.b16 %v1327
  %v1344 = vunpack.c.l.b16 %v1328
  %v1345 = vunpack.c.l.b16 %v1329
  %v1346 = vunpack.c.l.b16 %v1330
  %v1347 = vunpack.c.l.b16 %v1331
  %v1348 = vunpack.c.l.b16 %v1332
  %v1349 = vunpack.c.l.b16 %v1333
  %v1350 = vpack.c.b16 %v1343, %v1342
  %v1351 = vpack.c.b16 %v1345, %v1344
  %v1352 = vpack.c.b16 %v1347, %v1346
  %v1353 = vpack.c.b16 %v1349, %v1348
  %1358 = vmatprep.subr.bf16.mxu0 0
  %1359 = vmatpush1.bf16.msra.mxu0 0
  %1360 = vmatprep.subr.bf16.mxu0 0
  %1361 = vmatpush1.bf16.msra.mxu0 0
  %1362 = vmatprep.subr.bf16.mxu0 0
  %1363 = vmatpush1.bf16.msra.mxu0 0
  %1364 = vmatprep.subr.bf16.mxu0 0
  %1365 = vmatpush1.bf16.msra.mxu0 0
  %1366 = vmatprep.subr.bf16.mxu0 0
  %1367 = vmatpush1.bf16.msra.mxu0 %v1353
  %1368 = vmatprep.subr.bf16.mxu0 0
  %1369 = vmatpush1.bf16.msra.mxu0 %v1352
  %1370 = vmatprep.subr.bf16.mxu0 0
  %1371 = vmatpush1.bf16.msra.mxu0 %v1351
  %1372 = vmatprep.subr.bf16.mxu0 0
  %1373 = vmatpush1.bf16.msra.mxu0 %v1350
  %1374 = vmatprep.subr.bf16.mxu0 0
  %1375 = vmatpush2.bf16.msra.mxu0 0
  %1376 = vmatprep.subr.bf16.mxu0 0
  %1377 = vmatpush2.bf16.msra.mxu0 0
  %1378 = vmatprep.subr.bf16.mxu0 0
  %1379 = vmatpush2.bf16.msra.mxu0 0
  %1380 = vmatprep.subr.bf16.mxu0 0
  %1381 = vmatpush2.bf16.msra.mxu0 0
  %1382 = vmatprep.subr.bf16.mxu0 0
  %1383 = vmatpush2.bf16.msra.mxu0 0
  %1384 = vmatprep.subr.bf16.mxu0 0
  %1385 = vmatpush2.bf16.msra.mxu0 0
  %1386 = vmatprep.subr.bf16.mxu0 0
  %1387 = vmatpush2.bf16.msra.mxu0 0
  %1388 = vmatprep.subr.bf16.mxu0 0
  %1389 = vmatpush2.bf16.msra.mxu0 0
  %1390 = vmatprep.mubr.bf16.mxu0 0
  %1391 = vmatmul.mubr.bf16.gmra.mxu0 %v1240
  %v1392 = vpop.f32.mrf.mxu0
  %v1393 = vadd.f32 0.0, %v1392
  %v1394 = vpop.f32.mrf.mxu0
  %v1395 = vpop.f32.mrf.mxu0
  %v1396 = vadd.f32 0.0, %v1395
  %v1397 = vpop.f32.mrf.mxu0
  %1398 = vmatprep.mubr.bf16.mxu0 0
  %1399 = vmatmul.mubr.bf16.gmra.mxu0 %v1243
  %v1400 = vpop.f32.mrf.mxu0
  %v1401 = vadd.f32 0.0, %v1400
  %v1402 = vpop.f32.mrf.mxu0
  %v1403 = vpop.f32.mrf.mxu0
  %v1404 = vadd.f32 0.0, %v1403
  %v1405 = vpop.f32.mrf.mxu0
  %1406 = vmatprep.mubr.bf16.mxu0 0
  %1407 = vmatmul.mubr.bf16.gmra.mxu0 %v1246
  %v1408 = vpop.f32.mrf.mxu0
  %v1409 = vadd.f32 0.0, %v1408
  %v1410 = vpop.f32.mrf.mxu0
  %v1411 = vpop.f32.mrf.mxu0
  %v1412 = vadd.f32 0.0, %v1411
  %v1413 = vpop.f32.mrf.mxu0
  %1414 = vmatprep.mubr.bf16.mxu0 0
  %1415 = vmatmul.mubr.bf16.gmra.mxu0 %v1249
  %v1416 = vpop.f32.mrf.mxu0
  %v1417 = vadd.f32 0.0, %v1416
  %v1418 = vpop.f32.mrf.mxu0
  %v1419 = vpop.f32.mrf.mxu0
  %v1420 = vadd.f32 0.0, %v1419
  %v1421 = vpop.f32.mrf.mxu0
  %1422 = vdwg.mxu0
  %v1423 = vrot.slane %v1286, 7
  %v1424 = vrot.slane %v1289, 7
  %v1425 = vrot.slane %v1294, 7
  %v1426 = vrot.slane %v1297, 7
  %v1427 = vrot.slane %v1302, 7
  %v1428 = vrot.slane %v1305, 7
  %v1429 = vrot.slane %v1310, 7
  %v1430 = vrot.slane %v1313, 7
  %v1431 = vsel %vm851, %v1429, %v1430
  %v1432 = vsel %vm851, %v1428, %v1429
  %v1433 = vsel %vm851, %v1427, %v1428
  %v1434 = vsel %vm851, %v1426, %v1427
  %v1435 = vsel %vm851, %v1425, %v1426
  %v1436 = vsel %vm851, %v1424, %v1425
  %v1437 = vsel %vm851, %v1423, %v1424
  %v1438 = vsel %vm851, %v1430, %v1423
  %v1439 = vsel %vm868, %v1438, 0.0
  %v1440 = vsel %vm869, %v1437, 0.0
  %v1441 = vsel %vm870, %v1436, 0.0
  %v1442 = vsel %vm871, %v1435, 0.0
  %v1443 = vsel %vm872, %v1434, 0.0
  %v1444 = vsel %vm873, %v1433, 0.0
  %v1445 = vsel %vm874, %v1432, 0.0
  %v1446 = vsel %vm875, %v1431, 0.0
  %v1455 = vunpack.c.l.b16 %v1317
  %v1456 = vunpack.c.l.b16 %v1318
  %v1457 = vunpack.c.l.b16 %v1319
  %v1458 = vunpack.c.l.b16 %v1320
  %v1459 = vunpack.c.l.b16 %v1321
  %v1460 = vunpack.c.l.b16 %v1322
  %v1461 = vunpack.c.l.b16 %v1323
  %v1462 = vunpack.c.l.b16 %v1324
  %v1463 = vpack.c.b16 %v1456, %v1455
  %v1464 = vpack.c.b16 %v1458, %v1457
  %v1465 = vpack.c.b16 %v1460, %v1459
  %v1466 = vpack.c.b16 %v1462, %v1461
  %1471 = vmatprep.subr.bf16.mxu0 0
  %1472 = vmatpush1.bf16.msra.mxu0 0
  %1473 = vmatprep.subr.bf16.mxu0 0
  %1474 = vmatpush1.bf16.msra.mxu0 0
  %1475 = vmatprep.subr.bf16.mxu0 0
  %1476 = vmatpush1.bf16.msra.mxu0 0
  %1477 = vmatprep.subr.bf16.mxu0 0
  %1478 = vmatpush1.bf16.msra.mxu0 0
  %1479 = vmatprep.subr.bf16.mxu0 0
  %1480 = vmatpush1.bf16.msra.mxu0 %v1466
  %1481 = vmatprep.subr.bf16.mxu0 0
  %1482 = vmatpush1.bf16.msra.mxu0 %v1465
  %1483 = vmatprep.subr.bf16.mxu0 0
  %1484 = vmatpush1.bf16.msra.mxu0 %v1464
  %1485 = vmatprep.subr.bf16.mxu0 0
  %1486 = vmatpush1.bf16.msra.mxu0 %v1463
  %1487 = vmatprep.subr.bf16.mxu0 0
  %1488 = vmatpush2.bf16.msra.mxu0 0
  %1489 = vmatprep.subr.bf16.mxu0 0
  %1490 = vmatpush2.bf16.msra.mxu0 0
  %1491 = vmatprep.subr.bf16.mxu0 0
  %1492 = vmatpush2.bf16.msra.mxu0 0
  %1493 = vmatprep.subr.bf16.mxu0 0
  %1494 = vmatpush2.bf16.msra.mxu0 0
  %1495 = vmatprep.subr.bf16.mxu0 0
  %1496 = vmatpush2.bf16.msra.mxu0 0
  %1497 = vmatprep.subr.bf16.mxu0 0
  %1498 = vmatpush2.bf16.msra.mxu0 0
  %1499 = vmatprep.subr.bf16.mxu0 0
  %1500 = vmatpush2.bf16.msra.mxu0 0
  %1501 = vmatprep.subr.bf16.mxu0 0
  %1502 = vmatpush2.bf16.msra.mxu0 0
  %1503 = vmatprep.mubr.bf16.mxu0 0
  %1504 = vmatmul.mubr.bf16.gmra.mxu0 %v1240
  %v1505 = vpop.f32.mrf.mxu0
  %v1506 = vadd.f32 %v1439, %v1505
  %v1507 = vpop.f32.mrf.mxu0
  %v1508 = vpop.f32.mrf.mxu0
  %v1509 = vadd.f32 %v1440, %v1508
  %v1510 = vpop.f32.mrf.mxu0
  %1511 = vmatprep.mubr.bf16.mxu0 0
  %1512 = vmatmul.mubr.bf16.gmra.mxu0 %v1243
  %v1513 = vpop.f32.mrf.mxu0
  %v1514 = vadd.f32 %v1441, %v1513
  %v1515 = vpop.f32.mrf.mxu0
  %v1516 = vpop.f32.mrf.mxu0
  %v1517 = vadd.f32 %v1442, %v1516
  %v1518 = vpop.f32.mrf.mxu0
  %1519 = vmatprep.mubr.bf16.mxu0 0
  %1520 = vmatmul.mubr.bf16.gmra.mxu0 %v1246
  %v1521 = vpop.f32.mrf.mxu0
  %v1522 = vadd.f32 %v1443, %v1521
  %v1523 = vpop.f32.mrf.mxu0
  %v1524 = vpop.f32.mrf.mxu0
  %v1525 = vadd.f32 %v1444, %v1524
  %v1526 = vpop.f32.mrf.mxu0
  %1527 = vmatprep.mubr.bf16.mxu0 0
  %1528 = vmatmul.mubr.bf16.gmra.mxu0 %v1249
  %v1529 = vpop.f32.mrf.mxu0
  %v1530 = vadd.f32 %v1445, %v1529
  %v1531 = vpop.f32.mrf.mxu0
  %v1532 = vpop.f32.mrf.mxu0
  %v1533 = vadd.f32 %v1446, %v1532
  %v1534 = vpop.f32.mrf.mxu0
  %1535 = vdwg.mxu0
  %v1536 = vrot.slane %v1393, 1
  %v1537 = vrot.slane %v1396, 1
  %v1538 = vrot.slane %v1401, 1
  %v1539 = vrot.slane %v1404, 1
  %v1540 = vrot.slane %v1409, 1
  %v1541 = vrot.slane %v1412, 1
  %v1542 = vrot.slane %v1417, 1
  %v1543 = vrot.slane %v1420, 1
  %v1544 = vsel %vm1138, %v1542, %v1543
  %v1545 = vsel %vm1138, %v1541, %v1542
  %v1546 = vsel %vm1138, %v1540, %v1541
  %v1547 = vsel %vm1138, %v1539, %v1540
  %v1548 = vsel %vm1138, %v1538, %v1539
  %v1549 = vsel %vm1138, %v1537, %v1538
  %v1550 = vsel %vm1138, %v1536, %v1537
  %v1551 = vsel %vm1138, %v1543, %v1536
  %v1552 = vsel %vm1155, %v1550, 0.0
  %v1553 = vsel %vm1156, %v1549, 0.0
  %v1554 = vsel %vm1157, %v1548, 0.0
  %v1555 = vsel %vm1158, %v1547, 0.0
  %v1556 = vsel %vm1159, %v1546, 0.0
  %v1557 = vsel %vm1160, %v1545, 0.0
  %v1558 = vsel %vm1161, %v1544, 0.0
  %v1559 = vsel %vm1162, %v1551, 0.0
  %v1560 = vadd.f32 %v1506, %v1552
  %v1561 = vadd.f32 %v1509, %v1553
  %v1562 = vadd.f32 %v1514, %v1554
  %v1563 = vadd.f32 %v1517, %v1555
  %v1564 = vadd.f32 %v1522, %v1556
  %v1565 = vadd.f32 %v1525, %v1557
  %v1566 = vadd.f32 %v1530, %v1558
  %v1567 = vadd.f32 %v1533, %v1559
  %v1568 = vld [vmem:[%s4] sm:$0x1]
  %v1570 = vlaneseq
  %v1571 = vshrl.u32 %v1570, 7
  %v1572 = vsub.s32 0, %v1571
  %v1573 = vrot.slane %v1568, %v1572
  %v1575 = vadd.f32 %v1560, %v1573
  %v1576 = vadd.f32 %v1561, %v1573
  %v1577 = vadd.f32 %v1562, %v1573
  %v1578 = vadd.f32 %v1563, %v1573
  %v1579 = vadd.f32 %v1564, %v1573
  %v1580 = vadd.f32 %v1565, %v1573
  %v1581 = vadd.f32 %v1566, %v1573
  %v1582 = vadd.f32 %v1567, %v1573
  %v1583 = vmax.f32 %v1575, 0.0
  %v1584 = vmax.f32 %v1576, 0.0
  %v1585 = vmax.f32 %v1577, 0.0
  %v1586 = vmax.f32 %v1578, 0.0
  %v1587 = vmax.f32 %v1579, 0.0
  %v1588 = vmax.f32 %v1580, 0.0
  %v1589 = vmax.f32 %v1581, 0.0
  %v1590 = vmax.f32 %v1582, 0.0
  %v1591 = vld [vmem:[%s5] sm:$0xff]
  %v1592 = vld [vmem:[%s5 + $0x8] sm:$0xff]
  %v1593 = vld [vmem:[%s5 + $0x10] sm:$0xff]
  %v1594 = vld [vmem:[%s5 + $0x18] sm:$0xff]
  %v1595 = vld [vmem:[%s5 + $0x20] sm:$0xff]
  %v1596 = vld [vmem:[%s5 + $0x28] sm:$0xff]
  %v1597 = vld [vmem:[%s5 + $0x30] sm:$0xff]
  %v1598 = vld [vmem:[%s5 + $0x38] sm:$0xff]
  %v1599 = vmul.f32 %v1583, %v1591
  %v1600 = vmul.f32 %v1584, %v1592
  %v1601 = vmul.f32 %v1585, %v1593
  %v1602 = vmul.f32 %v1586, %v1594
  %v1603 = vmul.f32 %v1587, %v1595
  %v1604 = vmul.f32 %v1588, %v1596
  %v1605 = vmul.f32 %v1589, %v1597
  %v1606 = vmul.f32 %v1590, %v1598
  %vm1607 = vcmask 261120
  %v1608 = vsel %vm1607, %v1599, 0.0
  %1609 = vadd.xlane.f32.xlu0 %v1608
  %v1610 = vpop.xlane.xlu0 %1609
  %v1611 = vsel %vm1607, %v1600, 0.0
  %1612 = vadd.xlane.f32.xlu0 %v1611
  %v1613 = vpop.xlane.xlu0 %1612
  %v1614 = vsel %vm1607, %v1601, 0.0
  %1615 = vadd.xlane.f32.xlu0 %v1614
  %v1616 = vpop.xlane.xlu0 %1615
  %v1617 = vsel %vm1607, %v1602, 0.0
  %1618 = vadd.xlane.f32.xlu0 %v1617
  %v1619 = vpop.xlane.xlu0 %1618
  %v1620 = vsel %vm1607, %v1603, 0.0
  %1621 = vadd.xlane.f32.xlu0 %v1620
  %v1622 = vpop.xlane.xlu0 %1621
  %v1623 = vsel %vm1607, %v1604, 0.0
  %1624 = vadd.xlane.f32.xlu0 %v1623
  %v1625 = vpop.xlane.xlu0 %1624
  %v1626 = vsel %vm1607, %v1605, 0.0
  %1627 = vadd.xlane.f32.xlu0 %v1626
  %v1628 = vpop.xlane.xlu0 %1627
  %v1629 = vsel %vm1607, %v1606, 0.0
  %1630 = vadd.xlane.f32.xlu0 %v1629
  %v1631 = vpop.xlane.xlu0 %1630
  %vm1632 = vcmask 7168
  %1633 = vst.msk [vmem:[%s6] sm:$0xff] %vm1632, %v1610
  %1634 = vst.msk [vmem:[%s6 + $0x8] sm:$0xff] %vm1632, %v1613
  %1635 = vst.msk [vmem:[%s6 + $0x10] sm:$0xff] %vm1632, %v1616
  %1636 = vst.msk [vmem:[%s6 + $0x18] sm:$0xff] %vm1632, %v1619
  %1637 = vst.msk [vmem:[%s6 + $0x20] sm:$0xff] %vm1632, %v1622
  %1638 = vst.msk [vmem:[%s6 + $0x28] sm:$0xff] %vm1632, %v1625
  %1639 = vst.msk [vmem:[%s6 + $0x30] sm:$0xff] %vm1632, %v1628
  %1640 = vst.msk [vmem:[%s6 + $0x38] sm:$0xff] %vm1632, %v1631
  // Predicated region
  $region26: #{cnn_forward.5} parent=0 // pred_check
    _
  $region27: #{cnn_forward.5} parent=0 // pred_check_branch
    %1642 = sbr.rel (0) target = $region29
  $region28: #{cnn_forward.5} parent=0 // pred_region
    _
  $region29: #{cnn_forward.5} parent=0 // pred_fallthru
    _
  // Predicated region
  $region30: #{cnn_forward.5} parent=0 // pred_check
    _
  $region31: #{cnn_forward.5} parent=0 // pred_check_branch
    %1644 = sbr.rel (0) target = $region33
  $region32: #{cnn_forward.5} parent=0 // pred_region
    _
  $region33: #{cnn_forward.5} parent=0 // pred_fallthru
    _

// kernel: cnn_forward.4
$region0: #{cnn_forward.4}
  #allocation0 [shape = 'u32[]', space=smem, size = 0x4, offset = 0x4, fixed_abs, tag = 'smem constant byte address 0x4 - core index']
  #allocation1 [shape = 'u32[144,128]{1,0:T(1,128)}', space=vmem, size = 0x12000, scoped, tag = 'internal scratch']
  %s0 = inlined_call_operand.vmem [shape: bf16[16,300], index: 0, kind: input, shape index: {}]
  %s1 = inlined_call_operand.vmem [shape: bf16[3,300,64], index: 1, kind: input, shape index: {}]
  %s2 = inlined_call_operand.vmem [shape: f32[1,64], index: 2, kind: input, shape index: {}]
  %s3 = inlined_call_operand.vmem [shape: bf16[3,64,32], index: 3, kind: input, shape index: {}]
  %s4 = inlined_call_operand.vmem [shape: f32[1,32], index: 4, kind: input, shape index: {}]
  %s5 = inlined_call_operand.vmem [shape: f32[16,32], index: 5, kind: input, shape index: {}]
  %s6 = inlined_call_operand.vmem [shape: f32[16,1], index: 6, kind: output, shape index: {}]
  %s7 = sld [smem:[#allocation0]]
  $region34: #{cnn_forward.4} parent=0
    _
  %s9 = ssub.s32 1, %s7
  %s10 = scalar_select 0, %s9, %s7
  // Predicated region
  $region2: #{cnn_forward.4} parent=0 // pred_check
    _
  $region3: #{cnn_forward.4} parent=0 // pred_check_branch
    %12 = sbr.rel (0) target = $region5
  $region4: #{cnn_forward.4} parent=0 // pred_region
    _
  $region5: #{cnn_forward.4} parent=0 // pred_fallthru
    _
  // Predicated region
  $region6: #{cnn_forward.4} parent=0 // pred_check
    _
  $region7: #{cnn_forward.4} parent=0 // pred_check_branch
    %14 = sbr.rel (0) target = $region9
  $region8: #{cnn_forward.4} parent=0 // pred_region
    _
  $region9: #{cnn_forward.4} parent=0 // pred_fallthru
    _
  // Predicated region
  $region10: #{cnn_forward.4} parent=0 // pred_check
    _
  $region11: #{cnn_forward.4} parent=0 // pred_check_branch
    %16 = sbr.rel (0) target = $region13
  $region12: #{cnn_forward.4} parent=0 // pred_region
    _
  $region13: #{cnn_forward.4} parent=0 // pred_fallthru
    _
  // Predicated region
  $region14: #{cnn_forward.4} parent=0 // pred_check
    _
  $region15: #{cnn_forward.4} parent=0 // pred_check_branch
    %18 = sbr.rel (0) target = $region17
  $region16: #{cnn_forward.4} parent=0 // pred_region
    _
  $region17: #{cnn_forward.4} parent=0 // pred_fallthru
    _
  // Predicated region
  $region18: #{cnn_forward.4} parent=0 // pred_check
    _
  $region19: #{cnn_forward.4} parent=0 // pred_check_branch
    %20 = sbr.rel (0) target = $region21
  $region20: #{cnn_forward.4} parent=0 // pred_region
    _
  $region21: #{cnn_forward.4} parent=0 // pred_fallthru
    _
  // Predicated region
  $region22: #{cnn_forward.4} parent=0 // pred_check
    _
  $region23: #{cnn_forward.4} parent=0 // pred_check_branch
    %22 = sbr.rel (0) target = $region25
  $region24: #{cnn_forward.4} parent=0 // pred_region
    _
  $region25: #{cnn_forward.4} parent=0 // pred_fallthru
    _
  %v24 = vlaneseq
  %v25 = vshrl.u32 %v24, 7
  %v26 = vadd.s32 %v25, 8
  %vm27 = vcmp.lt.s32.totalorder %v25, 0
  %v28 = vsub.s32 0, %v25
  %v29 = vsel %vm27, %v28, %v25
  %v30 = vshrl.u32 %v29, 3
  %v31 = vand.u32 %v29, 7
  %v32 = vsub.s32 0, %v31
  %v33 = vsel %vm27, %v32, %v31
  %vm34 = vcmp.lt.s32.totalorder %v26, 0
  %v35 = vsub.s32 0, %v26
  %v36 = vsel %vm34, %v35, %v26
  %v37 = vshrl.u32 %v36, 3
  %v38 = vand.u32 %v36, 7
  %v39 = vsub.s32 0, %v38
  %v40 = vsel %vm34, %v39, %v38
  %vm41 = vcmp.ne.s32.totalorder %v33, 0
  %vm42 = vcmp.ne.s32.totalorder %v40, 0
  %vm43 = vcmp.lt.s32.totalorder %v33, 0
  %vm44 = vcmp.lt.s32.totalorder %v40, 0
  %vm45 = vmand %vm43, %vm41
  %vm46 = vmand %vm44, %vm42
  %v47 = vadd.s32 %v33, 8
  %v48 = vadd.s32 %v40, 8
  %v49 = vsel %vm45, %v47, %v33
  %v50 = vsel %vm46, %v48, %v40
  %vm51 = vcmp.ne.s32.totalorder %v49, 0
  %vm52 = vcmp.ne.s32.totalorder %v50, 0
  %vm53 = vcmp.ne.s32.totalorder %v49, 7
  %vm54 = vcmp.ne.s32.totalorder %v50, 7
  %v55 = vld [vmem:[%s0] sm:$0xff]
  %v56 = vld [vmem:[%s0 + $0x8] sm:$0xf]
  %v57 = vld [vmem:[%s0 + $0xc] sm:$0xff]
  %v58 = vld [vmem:[%s0 + $0x14] sm:$0xf]
  %v59 = vld [vmem:[%s1] sm:$0xf]
  %v60 = vld [vmem:[%s1 + $0x4] sm:$0xf]
  %v61 = vld [vmem:[%s1 + $0x8] sm:$0xf]
  %v62 = vld [vmem:[%s1 + $0xc] sm:$0xf]
  %v63 = vld [vmem:[%s1 + $0x10] sm:$0xf]
  %v64 = vld [vmem:[%s1 + $0x14] sm:$0xf]
  %v65 = vld [vmem:[%s1 + $0x18] sm:$0xf]
  %v66 = vld [vmem:[%s1 + $0x1c] sm:$0xf]
  %v67 = vld [vmem:[%s1 + $0x20] sm:$0xf]
  %v68 = vld [vmem:[%s1 + $0x24] sm:$0xf]
  %v69 = vld [vmem:[%s1 + $0x28] sm:$0xf]
  %v70 = vld [vmem:[%s1 + $0x2c] sm:$0xf]
  %v71 = vld [vmem:[%s1 + $0x30] sm:$0xf]
  %v72 = vld [vmem:[%s1 + $0x34] sm:$0xf]
  %v73 = vld [vmem:[%s1 + $0x38] sm:$0xf]
  %v74 = vld [vmem:[%s1 + $0x3c] sm:$0xf]
  %v75 = vld [vmem:[%s1 + $0x40] sm:$0xf]
  %v76 = vld [vmem:[%s1 + $0x44] sm:$0xf]
  %v77 = vld [vmem:[%s1 + $0x48] sm:$0xf]
  %v78 = vld [vmem:[%s1 + $0x4c] sm:$0xf]
  %v79 = vld [vmem:[%s1 + $0x50] sm:$0xf]
  %v80 = vld [vmem:[%s1 + $0x54] sm:$0xf]
  %v81 = vld [vmem:[%s1 + $0x58] sm:$0xf]
  %v82 = vld [vmem:[%s1 + $0x5c] sm:$0xf]
  %v83 = vld [vmem:[%s1 + $0x60] sm:$0xf]
  %v84 = vld [vmem:[%s1 + $0x64] sm:$0xf]
  %v85 = vld [vmem:[%s1 + $0x68] sm:$0xf]
  %v86 = vld [vmem:[%s1 + $0x6c] sm:$0xf]
  %v87 = vld [vmem:[%s1 + $0x70] sm:$0xf]
  %v88 = vld [vmem:[%s1 + $0x74] sm:$0xf]
  %v89 = vld [vmem:[%s1 + $0x78] sm:$0xf]
  %v90 = vld [vmem:[%s1 + $0x7c] sm:$0xf]
  %v91 = vld [vmem:[%s1 + $0x80] sm:$0xf]
  %v92 = vld [vmem:[%s1 + $0x84] sm:$0xf]
  %v93 = vld [vmem:[%s1 + $0x88] sm:$0xf]
  %v94 = vld [vmem:[%s1 + $0x8c] sm:$0xf]
  %v95 = vld [vmem:[%s1 + $0x90] sm:$0xf]
  %v96 = vld [vmem:[%s1 + $0x94] sm:$0x3]
  %v101 = vunpack.c.l.b16 %v55
  %v102 = vunpack.c.h.b16 %v55
  %v103 = vunpack.c.l.b16 %v56
  %v104 = vunpack.c.l.b16 %v57
  %v105 = vunpack.c.h.b16 %v57
  %v106 = vunpack.c.l.b16 %v58
  %v107 = vpack.c.b16 %v104, %v101
  %v108 = vpack.c.b16 %v105, %v102
  %v109 = vpack.c.b16 %v106, %v103
  %v150 = vunpack.c.l.b16 %v59
  %v151 = vunpack.c.l.b16 %v60
  %v152 = vunpack.c.l.b16 %v61
  %v153 = vunpack.c.l.b16 %v62
  %v154 = vunpack.c.l.b16 %v63
  %v155 = vunpack.c.l.b16 %v64
  %v156 = vunpack.c.l.b16 %v65
  %v157 = vunpack.c.l.b16 %v66
  %v158 = vunpack.c.l.b16 %v67
  %v159 = vunpack.c.l.b16 %v68
  %v160 = vunpack.c.l.b16 %v69
  %v161 = vunpack.c.l.b16 %v70
  %v162 = vunpack.c.l.b16 %v71
  %v163 = vunpack.c.l.b16 %v72
  %v164 = vunpack.c.l.b16 %v73
  %v165 = vunpack.c.l.b16 %v74
  %v166 = vunpack.c.l.b16 %v75
  %v167 = vunpack.c.l.b16 %v76
  %v168 = vunpack.c.l.b16 %v77
  %v169 = vunpack.c.l.b16 %v78
  %v170 = vunpack.c.l.b16 %v79
  %v171 = vunpack.c.l.b16 %v80
  %v172 = vunpack.c.l.b16 %v81
  %v173 = vunpack.c.l.b16 %v82
  %v174 = vunpack.c.l.b16 %v83
  %v175 = vunpack.c.l.b16 %v84
  %v176 = vunpack.c.l.b16 %v85
  %v177 = vunpack.c.l.b16 %v86
  %v178 = vunpack.c.l.b16 %v87
  %v179 = vunpack.c.l.b16 %v88
  %v180 = vunpack.c.l.b16 %v89
  %v181 = vunpack.c.l.b16 %v90
  %v182 = vunpack.c.l.b16 %v91
  %v183 = vunpack.c.l.b16 %v92
  %v184 = vunpack.c.l.b16 %v93
  %v185 = vunpack.c.l.b16 %v94
  %v186 = vunpack.c.l.b16 %v95
  %v187 = vunpack.c.l.b16 %v96
  %v188 = vpack.c.b16 %v151, %v150
  %v189 = vpack.c.b16 %v153, %v152
  %v190 = vpack.c.b16 %v155, %v154
  %v191 = vpack.c.b16 %v157, %v156
  %v192 = vpack.c.b16 %v159, %v158
  %v193 = vpack.c.b16 %v161, %v160
  %v194 = vpack.c.b16 %v163, %v162
  %v195 = vpack.c.b16 %v165, %v164
  %v196 = vpack.c.b16 %v167, %v166
  %v197 = vpack.c.b16 %v169, %v168
  %v198 = vpack.c.b16 %v171, %v170
  %v199 = vpack.c.b16 %v173, %v172
  %v200 = vpack.c.b16 %v175, %v174
  %v201 = vpack.c.b16 %v177, %v176
  %v202 = vpack.c.b16 %v179, %v178
  %v203 = vpack.c.b16 %v181, %v180
  %v204 = vpack.c.b16 %v183, %v182
  %v205 = vpack.c.b16 %v185, %v184
  %v206 = vpack.c.b16 %v187, %v186
  %vm225 = vcmask 359424
  %v227 = vsel %vm225, %v109, 0
  %vm229 = vcmask 1045504
  %v231 = vsel %vm229, %v206, 0
  %233 = vmatprep.subr.bf16.mxu0 0
  %234 = vmatpush1.bf16.msra.mxu0 %v195
  %235 = vmatprep.subr.bf16.mxu0 0
  %236 = vmatpush1.bf16.msra.mxu0 %v194
  %237 = vmatprep.subr.bf16.mxu0 0
  %238 = vmatpush1.bf16.msra.mxu0 %v193
  %239 = vmatprep.subr.bf16.mxu0 0
  %240 = vmatpush1.bf16.msra.mxu0 %v192
  %241 = vmatprep.subr.bf16.mxu0 0
  %242 = vmatpush1.bf16.msra.mxu0 %v191
  %243 = vmatprep.subr.bf16.mxu0 0
  %244 = vmatpush1.bf16.msra.mxu0 %v190
  %245 = vmatprep.subr.bf16.mxu0 0
  %246 = vmatpush1.bf16.msra.mxu0 %v189
  %247 = vmatprep.subr.bf16.mxu0 0
  %248 = vmatpush1.bf16.msra.mxu0 %v188
  %249 = vmatprep.subr.bf16.mxu0 0
  %250 = vmatpush2.bf16.msra.mxu0 %v203
  %251 = vmatprep.subr.bf16.mxu0 0
  %252 = vmatpush2.bf16.msra.mxu0 %v202
  %253 = vmatprep.subr.bf16.mxu0 0
  %254 = vmatpush2.bf16.msra.mxu0 %v201
  %255 = vmatprep.subr.bf16.mxu0 0
  %256 = vmatpush2.bf16.msra.mxu0 %v200
  %257 = vmatprep.subr.bf16.mxu0 0
  %258 = vmatpush2.bf16.msra.mxu0 %v199
  %259 = vmatprep.subr.bf16.mxu0 0
  %260 = vmatpush2.bf16.msra.mxu0 %v198
  %261 = vmatprep.subr.bf16.mxu0 0
  %262 = vmatpush2.bf16.msra.mxu0 %v197
  %263 = vmatprep.subr.bf16.mxu0 0
  %264 = vmatpush2.bf16.msra.mxu0 %v196
  %265 = vmatprep.mubr.bf16.mxu0 %v108
  %266 = vmatmul.mubr.bf16.gmra.mxu0 %v107
  %v267 = vpop.f32.mrf.mxu0
  %v268 = vadd.f32 0.0, %v267
  %v269 = vpop.f32.mrf.mxu0
  %v270 = vpop.f32.mrf.mxu0
  %v271 = vadd.f32 0.0, %v270
  %v272 = vpop.f32.mrf.mxu0
  %273 = vdwg.mxu0
  %274 = vmatprep.subr.bf16.mxu0 0
  %275 = vmatpush1.bf16.msra.mxu0 0
  %276 = vmatprep.subr.bf16.mxu0 0
  %277 = vmatpush1.bf16.msra.mxu0 0
  %278 = vmatprep.subr.bf16.mxu0 0
  %279 = vmatpush1.bf16.msra.mxu0 0
  %280 = vmatprep.subr.bf16.mxu0 0
  %281 = vmatpush1.bf16.msra.mxu0 0
  %282 = vmatprep.subr.bf16.mxu0 0
  %283 = vmatpush1.bf16.msra.mxu0 0
  %284 = vmatprep.subr.bf16.mxu0 0
  %285 = vmatpush1.bf16.msra.mxu0 %v231
  %286 = vmatprep.subr.bf16.mxu0 0
  %287 = vmatpush1.bf16.msra.mxu0 %v205
  %288 = vmatprep.subr.bf16.mxu0 0
  %289 = vmatpush1.bf16.msra.mxu0 %v204
  %290 = vmatprep.subr.bf16.mxu0 0
  %291 = vmatpush2.bf16.msra.mxu0 0
  %292 = vmatprep.subr.bf16.mxu0 0
  %293 = vmatpush2.bf16.msra.mxu0 0
  %294 = vmatprep.subr.bf16.mxu0 0
  %295 = vmatpush2.bf16.msra.mxu0 0
  %296 = vmatprep.subr.bf16.mxu0 0
  %297 = vmatpush2.bf16.msra.mxu0 0
  %298 = vmatprep.subr.bf16.mxu0 0
  %299 = vmatpush2.bf16.msra.mxu0 0
  %300 = vmatprep.subr.bf16.mxu0 0
  %301 = vmatpush2.bf16.msra.mxu0 0
  %302 = vmatprep.subr.bf16.mxu0 0
  %303 = vmatpush2.bf16.msra.mxu0 0
  %304 = vmatprep.subr.bf16.mxu0 0
  %305 = vmatpush2.bf16.msra.mxu0 0
  %306 = vmatprep.mubr.bf16.mxu0 0
  %307 = vmatmul.mubr.bf16.gmra.mxu0 %v227
  %v308 = vpop.f32.mrf.mxu0
  %v309 = vadd.f32 %v268, %v308
  %v310 = vpop.f32.mrf.mxu0
  %v311 = vpop.f32.mrf.mxu0
  %v312 = vadd.f32 %v271, %v311
  %v313 = vpop.f32.mrf.mxu0
  %314 = vdwg.mxu0
  %s315 = scalar_lea.vmem %s1, 152
  %v316 = vld [vmem:[%s315] sm:$0xf]
  %v317 = vld [vmem:[%s315 + $0x4] sm:$0xf]
  %v318 = vld [vmem:[%s315 + $0x8] sm:$0xf]
  %v319 = vld [vmem:[%s315 + $0xc] sm:$0xf]
  %v320 = vld [vmem:[%s315 + $0x10] sm:$0xf]
  %v321 = vld [vmem:[%s315 + $0x14] sm:$0xf]
  %v322 = vld [vmem:[%s315 + $0x18] sm:$0xf]
  %v323 = vld [vmem:[%s315 + $0x1c] sm:$0xf]
  %v324 = vld [vmem:[%s315 + $0x20] sm:$0xf]
  %v325 = vld [vmem:[%s315 + $0x24] sm:$0xf]
  %v326 = vld [vmem:[%s315 + $0x28] sm:$0xf]
  %v327 = vld [vmem:[%s315 + $0x2c] sm:$0xf]
  %v328 = vld [vmem:[%s315 + $0x30] sm:$0xf]
  %v329 = vld [vmem:[%s315 + $0x34] sm:$0xf]
  %v330 = vld [vmem:[%s315 + $0x38] sm:$0xf]
  %v331 = vld [vmem:[%s315 + $0x3c] sm:$0xf]
  %v332 = vld [vmem:[%s315 + $0x40] sm:$0xf]
  %v333 = vld [vmem:[%s315 + $0x44] sm:$0xf]
  %v334 = vld [vmem:[%s315 + $0x48] sm:$0xf]
  %v335 = vld [vmem:[%s315 + $0x4c] sm:$0xf]
  %v336 = vld [vmem:[%s315 + $0x50] sm:$0xf]
  %v337 = vld [vmem:[%s315 + $0x54] sm:$0xf]
  %v338 = vld [vmem:[%s315 + $0x58] sm:$0xf]
  %v339 = vld [vmem:[%s315 + $0x5c] sm:$0xf]
  %v340 = vld [vmem:[%s315 + $0x60] sm:$0xf]
  %v341 = vld [vmem:[%s315 + $0x64] sm:$0xf]
  %v342 = vld [vmem:[%s315 + $0x68] sm:$0xf]
  %v343 = vld [vmem:[%s315 + $0x6c] sm:$0xf]
  %v344 = vld [vmem:[%s315 + $0x70] sm:$0xf]
  %v345 = vld [vmem:[%s315 + $0x74] sm:$0xf]
  %v346 = vld [vmem:[%s315 + $0x78] sm:$0xf]
  %v347 = vld [vmem:[%s315 + $0x7c] sm:$0xf]
  %v348 = vld [vmem:[%s315 + $0x80] sm:$0xf]
  %v349 = vld [vmem:[%s315 + $0x84] sm:$0xf]
  %v350 = vld [vmem:[%s315 + $0x88] sm:$0xf]
  %v351 = vld [vmem:[%s315 + $0x8c] sm:$0xf]
  %v352 = vld [vmem:[%s315 + $0x90] sm:$0xf]
  %v353 = vld [vmem:[%s315 + $0x94] sm:$0x3]
  %s354 = scalar_lea.vmem %s1, 304
  %v355 = vld [vmem:[%s354] sm:$0xf]
  %v356 = vld [vmem:[%s354 + $0x4] sm:$0xf]
  %v357 = vld [vmem:[%s354 + $0x8] sm:$0xf]
  %v358 = vld [vmem:[%s354 + $0xc] sm:$0xf]
  %v359 = vld [vmem:[%s354 + $0x10] sm:$0xf]
  %v360 = vld [vmem:[%s354 + $0x14] sm:$0xf]
  %v361 = vld [vmem:[%s354 + $0x18] sm:$0xf]
  %v362 = vld [vmem:[%s354 + $0x1c] sm:$0xf]
  %v363 = vld [vmem:[%s354 + $0x20] sm:$0xf]
  %v364 = vld [vmem:[%s354 + $0x24] sm:$0xf]
  %v365 = vld [vmem:[%s354 + $0x28] sm:$0xf]
  %v366 = vld [vmem:[%s354 + $0x2c] sm:$0xf]
  %v367 = vld [vmem:[%s354 + $0x30] sm:$0xf]
  %v368 = vld [vmem:[%s354 + $0x34] sm:$0xf]
  %v369 = vld [vmem:[%s354 + $0x38] sm:$0xf]
  %v370 = vld [vmem:[%s354 + $0x3c] sm:$0xf]
  %v371 = vld [vmem:[%s354 + $0x40] sm:$0xf]
  %v372 = vld [vmem:[%s354 + $0x44] sm:$0xf]
  %v373 = vld [vmem:[%s354 + $0x48] sm:$0xf]
  %v374 = vld [vmem:[%s354 + $0x4c] sm:$0xf]
  %v375 = vld [vmem:[%s354 + $0x50] sm:$0xf]
  %v376 = vld [vmem:[%s354 + $0x54] sm:$0xf]
  %v377 = vld [vmem:[%s354 + $0x58] sm:$0xf]
  %v378 = vld [vmem:[%s354 + $0x5c] sm:$0xf]
  %v379 = vld [vmem:[%s354 + $0x60] sm:$0xf]
  %v380 = vld [vmem:[%s354 + $0x64] sm:$0xf]
  %v381 = vld [vmem:[%s354 + $0x68] sm:$0xf]
  %v382 = vld [vmem:[%s354 + $0x6c] sm:$0xf]
  %v383 = vld [vmem:[%s354 + $0x70] sm:$0xf]
  %v384 = vld [vmem:[%s354 + $0x74] sm:$0xf]
  %v385 = vld [vmem:[%s354 + $0x78] sm:$0xf]
  %v386 = vld [vmem:[%s354 + $0x7c] sm:$0xf]
  %v387 = vld [vmem:[%s354 + $0x80] sm:$0xf]
  %v388 = vld [vmem:[%s354 + $0x84] sm:$0xf]
  %v389 = vld [vmem:[%s354 + $0x88] sm:$0xf]
  %v390 = vld [vmem:[%s354 + $0x8c] sm:$0xf]
  %v391 = vld [vmem:[%s354 + $0x90] sm:$0xf]
  %v392 = vld [vmem:[%s354 + $0x94] sm:$0x3]
  %v431 = vunpack.c.l.b16 %v355
  %v432 = vunpack.c.l.b16 %v356
  %v433 = vunpack.c.l.b16 %v357
  %v434 = vunpack.c.l.b16 %v358
  %v435 = vunpack.c.l.b16 %v359
  %v436 = vunpack.c.l.b16 %v360
  %v437 = vunpack.c.l.b16 %v361
  %v438 = vunpack.c.l.b16 %v362
  %v439 = vunpack.c.l.b16 %v363
  %v440 = vunpack.c.l.b16 %v364
  %v441 = vunpack.c.l.b16 %v365
  %v442 = vunpack.c.l.b16 %v366
  %v443 = vunpack.c.l.b16 %v367
  %v444 = vunpack.c.l.b16 %v368
  %v445 = vunpack.c.l.b16 %v369
  %v446 = vunpack.c.l.b16 %v370
  %v447 = vunpack.c.l.b16 %v371
  %v448 = vunpack.c.l.b16 %v372
  %v449 = vunpack.c.l.b16 %v373
  %v450 = vunpack.c.l.b16 %v374
  %v451 = vunpack.c.l.b16 %v375
  %v452 = vunpack.c.l.b16 %v376
  %v453 = vunpack.c.l.b16 %v377
  %v454 = vunpack.c.l.b16 %v378
  %v455 = vunpack.c.l.b16 %v379
  %v456 = vunpack.c.l.b16 %v380
  %v457 = vunpack.c.l.b16 %v381
  %v458 = vunpack.c.l.b16 %v382
  %v459 = vunpack.c.l.b16 %v383
  %v460 = vunpack.c.l.b16 %v384
  %v461 = vunpack.c.l.b16 %v385
  %v462 = vunpack.c.l.b16 %v386
  %v463 = vunpack.c.l.b16 %v387
  %v464 = vunpack.c.l.b16 %v388
  %v465 = vunpack.c.l.b16 %v389
  %v466 = vunpack.c.l.b16 %v390
  %v467 = vunpack.c.l.b16 %v391
  %v468 = vunpack.c.l.b16 %v392
  %v469 = vpack.c.b16 %v432, %v431
  %v470 = vpack.c.b16 %v434, %v433
  %v471 = vpack.c.b16 %v436, %v435
  %v472 = vpack.c.b16 %v438, %v437
  %v473 = vpack.c.b16 %v440, %v439
  %v474 = vpack.c.b16 %v442, %v441
  %v475 = vpack.c.b16 %v444, %v443
  %v476 = vpack.c.b16 %v446, %v445
  %v477 = vpack.c.b16 %v448, %v447
  %v478 = vpack.c.b16 %v450, %v449
  %v479 = vpack.c.b16 %v452, %v451
  %v480 = vpack.c.b16 %v454, %v453
  %v481 = vpack.c.b16 %v456, %v455
  %v482 = vpack.c.b16 %v458, %v457
  %v483 = vpack.c.b16 %v460, %v459
  %v484 = vpack.c.b16 %v462, %v461
  %v485 = vpack.c.b16 %v464, %v463
  %v486 = vpack.c.b16 %v466, %v465
  %v487 = vpack.c.b16 %v468, %v467
  %v507 = vsel %vm229, %v487, 0
  %509 = vmatprep.subr.bf16.mxu0 0
  %510 = vmatpush1.bf16.msra.mxu0 %v476
  %511 = vmatprep.subr.bf16.mxu0 0
  %512 = vmatpush1.bf16.msra.mxu0 %v475
  %513 = vmatprep.subr.bf16.mxu0 0
  %514 = vmatpush1.bf16.msra.mxu0 %v474
  %515 = vmatprep.subr.bf16.mxu0 0
  %516 = vmatpush1.bf16.msra.mxu0 %v473
  %517 = vmatprep.subr.bf16.mxu0 0
  %518 = vmatpush1.bf16.msra.mxu0 %v472
  %519 = vmatprep.subr.bf16.mxu0 0
  %520 = vmatpush1.bf16.msra.mxu0 %v471
  %521 = vmatprep.subr.bf16.mxu0 0
  %522 = vmatpush1.bf16.msra.mxu0 %v470
  %523 = vmatprep.subr.bf16.mxu0 0
  %524 = vmatpush1.bf16.msra.mxu0 %v469
  %525 = vmatprep.subr.bf16.mxu0 0
  %526 = vmatpush2.bf16.msra.mxu0 %v484
  %527 = vmatprep.subr.bf16.mxu0 0
  %528 = vmatpush2.bf16.msra.mxu0 %v483
  %529 = vmatprep.subr.bf16.mxu0 0
  %530 = vmatpush2.bf16.msra.mxu0 %v482
  %531 = vmatprep.subr.bf16.mxu0 0
  %532 = vmatpush2.bf16.msra.mxu0 %v481
  %533 = vmatprep.subr.bf16.mxu0 0
  %534 = vmatpush2.bf16.msra.mxu0 %v480
  %535 = vmatprep.subr.bf16.mxu0 0
  %536 = vmatpush2.bf16.msra.mxu0 %v479
  %537 = vmatprep.subr.bf16.mxu0 0
  %538 = vmatpush2.bf16.msra.mxu0 %v478
  %539 = vmatprep.subr.bf16.mxu0 0
  %540 = vmatpush2.bf16.msra.mxu0 %v477
  %541 = vmatprep.mubr.bf16.mxu0 %v108
  %542 = vmatmul.mubr.bf16.gmra.mxu0 %v107
  %v543 = vpop.f32.mrf.mxu0
  %v544 = vadd.f32 0.0, %v543
  %v545 = vpop.f32.mrf.mxu0
  %v546 = vpop.f32.mrf.mxu0
  %v547 = vadd.f32 0.0, %v546
  %v548 = vpop.f32.mrf.mxu0
  %549 = vdwg.mxu0
  %550 = vmatprep.subr.bf16.mxu0 0
  %551 = vmatpush1.bf16.msra.mxu0 0
  %552 = vmatprep.subr.bf16.mxu0 0
  %553 = vmatpush1.bf16.msra.mxu0 0
  %554 = vmatprep.subr.bf16.mxu0 0
  %555 = vmatpush1.bf16.msra.mxu0 0
  %556 = vmatprep.subr.bf16.mxu0 0
  %557 = vmatpush1.bf16.msra.mxu0 0
  %558 = vmatprep.subr.bf16.mxu0 0
  %559 = vmatpush1.bf16.msra.mxu0 0
  %560 = vmatprep.subr.bf16.mxu0 0
  %561 = vmatpush1.bf16.msra.mxu0 %v507
  %562 = vmatprep.subr.bf16.mxu0 0
  %563 = vmatpush1.bf16.msra.mxu0 %v486
  %564 = vmatprep.subr.bf16.mxu0 0
  %565 = vmatpush1.bf16.msra.mxu0 %v485
  %566 = vmatprep.subr.bf16.mxu0 0
  %567 = vmatpush2.bf16.msra.mxu0 0
  %568 = vmatprep.subr.bf16.mxu0 0
  %569 = vmatpush2.bf16.msra.mxu0 0
  %570 = vmatprep.subr.bf16.mxu0 0
  %571 = vmatpush2.bf16.msra.mxu0 0
  %572 = vmatprep.subr.bf16.mxu0 0
  %573 = vmatpush2.bf16.msra.mxu0 0
  %574 = vmatprep.subr.bf16.mxu0 0
  %575 = vmatpush2.bf16.msra.mxu0 0
  %576 = vmatprep.subr.bf16.mxu0 0
  %577 = vmatpush2.bf16.msra.mxu0 0
  %578 = vmatprep.subr.bf16.mxu0 0
  %579 = vmatpush2.bf16.msra.mxu0 0
  %580 = vmatprep.subr.bf16.mxu0 0
  %581 = vmatpush2.bf16.msra.mxu0 0
  %582 = vmatprep.mubr.bf16.mxu0 0
  %583 = vmatmul.mubr.bf16.gmra.mxu0 %v227
  %v584 = vpop.f32.mrf.mxu0
  %v585 = vadd.f32 %v544, %v584
  %v586 = vpop.f32.mrf.mxu0
  %v587 = vpop.f32.mrf.mxu0
  %v588 = vadd.f32 %v547, %v587
  %v589 = vpop.f32.mrf.mxu0
  %590 = vdwg.mxu0
  %v591 = vrot.slane %v309, 7
  %v592 = vrot.slane %v312, 7
  %vm593 = vcmp.lt.s32.totalorder %v25, 1
  %v594 = vsel %vm593, %v591, %v592
  %v595 = vsel %vm593, %v592, %v591
  %v596 = vsel %vm51, 1, 0
  %v597 = vsel %vm52, 1, 0
  %vm598 = vcmp.eq.s32.totalorder %v596, 1
  %vm599 = vcmp.eq.s32.totalorder %v597, 1
  %v600 = vsel %vm598, %v595, 0.0
  %v601 = vsel %vm599, %v594, 0.0
  %v640 = vunpack.c.l.b16 %v316
  %v641 = vunpack.c.l.b16 %v317
  %v642 = vunpack.c.l.b16 %v318
  %v643 = vunpack.c.l.b16 %v319
  %v644 = vunpack.c.l.b16 %v320
  %v645 = vunpack.c.l.b16 %v321
  %v646 = vunpack.c.l.b16 %v322
  %v647 = vunpack.c.l.b16 %v323
  %v648 = vunpack.c.l.b16 %v324
  %v649 = vunpack.c.l.b16 %v325
  %v650 = vunpack.c.l.b16 %v326
  %v651 = vunpack.c.l.b16 %v327
  %v652 = vunpack.c.l.b16 %v328
  %v653 = vunpack.c.l.b16 %v329
  %v654 = vunpack.c.l.b16 %v330
  %v655 = vunpack.c.l.b16 %v331
  %v656 = vunpack.c.l.b16 %v332
  %v657 = vunpack.c.l.b16 %v333
  %v658 = vunpack.c.l.b16 %v334
  %v659 = vunpack.c.l.b16 %v335
  %v660 = vunpack.c.l.b16 %v336
  %v661 = vunpack.c.l.b16 %v337
  %v662 = vunpack.c.l.b16 %v338
  %v663 = vunpack.c.l.b16 %v339
  %v664 = vunpack.c.l.b16 %v340
  %v665 = vunpack.c.l.b16 %v341
  %v666 = vunpack.c.l.b16 %v342
  %v667 = vunpack.c.l.b16 %v343
  %v668 = vunpack.c.l.b16 %v344
  %v669 = vunpack.c.l.b16 %v345
  %v670 = vunpack.c.l.b16 %v346
  %v671 = vunpack.c.l.b16 %v347
  %v672 = vunpack.c.l.b16 %v348
  %v673 = vunpack.c.l.b16 %v349
  %v674 = vunpack.c.l.b16 %v350
  %v675 = vunpack.c.l.b16 %v351
  %v676 = vunpack.c.l.b16 %v352
  %v677 = vunpack.c.l.b16 %v353
  %v678 = vpack.c.b16 %v641, %v640
  %v679 = vpack.c.b16 %v643, %v642
  %v680 = vpack.c.b16 %v645, %v644
  %v681 = vpack.c.b16 %v647, %v646
  %v682 = vpack.c.b16 %v649, %v648
  %v683 = vpack.c.b16 %v651, %v650
  %v684 = vpack.c.b16 %v653, %v652
  %v685 = vpack.c.b16 %v655, %v654
  %v686 = vpack.c.b16 %v657, %v656
  %v687 = vpack.c.b16 %v659, %v658
  %v688 = vpack.c.b16 %v661, %v660
  %v689 = vpack.c.b16 %v663, %v662
  %v690 = vpack.c.b16 %v665, %v664
  %v691 = vpack.c.b16 %v667, %v666
  %v692 = vpack.c.b16 %v669, %v668
  %v693 = vpack.c.b16 %v671, %v670
  %v694 = vpack.c.b16 %v673, %v672
  %v695 = vpack.c.b16 %v675, %v674
  %v696 = vpack.c.b16 %v677, %v676
  %v716 = vsel %vm229, %v696, 0
  %718 = vmatprep.subr.bf16.mxu0 0
  %719 = vmatpush1.bf16.msra.mxu0 %v685
  %720 = vmatprep.subr.bf16.mxu0 0
  %721 = vmatpush1.bf16.msra.mxu0 %v684
  %722 = vmatprep.subr.bf16.mxu0 0
  %723 = vmatpush1.bf16.msra.mxu0 %v683
  %724 = vmatprep.subr.bf16.mxu0 0
  %725 = vmatpush1.bf16.msra.mxu0 %v682
  %726 = vmatprep.subr.bf16.mxu0 0
  %727 = vmatpush1.bf16.msra.mxu0 %v681
  %728 = vmatprep.subr.bf16.mxu0 0
  %729 = vmatpush1.bf16.msra.mxu0 %v680
  %730 = vmatprep.subr.bf16.mxu0 0
  %731 = vmatpush1.bf16.msra.mxu0 %v679
  %732 = vmatprep.subr.bf16.mxu0 0
  %733 = vmatpush1.bf16.msra.mxu0 %v678
  %734 = vmatprep.subr.bf16.mxu0 0
  %735 = vmatpush2.bf16.msra.mxu0 %v693
  %736 = vmatprep.subr.bf16.mxu0 0
  %737 = vmatpush2.bf16.msra.mxu0 %v692
  %738 = vmatprep.subr.bf16.mxu0 0
  %739 = vmatpush2.bf16.msra.mxu0 %v691
  %740 = vmatprep.subr.bf16.mxu0 0
  %741 = vmatpush2.bf16.msra.mxu0 %v690
  %742 = vmatprep.subr.bf16.mxu0 0
  %743 = vmatpush2.bf16.msra.mxu0 %v689
  %744 = vmatprep.subr.bf16.mxu0 0
  %745 = vmatpush2.bf16.msra.mxu0 %v688
  %746 = vmatprep.subr.bf16.mxu0 0
  %747 = vmatpush2.bf16.msra.mxu0 %v687
  %748 = vmatprep.subr.bf16.mxu0 0
  %749 = vmatpush2.bf16.msra.mxu0 %v686
  %750 = vmatprep.mubr.bf16.mxu0 %v108
  %751 = vmatmul.mubr.bf16.gmra.mxu0 %v107
  %v752 = vpop.f32.mrf.mxu0
  %v753 = vadd.f32 %v600, %v752
  %v754 = vpop.f32.mrf.mxu0
  %v755 = vpop.f32.mrf.mxu0
  %v756 = vadd.f32 %v601, %v755
  %v757 = vpop.f32.mrf.mxu0
  %758 = vdwg.mxu0
  %759 = vmatprep.subr.bf16.mxu0 0
  %760 = vmatpush1.bf16.msra.mxu0 0
  %761 = vmatprep.subr.bf16.mxu0 0
  %762 = vmatpush1.bf16.msra.mxu0 0
  %763 = vmatprep.subr.bf16.mxu0 0
  %764 = vmatpush1.bf16.msra.mxu0 0
  %765 = vmatprep.subr.bf16.mxu0 0
  %766 = vmatpush1.bf16.msra.mxu0 0
  %767 = vmatprep.subr.bf16.mxu0 0
  %768 = vmatpush1.bf16.msra.mxu0 0
  %769 = vmatprep.subr.bf16.mxu0 0
  %770 = vmatpush1.bf16.msra.mxu0 %v716
  %771 = vmatprep.subr.bf16.mxu0 0
  %772 = vmatpush1.bf16.msra.mxu0 %v695
  %773 = vmatprep.subr.bf16.mxu0 0
  %774 = vmatpush1.bf16.msra.mxu0 %v694
  %775 = vmatprep.subr.bf16.mxu0 0
  %776 = vmatpush2.bf16.msra.mxu0 0
  %777 = vmatprep.subr.bf16.mxu0 0
  %778 = vmatpush2.bf16.msra.mxu0 0
  %779 = vmatprep.subr.bf16.mxu0 0
  %780 = vmatpush2.bf16.msra.mxu0 0
  %781 = vmatprep.subr.bf16.mxu0 0
  %782 = vmatpush2.bf16.msra.mxu0 0
  %783 = vmatprep.subr.bf16.mxu0 0
  %784 = vmatpush2.bf16.msra.mxu0 0
  %785 = vmatprep.subr.bf16.mxu0 0
  %786 = vmatpush2.bf16.msra.mxu0 0
  %787 = vmatprep.subr.bf16.mxu0 0
  %788 = vmatpush2.bf16.msra.mxu0 0
  %789 = vmatprep.subr.bf16.mxu0 0
  %790 = vmatpush2.bf16.msra.mxu0 0
  %791 = vmatprep.mubr.bf16.mxu0 0
  %792 = vmatmul.mubr.bf16.gmra.mxu0 %v227
  %v793 = vpop.f32.mrf.mxu0
  %v794 = vadd.f32 %v753, %v793
  %v795 = vpop.f32.mrf.mxu0
  %v796 = vpop.f32.mrf.mxu0
  %v797 = vadd.f32 %v756, %v796
  %v798 = vpop.f32.mrf.mxu0
  %799 = vdwg.mxu0
  %v800 = vrot.slane %v585, 1
  %v801 = vrot.slane %v588, 1
  %vm802 = vcmp.lt.s32.totalorder %v25, 7
  %v803 = vsel %vm802, %v800, %v801
  %v804 = vsel %vm802, %v801, %v800
  %v805 = vsel %vm53, 1, 0
  %v806 = vsel %vm54, 1, 0
  %vm807 = vcmp.eq.s32.totalorder %v805, 1
  %vm808 = vcmp.eq.s32.totalorder %v806, 1
  %v809 = vsel %vm807, %v803, 0.0
  %v810 = vsel %vm808, %v804, 0.0
  %v811 = vadd.f32 %v794, %v809
  %v812 = vadd.f32 %v797, %v810
  %v813 = vld [vmem:[%s2] sm:$0x1]
  %v815 = vlaneseq
  %v816 = vshrl.u32 %v815, 7
  %v817 = vsub.s32 0, %v816
  %v818 = vrot.slane %v813, %v817
  %v820 = vadd.f32 %v811, %v818
  %v821 = vadd.f32 %v812, %v818
  %v822 = vmax.f32 %v820, 0.0
  %v823 = vmax.f32 %v821, 0.0
  %v824 = vpack.c.bf16 %v823, %v822
  %v825 = vld [vmem:[%s3] sm:$0xf]
  %v826 = vld [vmem:[%s3 + $0x4] sm:$0xf]
  %v827 = vld [vmem:[%s3 + $0x8] sm:$0xf]
  %v828 = vld [vmem:[%s3 + $0xc] sm:$0xf]
  %v829 = vld [vmem:[%s3 + $0x10] sm:$0xf]
  %v830 = vld [vmem:[%s3 + $0x14] sm:$0xf]
  %v831 = vld [vmem:[%s3 + $0x18] sm:$0xf]
  %v832 = vld [vmem:[%s3 + $0x1c] sm:$0xf]
  %v841 = vunpack.c.l.b16 %v825
  %v842 = vunpack.c.l.b16 %v826
  %v843 = vunpack.c.l.b16 %v827
  %v844 = vunpack.c.l.b16 %v828
  %v845 = vunpack.c.l.b16 %v829
  %v846 = vunpack.c.l.b16 %v830
  %v847 = vunpack.c.l.b16 %v831
  %v848 = vunpack.c.l.b16 %v832
  %v849 = vpack.c.b16 %v842, %v841
  %v850 = vpack.c.b16 %v844, %v843
  %v851 = vpack.c.b16 %v846, %v845
  %v852 = vpack.c.b16 %v848, %v847
  %vm857 = vcmask 523264
  %v859 = vsel %vm857, %v824, 0
  %861 = vmatprep.subr.bf16.mxu0 0
  %862 = vmatpush1.bf16.msra.mxu0 0
  %863 = vmatprep.subr.bf16.mxu0 0
  %864 = vmatpush1.bf16.msra.mxu0 0
  %865 = vmatprep.subr.bf16.mxu0 0
  %866 = vmatpush1.bf16.msra.mxu0 0
  %867 = vmatprep.subr.bf16.mxu0 0
  %868 = vmatpush1.bf16.msra.mxu0 0
  %869 = vmatprep.subr.bf16.mxu0 0
  %870 = vmatpush1.bf16.msra.mxu0 %v852
  %871 = vmatprep.subr.bf16.mxu0 0
  %872 = vmatpush1.bf16.msra.mxu0 %v851
  %873 = vmatprep.subr.bf16.mxu0 0
  %874 = vmatpush1.bf16.msra.mxu0 %v850
  %875 = vmatprep.subr.bf16.mxu0 0
  %876 = vmatpush1.bf16.msra.mxu0 %v849
  %877 = vmatprep.subr.bf16.mxu0 0
  %878 = vmatpush2.bf16.msra.mxu0 0
  %879 = vmatprep.subr.bf16.mxu0 0
  %880 = vmatpush2.bf16.msra.mxu0 0
  %881 = vmatprep.subr.bf16.mxu0 0
  %882 = vmatpush2.bf16.msra.mxu0 0
  %883 = vmatprep.subr.bf16.mxu0 0
  %884 = vmatpush2.bf16.msra.mxu0 0
  %885 = vmatprep.subr.bf16.mxu0 0
  %886 = vmatpush2.bf16.msra.mxu0 0
  %887 = vmatprep.subr.bf16.mxu0 0
  %888 = vmatpush2.bf16.msra.mxu0 0
  %889 = vmatprep.subr.bf16.mxu0 0
  %890 = vmatpush2.bf16.msra.mxu0 0
  %891 = vmatprep.subr.bf16.mxu0 0
  %892 = vmatpush2.bf16.msra.mxu0 0
  %893 = vmatprep.mubr.bf16.mxu0 0
  %894 = vmatmul.mubr.bf16.gmra.mxu0 %v859
  %v895 = vpop.f32.mrf.mxu0
  %v896 = vadd.f32 0.0, %v895
  %v897 = vpop.f32.mrf.mxu0
  %v898 = vpop.f32.mrf.mxu0
  %v899 = vadd.f32 0.0, %v898
  %v900 = vpop.f32.mrf.mxu0
  %901 = vdwg.mxu0
  %s902 = scalar_lea.vmem %s3, 32
  %v903 = vld [vmem:[%s902] sm:$0xf]
  %v904 = vld [vmem:[%s902 + $0x4] sm:$0xf]
  %v905 = vld [vmem:[%s902 + $0x8] sm:$0xf]
  %v906 = vld [vmem:[%s902 + $0xc] sm:$0xf]
  %v907 = vld [vmem:[%s902 + $0x10] sm:$0xf]
  %v908 = vld [vmem:[%s902 + $0x14] sm:$0xf]
  %v909 = vld [vmem:[%s902 + $0x18] sm:$0xf]
  %v910 = vld [vmem:[%s902 + $0x1c] sm:$0xf]
  %s911 = scalar_lea.vmem %s3, 64
  %v912 = vld [vmem:[%s911] sm:$0xf]
  %v913 = vld [vmem:[%s911 + $0x4] sm:$0xf]
  %v914 = vld [vmem:[%s911 + $0x8] sm:$0xf]
  %v915 = vld [vmem:[%s911 + $0xc] sm:$0xf]
  %v916 = vld [vmem:[%s911 + $0x10] sm:$0xf]
  %v917 = vld [vmem:[%s911 + $0x14] sm:$0xf]
  %v918 = vld [vmem:[%s911 + $0x18] sm:$0xf]
  %v919 = vld [vmem:[%s911 + $0x1c] sm:$0xf]
  %v928 = vunpack.c.l.b16 %v912
  %v929 = vunpack.c.l.b16 %v913
  %v930 = vunpack.c.l.b16 %v914
  %v931 = vunpack.c.l.b16 %v915
  %v932 = vunpack.c.l.b16 %v916
  %v933 = vunpack.c.l.b16 %v917
  %v934 = vunpack.c.l.b16 %v918
  %v935 = vunpack.c.l.b16 %v919
  %v936 = vpack.c.b16 %v929, %v928
  %v937 = vpack.c.b16 %v931, %v930
  %v938 = vpack.c.b16 %v933, %v932
  %v939 = vpack.c.b16 %v935, %v934
  %944 = vmatprep.subr.bf16.mxu0 0
  %945 = vmatpush1.bf16.msra.mxu0 0
  %946 = vmatprep.subr.bf16.mxu0 0
  %947 = vmatpush1.bf16.msra.mxu0 0
  %948 = vmatprep.subr.bf16.mxu0 0
  %949 = vmatpush1.bf16.msra.mxu0 0
  %950 = vmatprep.subr.bf16.mxu0 0
  %951 = vmatpush1.bf16.msra.mxu0 0
  %952 = vmatprep.subr.bf16.mxu0 0
  %953 = vmatpush1.bf16.msra.mxu0 %v939
  %954 = vmatprep.subr.bf16.mxu0 0
  %955 = vmatpush1.bf16.msra.mxu0 %v938
  %956 = vmatprep.subr.bf16.mxu0 0
  %957 = vmatpush1.bf16.msra.mxu0 %v937
  %958 = vmatprep.subr.bf16.mxu0 0
  %959 = vmatpush1.bf16.msra.mxu0 %v936
  %960 = vmatprep.subr.bf16.mxu0 0
  %961 = vmatpush2.bf16.msra.mxu0 0
  %962 = vmatprep.subr.bf16.mxu0 0
  %963 = vmatpush2.bf16.msra.mxu0 0
  %964 = vmatprep.subr.bf16.mxu0 0
  %965 = vmatpush2.bf16.msra.mxu0 0
  %966 = vmatprep.subr.bf16.mxu0 0
  %967 = vmatpush2.bf16.msra.mxu0 0
  %968 = vmatprep.subr.bf16.mxu0 0
  %969 = vmatpush2.bf16.msra.mxu0 0
  %970 = vmatprep.subr.bf16.mxu0 0
  %971 = vmatpush2.bf16.msra.mxu0 0
  %972 = vmatprep.subr.bf16.mxu0 0
  %973 = vmatpush2.bf16.msra.mxu0 0
  %974 = vmatprep.subr.bf16.mxu0 0
  %975 = vmatpush2.bf16.msra.mxu0 0
  %976 = vmatprep.mubr.bf16.mxu0 0
  %977 = vmatmul.mubr.bf16.gmra.mxu0 %v859
  %v978 = vpop.f32.mrf.mxu0
  %v979 = vadd.f32 0.0, %v978
  %v980 = vpop.f32.mrf.mxu0
  %v981 = vpop.f32.mrf.mxu0
  %v982 = vadd.f32 0.0, %v981
  %v983 = vpop.f32.mrf.mxu0
  %984 = vdwg.mxu0
  %v985 = vrot.slane %v896, 7
  %v986 = vrot.slane %v899, 7
  %v987 = vsel %vm593, %v985, %v986
  %v988 = vsel %vm593, %v986, %v985
  %v989 = vsel %vm598, %v988, 0.0
  %v990 = vsel %vm599, %v987, 0.0
  %v999 = vunpack.c.l.b16 %v903
  %v1000 = vunpack.c.l.b16 %v904
  %v1001 = vunpack.c.l.b16 %v905
  %v1002 = vunpack.c.l.b16 %v906
  %v1003 = vunpack.c.l.b16 %v907
  %v1004 = vunpack.c.l.b16 %v908
  %v1005 = vunpack.c.l.b16 %v909
  %v1006 = vunpack.c.l.b16 %v910
  %v1007 = vpack.c.b16 %v1000, %v999
  %v1008 = vpack.c.b16 %v1002, %v1001
  %v1009 = vpack.c.b16 %v1004, %v1003
  %v1010 = vpack.c.b16 %v1006, %v1005
  %1015 = vmatprep.subr.bf16.mxu0 0
  %1016 = vmatpush1.bf16.msra.mxu0 0
  %1017 = vmatprep.subr.bf16.mxu0 0
  %1018 = vmatpush1.bf16.msra.mxu0 0
  %1019 = vmatprep.subr.bf16.mxu0 0
  %1020 = vmatpush1.bf16.msra.mxu0 0
  %1021 = vmatprep.subr.bf16.mxu0 0
  %1022 = vmatpush1.bf16.msra.mxu0 0
  %1023 = vmatprep.subr.bf16.mxu0 0
  %1024 = vmatpush1.bf16.msra.mxu0 %v1010
  %1025 = vmatprep.subr.bf16.mxu0 0
  %1026 = vmatpush1.bf16.msra.mxu0 %v1009
  %1027 = vmatprep.subr.bf16.mxu0 0
  %1028 = vmatpush1.bf16.msra.mxu0 %v1008
  %1029 = vmatprep.subr.bf16.mxu0 0
  %1030 = vmatpush1.bf16.msra.mxu0 %v1007
  %1031 = vmatprep.subr.bf16.mxu0 0
  %1032 = vmatpush2.bf16.msra.mxu0 0
  %1033 = vmatprep.subr.bf16.mxu0 0
  %1034 = vmatpush2.bf16.msra.mxu0 0
  %1035 = vmatprep.subr.bf16.mxu0 0
  %1036 = vmatpush2.bf16.msra.mxu0 0
  %1037 = vmatprep.subr.bf16.mxu0 0
  %1038 = vmatpush2.bf16.msra.mxu0 0
  %1039 = vmatprep.subr.bf16.mxu0 0
  %1040 = vmatpush2.bf16.msra.mxu0 0
  %1041 = vmatprep.subr.bf16.mxu0 0
  %1042 = vmatpush2.bf16.msra.mxu0 0
  %1043 = vmatprep.subr.bf16.mxu0 0
  %1044 = vmatpush2.bf16.msra.mxu0 0
  %1045 = vmatprep.subr.bf16.mxu0 0
  %1046 = vmatpush2.bf16.msra.mxu0 0
  %1047 = vmatprep.mubr.bf16.mxu0 0
  %1048 = vmatmul.mubr.bf16.gmra.mxu0 %v859
  %v1049 = vpop.f32.mrf.mxu0
  %v1050 = vadd.f32 %v989, %v1049
  %v1051 = vpop.f32.mrf.mxu0
  %v1052 = vpop.f32.mrf.mxu0
  %v1053 = vadd.f32 %v990, %v1052
  %v1054 = vpop.f32.mrf.mxu0
  %1055 = vdwg.mxu0
  %v1056 = vrot.slane %v979, 1
  %v1057 = vrot.slane %v982, 1
  %v1058 = vsel %vm802, %v1056, %v1057
  %v1059 = vsel %vm802, %v1057, %v1056
  %v1060 = vsel %vm807, %v1058, 0.0
  %v1061 = vsel %vm808, %v1059, 0.0
  %v1062 = vadd.f32 %v1050, %v1060
  %v1063 = vadd.f32 %v1053, %v1061
  %v1064 = vld [vmem:[%s4] sm:$0x1]
  %v1066 = vlaneseq
  %v1067 = vshrl.u32 %v1066, 7
  %v1068 = vsub.s32 0, %v1067
  %v1069 = vrot.slane %v1064, %v1068
  %v1071 = vadd.f32 %v1062, %v1069
  %v1072 = vadd.f32 %v1063, %v1069
  %v1073 = vmax.f32 %v1071, 0.0
  %v1074 = vmax.f32 %v1072, 0.0
  %v1075 = vld [vmem:[%s5] sm:$0xff]
  %v1076 = vld [vmem:[%s5 + $0x8] sm:$0xff]
  %v1077 = vmul.f32 %v1073, %v1075
  %v1078 = vmul.f32 %v1074, %v1076
  %vm1079 = vcmask 261120
  %v1080 = vsel %vm1079, %v1077, 0.0
  %1081 = vadd.xlane.f32.xlu0 %v1080
  %v1082 = vpop.xlane.xlu0 %1081
  %v1083 = vsel %vm1079, %v1078, 0.0
  %1084 = vadd.xlane.f32.xlu0 %v1083
  %v1085 = vpop.xlane.xlu0 %1084
  %vm1086 = vcmask 7168
  %1087 = vst.msk [vmem:[%s6] sm:$0xff] %vm1086, %v1082
  %1088 = vst.msk [vmem:[%s6 + $0x8] sm:$0xff] %vm1086, %v1085
  // Predicated region
  $region26: #{cnn_forward.4} parent=0 // pred_check
    _
  $region27: #{cnn_forward.4} parent=0 // pred_check_branch
    %1090 = sbr.rel (0) target = $region29
  $region28: #{cnn_forward.4} parent=0 // pred_region
    _
  $region29: #{cnn_forward.4} parent=0 // pred_fallthru
    _
  // Predicated region
  $region30: #{cnn_forward.4} parent=0 // pred_check
    _
  $region31: #{cnn_forward.4} parent=0 // pred_check_branch
    %1092 = sbr.rel (0) target = $region33
  $region32: #{cnn_forward.4} parent=0 // pred_region
    _
  $region33: #{cnn_forward.4} parent=0 // pred_fallthru
    _

</llo_original>
